<compile_context>
chip_gen: v7x
topology: tpu7x:2x2x1
jax: 0.10.0
libtpu: 0.0.40
codegen_flags: <defaults>
</compile_context>

<pallas_src>
import functools

import jax
import jax.numpy as jnp
from jax.experimental import pallas as pl
from jax.experimental.pallas import tpu as pltpu


def _residual_block_kernel(xp_ref, mask_ref, w1_ref, g1_ref, be1_ref,
                           w2_ref, g2_ref, be2_ref, o_ref, *, N, H, W):
    """Fused: relu(bn2(conv2(relu(bn1(conv1(x))))) + x), training-mode BN.

    xp_ref  : (C, L)    zero-padded input; (n, h+halo, w+halo) flattened onto
                        the lane axis, tail-padded to a multiple of 128
    mask_ref: (1, L)    1.0 at real (interior) pixels, 0.0 at halo/tail pads
    w*_ref  : (9, C, C) conv taps, index [kh*3+kw, c_out, c_in]
    g*_ref  : (C, 1)    BN gamma
    be*_ref : (C, 1)    BN beta
    o_ref   : (C, L)    output (only interior lanes are meaningful)
    """
    C, L = xp_ref.shape
    Wp = W + 2
    inv_m = 1.0 / (N * H * W)            # number of real pixels per channel
    # Flattened offset of each 3x3 tap relative to an interior position.
    offsets = [(kh - 1) * Wp + (kw - 1) for kh in range(3) for kw in range(3)]

    x = xp_ref[...]                       # (C, L)
    mask = mask_ref[...]                  # (1, L)

    def conv3x3(h, w_ref):
        # `h` must be zero at halo/tail positions (true for x and for h1).
        # Each tap is a static lane shift (XLU roll) of the whole slab; the
        # wrapped-around lanes only ever land on halo/tail positions, which
        # are masked out downstream, so no boundary fixup is needed.
        # Conv bias is intentionally omitted: training-mode BN subtracts the
        # per-channel mean right after, which cancels it exactly.
        acc = jnp.zeros((C, L), jnp.float32)
        for t, off in enumerate(offsets):
            s = (-off) % L
            ht = h if s == 0 else pltpu.roll(h, shift=s, axis=1)
            acc = acc + jnp.dot(w_ref[t], ht,
                                preferred_element_type=jnp.float32)
        return acc

    def batchnorm(a, g_ref, be_ref):
        # Batch statistics over the N*H*W interior positions only.
        mean = jnp.sum(a * mask, axis=1, keepdims=True) * inv_m       # (C, 1)
        d = a - mean
        var = jnp.sum(d * d * mask, axis=1, keepdims=True) * inv_m    # biased
        return d * jax.lax.rsqrt(var + 1e-5) * g_ref[...] + be_ref[...]

    # Stage 1: relu(bn1(conv1(x))); re-mask so stage 2 sees proper zero halos.
    h1 = jnp.maximum(batchnorm(conv3x3(x, w1_ref), g1_ref, be1_ref), 0.0) * mask
    # Stage 2: bn2(conv2(h1)) + residual, final relu.
    y2 = batchnorm(conv3x3(h1, w2_ref), g2_ref, be2_ref)
    o_ref[...] = jnp.maximum(y2 + x, 0.0)


def _round_up(n, m):
    return -(-n // m) * m


@jax.jit
def residual_block(x_nchw, params):
    N, C, H, W = x_nchw.shape
    Hp, Wp = H + 2, W + 2
    P = N * Hp * Wp                       # padded pixel count
    L = _round_up(P, 128)                 # lane-dense length (multiple of 128)

    # NCHW -> (C, N, H, W) -> zero halo pad -> flatten spatial onto lanes
    # -> zero tail pad up to L.  Pure XLA layout glue; all math is in-kernel.
    xc = jnp.transpose(x_nchw.astype(jnp.float32), (1, 0, 2, 3))
    xp = jnp.pad(xc, ((0, 0), (0, 0), (1, 1), (1, 1))).reshape(C, P)
    xp = jnp.pad(xp, ((0, 0), (0, L - P)))

    # Interior mask: 1.0 at real pixels, 0.0 at halo rows/cols and lane tail.
    rr = (jnp.arange(Hp) >= 1) & (jnp.arange(Hp) <= H)
    cc = (jnp.arange(Wp) >= 1) & (jnp.arange(Wp) <= W)
    m = jnp.broadcast_to((rr[:, None] & cc[None, :])[None], (N, Hp, Wp))
    mask = jnp.pad(m.reshape(1, P).astype(jnp.float32), ((0, 0), (0, L - P)))

    def pack_w(w):  # torch (Cout, Cin, kh, kw) -> (9, Cout, Cin)
        return jnp.transpose(w, (2, 3, 0, 1)).reshape(9, C, C).astype(jnp.float32)

    def col(v):     # (C,) -> (C, 1): broadcasts along the lane axis in-kernel
        return v.reshape(C, 1).astype(jnp.float32)

    vmem = pl.BlockSpec(memory_space=pltpu.MemorySpace.VMEM)
    kernel = functools.partial(_residual_block_kernel, N=N, H=H, W=W)
    out = pl.pallas_call(
        kernel,
        out_shape=jax.ShapeDtypeStruct((C, L), jnp.float32),
        in_specs=[vmem] * 8,
        out_specs=vmem,
    )(xp, mask,
      pack_w(params["w1"]), col(params["g1"]), col(params["be1"]),
      pack_w(params["w2"]), col(params["g2"]), col(params["be2"]))

    out = out[:, :P].reshape(C, N, Hp, Wp)[:, :, 1:H + 1, 1:W + 1]
    return jnp.transpose(out, (1, 0, 2, 3))   # back to NCHW


def _reference_forward(x, p):
    """Plain-JAX reference matching the PyTorch module (training-mode BN)."""
    def conv(x, w, b):
        y = jax.lax.conv_general_dilated(
            x, w, window_strides=(1, 1), padding=((1, 1), (1, 1)),
            dimension_numbers=("NCHW", "OIHW", "NCHW"))
        return y + b[None, :, None, None]

    def bn(x, g, be):
        mean = jnp.mean(x, axis=(0, 2, 3), keepdims=True)
        var = jnp.mean((x - mean) ** 2, axis=(0, 2, 3), keepdims=True)
        return ((x - mean) * jax.lax.rsqrt(var + 1e-5)
                * g[None, :, None, None] + be[None, :, None, None])

    out = jax.nn.relu(bn(conv(x, p["w1"], p["b1"]), p["g1"], p["be1"]))
    out = bn(conv(out, p["w2"], p["b2"]), p["g2"], p["be2"])
    return jax.nn.relu(out + x)


if __name__ == "__main__":
    # Small shapes consistent with ResidualBlock(channels=4): x is NCHW.
    N, C, H, W = 2, 4, 16, 16
    key = jax.random.PRNGKey(0)
    ks = jax.random.split(key, 9)

    x = jax.random.normal(ks[0], (N, C, H, W), jnp.float32)
    params = {
        "w1": 0.2 * jax.random.normal(ks[1], (C, C, 3, 3), jnp.float32),
        "b1": 0.1 * jax.random.normal(ks[2], (C,), jnp.float32),
        "g1": 1.0 + 0.1 * jax.random.normal(ks[3], (C,), jnp.float32),
        "be1": 0.1 * jax.random.normal(ks[4], (C,), jnp.float32),
        "w2": 0.2 * jax.random.normal(ks[5], (C, C, 3, 3), jnp.float32),
        "b2": 0.1 * jax.random.normal(ks[6], (C,), jnp.float32),
        "g2": 1.0 + 0.1 * jax.random.normal(ks[7], (C,), jnp.float32),
        "be2": 0.1 * jax.random.normal(ks[8], (C,), jnp.float32),
    }
    # TODO(synk): BatchNorm running-stat updates are training-side state
    # mutation, not part of the functional forward output; not reproduced.
    # (The conv biases b1/b2 are consumed only by the reference: inside the
    # kernel they are provably cancelled by the BN mean subtraction.)

    out = jax.block_until_ready(residual_block(x, params))
    ref = _reference_forward(x, params)
    assert out.shape == ref.shape and out.dtype == ref.dtype
    assert float(jnp.max(jnp.abs(out - ref))) < 1e-4

    print("KERNEL_OK")
</pallas_src>

<mosaic_0001>
module attributes {stable_mosaic.version = 11 : i64} {
  func.func @_residual_block_kernel(%arg0: memref<4x768xf32, #tpu.memory_space<vmem>>, %arg1: memref<1x768xf32, #tpu.memory_space<vmem>>, %arg2: memref<9x4x4xf32, #tpu.memory_space<vmem>>, %arg3: memref<4x1xf32, #tpu.memory_space<vmem>>, %arg4: memref<4x1xf32, #tpu.memory_space<vmem>>, %arg5: memref<9x4x4xf32, #tpu.memory_space<vmem>>, %arg6: memref<4x1xf32, #tpu.memory_space<vmem>>, %arg7: memref<4x1xf32, #tpu.memory_space<vmem>>, %arg8: memref<4x768xf32, #tpu.memory_space<vmem>>) attributes {dimension_semantics = [], scalar_prefetch = 0 : i64, scratch_operands = 0 : i64, tpu.core_type = #tpu.core_type<tc>} {
    %c0 = arith.constant 0 : index
    %c0_0 = arith.constant 0 : index
    %0 = vector.load %arg0[%c0, %c0_0] : memref<4x768xf32, #tpu.memory_space<vmem>>, vector<4x768xf32>
    %c0_1 = arith.constant 0 : index
    %c0_2 = arith.constant 0 : index
    %1 = vector.load %arg1[%c0_1, %c0_2] : memref<1x768xf32, #tpu.memory_space<vmem>>, vector<1x768xf32>
    %cst = arith.constant 0.000000e+00 : f32
    %2 = vector.broadcast %cst : f32 to vector<4x768xf32>
    %c19_i32 = arith.constant 19 : i32
    %3 = tpu.dynamic_rotate %0 by %c19_i32 dim 1 : vector<4x768xf32>, i32 -> vector<4x768xf32>
    %c0_3 = arith.constant 0 : index
    %c0_4 = arith.constant 0 : index
    %c0_5 = arith.constant 0 : index
    %4 = vector.load %arg2[%c0_3, %c0_4, %c0_5] : memref<9x4x4xf32, #tpu.memory_space<vmem>>, vector<1x4x4xf32>
    %5 = vector.shape_cast %4 : vector<1x4x4xf32> to vector<4x4xf32>
    %cst_6 = arith.constant dense<0.000000e+00> : vector<4x768xf32>
    %6 = tpu.matmul %5, %3, %cst_6 {dimension_numbers = #tpu.dot_dimension_numbers<[1], [0], [0], [1], [0, 0, 1, 1], [], []>} : vector<4x4xf32>, vector<4x768xf32>, vector<4x768xf32> -> vector<4x768xf32>
    %7 = arith.addf %2, %6 : vector<4x768xf32>
    %c18_i32 = arith.constant 18 : i32
    %8 = tpu.dynamic_rotate %0 by %c18_i32 dim 1 : vector<4x768xf32>, i32 -> vector<4x768xf32>
    %c1 = arith.constant 1 : index
    %c0_7 = arith.constant 0 : index
    %c0_8 = arith.constant 0 : index
    %9 = vector.load %arg2[%c1, %c0_7, %c0_8] : memref<9x4x4xf32, #tpu.memory_space<vmem>>, vector<1x4x4xf32>
    %10 = vector.shape_cast %9 : vector<1x4x4xf32> to vector<4x4xf32>
    %cst_9 = arith.constant dense<0.000000e+00> : vector<4x768xf32>
    %11 = tpu.matmul %10, %8, %cst_9 {dimension_numbers = #tpu.dot_dimension_numbers<[1], [0], [0], [1], [0, 0, 1, 1], [], []>} : vector<4x4xf32>, vector<4x768xf32>, vector<4x768xf32> -> vector<4x768xf32>
    %12 = arith.addf %7, %11 : vector<4x768xf32>
    %c17_i32 = arith.constant 17 : i32
    %13 = tpu.dynamic_rotate %0 by %c17_i32 dim 1 : vector<4x768xf32>, i32 -> vector<4x768xf32>
    %c2 = arith.constant 2 : index
    %c0_10 = arith.constant 0 : index
    %c0_11 = arith.constant 0 : index
    %14 = vector.load %arg2[%c2, %c0_10, %c0_11] : memref<9x4x4xf32, #tpu.memory_space<vmem>>, vector<1x4x4xf32>
    %15 = vector.shape_cast %14 : vector<1x4x4xf32> to vector<4x4xf32>
    %cst_12 = arith.constant dense<0.000000e+00> : vector<4x768xf32>
    %16 = tpu.matmul %15, %13, %cst_12 {dimension_numbers = #tpu.dot_dimension_numbers<[1], [0], [0], [1], [0, 0, 1, 1], [], []>} : vector<4x4xf32>, vector<4x768xf32>, vector<4x768xf32> -> vector<4x768xf32>
    %17 = arith.addf %12, %16 : vector<4x768xf32>
    %c1_i32 = arith.constant 1 : i32
    %18 = tpu.dynamic_rotate %0 by %c1_i32 dim 1 : vector<4x768xf32>, i32 -> vector<4x768xf32>
    %c3 = arith.constant 3 : index
    %c0_13 = arith.constant 0 : index
    %c0_14 = arith.constant 0 : index
    %19 = vector.load %arg2[%c3, %c0_13, %c0_14] : memref<9x4x4xf32, #tpu.memory_space<vmem>>, vector<1x4x4xf32>
    %20 = vector.shape_cast %19 : vector<1x4x4xf32> to vector<4x4xf32>
    %cst_15 = arith.constant dense<0.000000e+00> : vector<4x768xf32>
    %21 = tpu.matmul %20, %18, %cst_15 {dimension_numbers = #tpu.dot_dimension_numbers<[1], [0], [0], [1], [0, 0, 1, 1], [], []>} : vector<4x4xf32>, vector<4x768xf32>, vector<4x768xf32> -> vector<4x768xf32>
    %22 = arith.addf %17, %21 : vector<4x768xf32>
    %c4 = arith.constant 4 : index
    %c0_16 = arith.constant 0 : index
    %c0_17 = arith.constant 0 : index
    %23 = vector.load %arg2[%c4, %c0_16, %c0_17] : memref<9x4x4xf32, #tpu.memory_space<vmem>>, vector<1x4x4xf32>
    %24 = vector.shape_cast %23 : vector<1x4x4xf32> to vector<4x4xf32>
    %cst_18 = arith.constant dense<0.000000e+00> : vector<4x768xf32>
    %25 = tpu.matmul %24, %0, %cst_18 {dimension_numbers = #tpu.dot_dimension_numbers<[1], [0], [0], [1], [0, 0, 1, 1], [], []>} : vector<4x4xf32>, vector<4x768xf32>, vector<4x768xf32> -> vector<4x768xf32>
    %26 = arith.addf %22, %25 : vector<4x768xf32>
    %c767_i32 = arith.constant 767 : i32
    %27 = tpu.dynamic_rotate %0 by %c767_i32 dim 1 : vector<4x768xf32>, i32 -> vector<4x768xf32>
    %c5 = arith.constant 5 : index
    %c0_19 = arith.constant 0 : index
    %c0_20 = arith.constant 0 : index
    %28 = vector.load %arg2[%c5, %c0_19, %c0_20] : memref<9x4x4xf32, #tpu.memory_space<vmem>>, vector<1x4x4xf32>
    %29 = vector.shape_cast %28 : vector<1x4x4xf32> to vector<4x4xf32>
    %cst_21 = arith.constant dense<0.000000e+00> : vector<4x768xf32>
    %30 = tpu.matmul %29, %27, %cst_21 {dimension_numbers = #tpu.dot_dimension_numbers<[1], [0], [0], [1], [0, 0, 1, 1], [], []>} : vector<4x4xf32>, vector<4x768xf32>, vector<4x768xf32> -> vector<4x768xf32>
    %31 = arith.addf %26, %30 : vector<4x768xf32>
    %c751_i32 = arith.constant 751 : i32
    %32 = tpu.dynamic_rotate %0 by %c751_i32 dim 1 : vector<4x768xf32>, i32 -> vector<4x768xf32>
    %c6 = arith.constant 6 : index
    %c0_22 = arith.constant 0 : index
    %c0_23 = arith.constant 0 : index
    %33 = vector.load %arg2[%c6, %c0_22, %c0_23] : memref<9x4x4xf32, #tpu.memory_space<vmem>>, vector<1x4x4xf32>
    %34 = vector.shape_cast %33 : vector<1x4x4xf32> to vector<4x4xf32>
    %cst_24 = arith.constant dense<0.000000e+00> : vector<4x768xf32>
    %35 = tpu.matmul %34, %32, %cst_24 {dimension_numbers = #tpu.dot_dimension_numbers<[1], [0], [0], [1], [0, 0, 1, 1], [], []>} : vector<4x4xf32>, vector<4x768xf32>, vector<4x768xf32> -> vector<4x768xf32>
    %36 = arith.addf %31, %35 : vector<4x768xf32>
    %c750_i32 = arith.constant 750 : i32
    %37 = tpu.dynamic_rotate %0 by %c750_i32 dim 1 : vector<4x768xf32>, i32 -> vector<4x768xf32>
    %c7 = arith.constant 7 : index
    %c0_25 = arith.constant 0 : index
    %c0_26 = arith.constant 0 : index
    %38 = vector.load %arg2[%c7, %c0_25, %c0_26] : memref<9x4x4xf32, #tpu.memory_space<vmem>>, vector<1x4x4xf32>
    %39 = vector.shape_cast %38 : vector<1x4x4xf32> to vector<4x4xf32>
    %cst_27 = arith.constant dense<0.000000e+00> : vector<4x768xf32>
    %40 = tpu.matmul %39, %37, %cst_27 {dimension_numbers = #tpu.dot_dimension_numbers<[1], [0], [0], [1], [0, 0, 1, 1], [], []>} : vector<4x4xf32>, vector<4x768xf32>, vector<4x768xf32> -> vector<4x768xf32>
    %41 = arith.addf %36, %40 : vector<4x768xf32>
    %c749_i32 = arith.constant 749 : i32
    %42 = tpu.dynamic_rotate %0 by %c749_i32 dim 1 : vector<4x768xf32>, i32 -> vector<4x768xf32>
    %c8 = arith.constant 8 : index
    %c0_28 = arith.constant 0 : index
    %c0_29 = arith.constant 0 : index
    %43 = vector.load %arg2[%c8, %c0_28, %c0_29] : memref<9x4x4xf32, #tpu.memory_space<vmem>>, vector<1x4x4xf32>
    %44 = vector.shape_cast %43 : vector<1x4x4xf32> to vector<4x4xf32>
    %cst_30 = arith.constant dense<0.000000e+00> : vector<4x768xf32>
    %45 = tpu.matmul %44, %42, %cst_30 {dimension_numbers = #tpu.dot_dimension_numbers<[1], [0], [0], [1], [0, 0, 1, 1], [], []>} : vector<4x4xf32>, vector<4x768xf32>, vector<4x768xf32> -> vector<4x768xf32>
    %46 = arith.addf %41, %45 : vector<4x768xf32>
    %47 = vector.broadcast %1 : vector<1x768xf32> to vector<4x768xf32>
    %48 = arith.mulf %46, %47 : vector<4x768xf32>
    %cst_31 = arith.constant dense<0.000000e+00> : vector<4xf32>
    %49 = vector.multi_reduction <add>, %48, %cst_31 [1] : vector<4x768xf32> to vector<4xf32>
    %50 = vector.shape_cast %49 : vector<4xf32> to vector<4x1xf32>
    %cst_32 = arith.constant 0.001953125 : f32
    %51 = vector.broadcast %cst_32 : f32 to vector<4x1xf32>
    %52 = arith.mulf %50, %51 : vector<4x1xf32>
    %53 = vector.broadcast %52 : vector<4x1xf32> to vector<4x768xf32>
    %54 = arith.subf %46, %53 : vector<4x768xf32>
    %55 = arith.mulf %54, %54 : vector<4x768xf32>
    %56 = vector.broadcast %1 : vector<1x768xf32> to vector<4x768xf32>
    %57 = arith.mulf %55, %56 : vector<4x768xf32>
    %cst_33 = arith.constant dense<0.000000e+00> : vector<4xf32>
    %58 = vector.multi_reduction <add>, %57, %cst_33 [1] : vector<4x768xf32> to vector<4xf32>
    %59 = vector.shape_cast %58 : vector<4xf32> to vector<4x1xf32>
    %cst_34 = arith.constant 0.001953125 : f32
    %60 = vector.broadcast %cst_34 : f32 to vector<4x1xf32>
    %61 = arith.mulf %59, %60 : vector<4x1xf32>
    %cst_35 = arith.constant 9.99999974E-6 : f32
    %62 = vector.broadcast %cst_35 : f32 to vector<4x1xf32>
    %63 = arith.addf %61, %62 : vector<4x1xf32>
    %64 = math.rsqrt %63 : vector<4x1xf32>
    %65 = vector.broadcast %64 : vector<4x1xf32> to vector<4x768xf32>
    %66 = arith.mulf %54, %65 : vector<4x768xf32>
    %c0_36 = arith.constant 0 : index
    %c0_37 = arith.constant 0 : index
    %67 = vector.load %arg3[%c0_36, %c0_37] : memref<4x1xf32, #tpu.memory_space<vmem>>, vector<4x1xf32>
    %68 = vector.broadcast %67 : vector<4x1xf32> to vector<4x768xf32>
    %69 = arith.mulf %66, %68 : vector<4x768xf32>
    %c0_38 = arith.constant 0 : index
    %c0_39 = arith.constant 0 : index
    %70 = vector.load %arg4[%c0_38, %c0_39] : memref<4x1xf32, #tpu.memory_space<vmem>>, vector<4x1xf32>
    %71 = vector.broadcast %70 : vector<4x1xf32> to vector<4x768xf32>
    %72 = arith.addf %69, %71 : vector<4x768xf32>
    %cst_40 = arith.constant 0.000000e+00 : f32
    %73 = vector.broadcast %cst_40 : f32 to vector<4x768xf32>
    %74 = arith.maximumf %72, %73 : vector<4x768xf32>
    %75 = vector.broadcast %1 : vector<1x768xf32> to vector<4x768xf32>
    %76 = arith.mulf %74, %75 : vector<4x768xf32>
    %cst_41 = arith.constant 0.000000e+00 : f32
    %77 = vector.broadcast %cst_41 : f32 to vector<4x768xf32>
    %c19_i32_42 = arith.constant 19 : i32
    %78 = tpu.dynamic_rotate %76 by %c19_i32_42 dim 1 : vector<4x768xf32>, i32 -> vector<4x768xf32>
    %c0_43 = arith.constant 0 : index
    %c0_44 = arith.constant 0 : index
    %c0_45 = arith.constant 0 : index
    %79 = vector.load %arg5[%c0_43, %c0_44, %c0_45] : memref<9x4x4xf32, #tpu.memory_space<vmem>>, vector<1x4x4xf32>
    %80 = vector.shape_cast %79 : vector<1x4x4xf32> to vector<4x4xf32>
    %cst_46 = arith.constant dense<0.000000e+00> : vector<4x768xf32>
    %81 = tpu.matmul %80, %78, %cst_46 {dimension_numbers = #tpu.dot_dimension_numbers<[1], [0], [0], [1], [0, 0, 1, 1], [], []>} : vector<4x4xf32>, vector<4x768xf32>, vector<4x768xf32> -> vector<4x768xf32>
    %82 = arith.addf %77, %81 : vector<4x768xf32>
    %c18_i32_47 = arith.constant 18 : i32
    %83 = tpu.dynamic_rotate %76 by %c18_i32_47 dim 1 : vector<4x768xf32>, i32 -> vector<4x768xf32>
    %c1_48 = arith.constant 1 : index
    %c0_49 = arith.constant 0 : index
    %c0_50 = arith.constant 0 : index
    %84 = vector.load %arg5[%c1_48, %c0_49, %c0_50] : memref<9x4x4xf32, #tpu.memory_space<vmem>>, vector<1x4x4xf32>
    %85 = vector.shape_cast %84 : vector<1x4x4xf32> to vector<4x4xf32>
    %cst_51 = arith.constant dense<0.000000e+00> : vector<4x768xf32>
    %86 = tpu.matmul %85, %83, %cst_51 {dimension_numbers = #tpu.dot_dimension_numbers<[1], [0], [0], [1], [0, 0, 1, 1], [], []>} : vector<4x4xf32>, vector<4x768xf32>, vector<4x768xf32> -> vector<4x768xf32>
    %87 = arith.addf %82, %86 : vector<4x768xf32>
    %c17_i32_52 = arith.constant 17 : i32
    %88 = tpu.dynamic_rotate %76 by %c17_i32_52 dim 1 : vector<4x768xf32>, i32 -> vector<4x768xf32>
    %c2_53 = arith.constant 2 : index
    %c0_54 = arith.constant 0 : index
    %c0_55 = arith.constant 0 : index
    %89 = vector.load %arg5[%c2_53, %c0_54, %c0_55] : memref<9x4x4xf32, #tpu.memory_space<vmem>>, vector<1x4x4xf32>
    %90 = vector.shape_cast %89 : vector<1x4x4xf32> to vector<4x4xf32>
    %cst_56 = arith.constant dense<0.000000e+00> : vector<4x768xf32>
    %91 = tpu.matmul %90, %88, %cst_56 {dimension_numbers = #tpu.dot_dimension_numbers<[1], [0], [0], [1], [0, 0, 1, 1], [], []>} : vector<4x4xf32>, vector<4x768xf32>, vector<4x768xf32> -> vector<4x768xf32>
    %92 = arith.addf %87, %91 : vector<4x768xf32>
    %c1_i32_57 = arith.constant 1 : i32
    %93 = tpu.dynamic_rotate %76 by %c1_i32_57 dim 1 : vector<4x768xf32>, i32 -> vector<4x768xf32>
    %c3_58 = arith.constant 3 : index
    %c0_59 = arith.constant 0 : index
    %c0_60 = arith.constant 0 : index
    %94 = vector.load %arg5[%c3_58, %c0_59, %c0_60] : memref<9x4x4xf32, #tpu.memory_space<vmem>>, vector<1x4x4xf32>
    %95 = vector.shape_cast %94 : vector<1x4x4xf32> to vector<4x4xf32>
    %cst_61 = arith.constant dense<0.000000e+00> : vector<4x768xf32>
    %96 = tpu.matmul %95, %93, %cst_61 {dimension_numbers = #tpu.dot_dimension_numbers<[1], [0], [0], [1], [0, 0, 1, 1], [], []>} : vector<4x4xf32>, vector<4x768xf32>, vector<4x768xf32> -> vector<4x768xf32>
    %97 = arith.addf %92, %96 : vector<4x768xf32>
    %c4_62 = arith.constant 4 : index
    %c0_63 = arith.constant 0 : index
    %c0_64 = arith.constant 0 : index
    %98 = vector.load %arg5[%c4_62, %c0_63, %c0_64] : memref<9x4x4xf32, #tpu.memory_space<vmem>>, vector<1x4x4xf32>
    %99 = vector.shape_cast %98 : vector<1x4x4xf32> to vector<4x4xf32>
    %cst_65 = arith.constant dense<0.000000e+00> : vector<4x768xf32>
    %100 = tpu.matmul %99, %76, %cst_65 {dimension_numbers = #tpu.dot_dimension_numbers<[1], [0], [0], [1], [0, 0, 1, 1], [], []>} : vector<4x4xf32>, vector<4x768xf32>, vector<4x768xf32> -> vector<4x768xf32>
    %101 = arith.addf %97, %100 : vector<4x768xf32>
    %c767_i32_66 = arith.constant 767 : i32
    %102 = tpu.dynamic_rotate %76 by %c767_i32_66 dim 1 : vector<4x768xf32>, i32 -> vector<4x768xf32>
    %c5_67 = arith.constant 5 : index
    %c0_68 = arith.constant 0 : index
    %c0_69 = arith.constant 0 : index
    %103 = vector.load %arg5[%c5_67, %c0_68, %c0_69] : memref<9x4x4xf32, #tpu.memory_space<vmem>>, vector<1x4x4xf32>
    %104 = vector.shape_cast %103 : vector<1x4x4xf32> to vector<4x4xf32>
    %cst_70 = arith.constant dense<0.000000e+00> : vector<4x768xf32>
    %105 = tpu.matmul %104, %102, %cst_70 {dimension_numbers = #tpu.dot_dimension_numbers<[1], [0], [0], [1], [0, 0, 1, 1], [], []>} : vector<4x4xf32>, vector<4x768xf32>, vector<4x768xf32> -> vector<4x768xf32>
    %106 = arith.addf %101, %105 : vector<4x768xf32>
    %c751_i32_71 = arith.constant 751 : i32
    %107 = tpu.dynamic_rotate %76 by %c751_i32_71 dim 1 : vector<4x768xf32>, i32 -> vector<4x768xf32>
    %c6_72 = arith.constant 6 : index
    %c0_73 = arith.constant 0 : index
    %c0_74 = arith.constant 0 : index
    %108 = vector.load %arg5[%c6_72, %c0_73, %c0_74] : memref<9x4x4xf32, #tpu.memory_space<vmem>>, vector<1x4x4xf32>
    %109 = vector.shape_cast %108 : vector<1x4x4xf32> to vector<4x4xf32>
    %cst_75 = arith.constant dense<0.000000e+00> : vector<4x768xf32>
    %110 = tpu.matmul %109, %107, %cst_75 {dimension_numbers = #tpu.dot_dimension_numbers<[1], [0], [0], [1], [0, 0, 1, 1], [], []>} : vector<4x4xf32>, vector<4x768xf32>, vector<4x768xf32> -> vector<4x768xf32>
    %111 = arith.addf %106, %110 : vector<4x768xf32>
    %c750_i32_76 = arith.constant 750 : i32
    %112 = tpu.dynamic_rotate %76 by %c750_i32_76 dim 1 : vector<4x768xf32>, i32 -> vector<4x768xf32>
    %c7_77 = arith.constant 7 : index
    %c0_78 = arith.constant 0 : index
    %c0_79 = arith.constant 0 : index
    %113 = vector.load %arg5[%c7_77, %c0_78, %c0_79] : memref<9x4x4xf32, #tpu.memory_space<vmem>>, vector<1x4x4xf32>
    %114 = vector.shape_cast %113 : vector<1x4x4xf32> to vector<4x4xf32>
    %cst_80 = arith.constant dense<0.000000e+00> : vector<4x768xf32>
    %115 = tpu.matmul %114, %112, %cst_80 {dimension_numbers = #tpu.dot_dimension_numbers<[1], [0], [0], [1], [0, 0, 1, 1], [], []>} : vector<4x4xf32>, vector<4x768xf32>, vector<4x768xf32> -> vector<4x768xf32>
    %116 = arith.addf %111, %115 : vector<4x768xf32>
    %c749_i32_81 = arith.constant 749 : i32
    %117 = tpu.dynamic_rotate %76 by %c749_i32_81 dim 1 : vector<4x768xf32>, i32 -> vector<4x768xf32>
    %c8_82 = arith.constant 8 : index
    %c0_83 = arith.constant 0 : index
    %c0_84 = arith.constant 0 : index
    %118 = vector.load %arg5[%c8_82, %c0_83, %c0_84] : memref<9x4x4xf32, #tpu.memory_space<vmem>>, vector<1x4x4xf32>
    %119 = vector.shape_cast %118 : vector<1x4x4xf32> to vector<4x4xf32>
    %cst_85 = arith.constant dense<0.000000e+00> : vector<4x768xf32>
    %120 = tpu.matmul %119, %117, %cst_85 {dimension_numbers = #tpu.dot_dimension_numbers<[1], [0], [0], [1], [0, 0, 1, 1], [], []>} : vector<4x4xf32>, vector<4x768xf32>, vector<4x768xf32> -> vector<4x768xf32>
    %121 = arith.addf %116, %120 : vector<4x768xf32>
    %122 = vector.broadcast %1 : vector<1x768xf32> to vector<4x768xf32>
    %123 = arith.mulf %121, %122 : vector<4x768xf32>
    %cst_86 = arith.constant dense<0.000000e+00> : vector<4xf32>
    %124 = vector.multi_reduction <add>, %123, %cst_86 [1] : vector<4x768xf32> to vector<4xf32>
    %125 = vector.shape_cast %124 : vector<4xf32> to vector<4x1xf32>
    %cst_87 = arith.constant 0.001953125 : f32
    %126 = vector.broadcast %cst_87 : f32 to vector<4x1xf32>
    %127 = arith.mulf %125, %126 : vector<4x1xf32>
    %128 = vector.broadcast %127 : vector<4x1xf32> to vector<4x768xf32>
    %129 = arith.subf %121, %128 : vector<4x768xf32>
    %130 = arith.mulf %129, %129 : vector<4x768xf32>
    %131 = vector.broadcast %1 : vector<1x768xf32> to vector<4x768xf32>
    %132 = arith.mulf %130, %131 : vector<4x768xf32>
    %cst_88 = arith.constant dense<0.000000e+00> : vector<4xf32>
    %133 = vector.multi_reduction <add>, %132, %cst_88 [1] : vector<4x768xf32> to vector<4xf32>
    %134 = vector.shape_cast %133 : vector<4xf32> to vector<4x1xf32>
    %cst_89 = arith.constant 0.001953125 : f32
    %135 = vector.broadcast %cst_89 : f32 to vector<4x1xf32>
    %136 = arith.mulf %134, %135 : vector<4x1xf32>
    %cst_90 = arith.constant 9.99999974E-6 : f32
    %137 = vector.broadcast %cst_90 : f32 to vector<4x1xf32>
    %138 = arith.addf %136, %137 : vector<4x1xf32>
    %139 = math.rsqrt %138 : vector<4x1xf32>
    %140 = vector.broadcast %139 : vector<4x1xf32> to vector<4x768xf32>
    %141 = arith.mulf %129, %140 : vector<4x768xf32>
    %c0_91 = arith.constant 0 : index
    %c0_92 = arith.constant 0 : index
    %142 = vector.load %arg6[%c0_91, %c0_92] : memref<4x1xf32, #tpu.memory_space<vmem>>, vector<4x1xf32>
    %143 = vector.broadcast %142 : vector<4x1xf32> to vector<4x768xf32>
    %144 = arith.mulf %141, %143 : vector<4x768xf32>
    %c0_93 = arith.constant 0 : index
    %c0_94 = arith.constant 0 : index
    %145 = vector.load %arg7[%c0_93, %c0_94] : memref<4x1xf32, #tpu.memory_space<vmem>>, vector<4x1xf32>
    %146 = vector.broadcast %145 : vector<4x1xf32> to vector<4x768xf32>
    %147 = arith.addf %144, %146 : vector<4x768xf32>
    %148 = arith.addf %147, %0 : vector<4x768xf32>
    %cst_95 = arith.constant 0.000000e+00 : f32
    %149 = vector.broadcast %cst_95 : f32 to vector<4x768xf32>
    %150 = arith.maximumf %148, %149 : vector<4x768xf32>
    %c0_96 = arith.constant 0 : index
    %c0_97 = arith.constant 0 : index
    %151 = vector.load %arg8[%c0_96, %c0_97] : memref<4x768xf32, #tpu.memory_space<vmem>>, vector<4x768xf32>
    tpu.vector_store %arg8[%c0_96, %c0_97], %150 {strides = array<i32>} : memref<4x768xf32, #tpu.memory_space<vmem>>, vector<4x768xf32>,
    return
  }
}

</mosaic_0001>

<llo_original>
// kernel: residual_block.1
$region0: #{residual_block.1}
  #allocation0 [shape = 'u32[]', space=smem, size = 0x4, offset = 0x4, fixed_abs, tag = 'smem constant byte address 0x4 - core index']
  #allocation1 [shape = 'u32[144,128]{1,0:T(1,128)}', space=vmem, size = 0x12000, scoped, tag = 'internal scratch']
  %s0 = inlined_call_operand.vmem [shape: f32[4,768], index: 0, kind: input, shape index: {}]
  %s1 = inlined_call_operand.vmem [shape: f32[1,768], index: 1, kind: input, shape index: {}]
  %s2 = inlined_call_operand.vmem [shape: f32[9,4,4], index: 2, kind: input, shape index: {}]
  %s3 = inlined_call_operand.vmem [shape: f32[4,1], index: 3, kind: input, shape index: {}]
  %s4 = inlined_call_operand.vmem [shape: f32[4,1], index: 4, kind: input, shape index: {}]
  %s5 = inlined_call_operand.vmem [shape: f32[9,4,4], index: 5, kind: input, shape index: {}]
  %s6 = inlined_call_operand.vmem [shape: f32[4,1], index: 6, kind: input, shape index: {}]
  %s7 = inlined_call_operand.vmem [shape: f32[4,1], index: 7, kind: input, shape index: {}]
  %s8 = inlined_call_operand.vmem [shape: f32[4,768], index: 8, kind: output, shape index: {}]
  %s9 = sld [smem:[#allocation0]]
  $region42: #{residual_block.1} parent=0
    _
  %s11 = ssub.s32 1, %s9
  %s12 = scalar_select 0, %s11, %s9
  // Predicated region
  $region2: #{residual_block.1} parent=0 // pred_check
    _
  $region3: #{residual_block.1} parent=0 // pred_check_branch
    %14 = sbr.rel (0) target = $region5
  $region4: #{residual_block.1} parent=0 // pred_region
    _
  $region5: #{residual_block.1} parent=0 // pred_fallthru
    _
  // Predicated region
  $region6: #{residual_block.1} parent=0 // pred_check
    _
  $region7: #{residual_block.1} parent=0 // pred_check_branch
    %16 = sbr.rel (0) target = $region9
  $region8: #{residual_block.1} parent=0 // pred_region
    _
  $region9: #{residual_block.1} parent=0 // pred_fallthru
    _
  // Predicated region
  $region10: #{residual_block.1} parent=0 // pred_check
    _
  $region11: #{residual_block.1} parent=0 // pred_check_branch
    %18 = sbr.rel (0) target = $region13
  $region12: #{residual_block.1} parent=0 // pred_region
    _
  $region13: #{residual_block.1} parent=0 // pred_fallthru
    _
  // Predicated region
  $region14: #{residual_block.1} parent=0 // pred_check
    _
  $region15: #{residual_block.1} parent=0 // pred_check_branch
    %20 = sbr.rel (0) target = $region17
  $region16: #{residual_block.1} parent=0 // pred_region
    _
  $region17: #{residual_block.1} parent=0 // pred_fallthru
    _
  // Predicated region
  $region18: #{residual_block.1} parent=0 // pred_check
    _
  $region19: #{residual_block.1} parent=0 // pred_check_branch
    %22 = sbr.rel (0) target = $region21
  $region20: #{residual_block.1} parent=0 // pred_region
    _
  $region21: #{residual_block.1} parent=0 // pred_fallthru
    _
  // Predicated region
  $region22: #{residual_block.1} parent=0 // pred_check
    _
  $region23: #{residual_block.1} parent=0 // pred_check_branch
    %24 = sbr.rel (0) target = $region25
  $region24: #{residual_block.1} parent=0 // pred_region
    _
  $region25: #{residual_block.1} parent=0 // pred_fallthru
    _
  // Predicated region
  $region26: #{residual_block.1} parent=0 // pred_check
    _
  $region27: #{residual_block.1} parent=0 // pred_check_branch
    %26 = sbr.rel (0) target = $region29
  $region28: #{residual_block.1} parent=0 // pred_region
    _
  $region29: #{residual_block.1} parent=0 // pred_fallthru
    _
  // Predicated region
  $region30: #{residual_block.1} parent=0 // pred_check
    _
  $region31: #{residual_block.1} parent=0 // pred_check_branch
    %28 = sbr.rel (0) target = $region33
  $region32: #{residual_block.1} parent=0 // pred_region
    _
  $region33: #{residual_block.1} parent=0 // pred_fallthru
    _
  %v29 = vld [vmem:[%s0] sm:$0xff]
  %v30 = vld [vmem:[%s0 + $0x8] sm:$0xff]
  %v31 = vld [vmem:[%s0 + $0x10] sm:$0xff]
  %v32 = vld [vmem:[%s1] sm:$0x3f]
  %v36 = vcombine.high %v29, %v29
  %v37 = vcombine.high %v30, %v30
  %v38 = vcombine.high %v31, %v31
  %42 = vrot.lane.b32.xlu0 %v29, 19
  %v43 = vpop.permute.xlu0 %42
  %44 = vrot.lane.b32.xlu0 %v36, 19
  %v45 = vpop.permute.xlu0 %44
  %46 = vrot.lane.b32.xlu0 %v30, 19
  %v47 = vpop.permute.xlu0 %46
  %48 = vrot.lane.b32.xlu0 %v37, 19
  %v49 = vpop.permute.xlu0 %48
  %50 = vrot.lane.b32.xlu0 %v31, 19
  %v51 = vpop.permute.xlu0 %50
  %52 = vrot.lane.b32.xlu0 %v38, 19
  %v53 = vpop.permute.xlu0 %52
  %v54 = vlaneseq
  %v55 = vand.u32 %v54, 127
  %vm56 = vcmp.lt.s32.totalorder %v55, 19
  %v57 = vsel %vm56, %v51, %v53
  %v58 = vsel %vm56, %v49, %v51
  %v59 = vsel %vm56, %v47, %v49
  %v60 = vsel %vm56, %v45, %v47
  %v61 = vsel %vm56, %v43, %v45
  %v62 = vsel %vm56, %v53, %v43
  %v63 = vld [vmem:[%s2] sm:$0xf]
  %64 = vrot.lane.b32.xlu0 %v29, 18
  %v65 = vpop.permute.xlu0 %64
  %66 = vrot.lane.b32.xlu0 %v36, 18
  %v67 = vpop.permute.xlu0 %66
  %68 = vrot.lane.b32.xlu0 %v30, 18
  %v69 = vpop.permute.xlu0 %68
  %70 = vrot.lane.b32.xlu0 %v37, 18
  %v71 = vpop.permute.xlu0 %70
  %72 = vrot.lane.b32.xlu0 %v31, 18
  %v73 = vpop.permute.xlu0 %72
  %74 = vrot.lane.b32.xlu0 %v38, 18
  %v75 = vpop.permute.xlu0 %74
  %vm76 = vcmp.lt.s32.totalorder %v55, 18
  %v77 = vsel %vm76, %v73, %v75
  %v78 = vsel %vm76, %v71, %v73
  %v79 = vsel %vm76, %v69, %v71
  %v80 = vsel %vm76, %v67, %v69
  %v81 = vsel %vm76, %v65, %v67
  %v82 = vsel %vm76, %v75, %v65
  %s83 = scalar_lea.vmem %s2, 4
  %v84 = vld [vmem:[%s83] sm:$0xf]
  %vm85 = vcmask 31744
  %v87 = vsel %vm85, %v84, 0
  %vm89 = vcmask 1043456
  %v91 = vsel %vm89, %v82, 0
  %v94 = vsel %vm89, %v81, 0
  %v97 = vsel %vm89, %v80, 0
  %v100 = vsel %vm89, %v79, 0
  %v103 = vsel %vm89, %v78, 0
  %v106 = vsel %vm89, %v77, 0
  %108 = vmatprep.subr.mxu0 %v94
  %109 = vmatpush1.msra.mxu0 %v91
  %110 = vmatprep.subr.mxu0 0.0
  %111 = vmatpush1.msra.mxu0 0.0
  %112 = vmatprep.subr.mxu0 0.0
  %113 = vmatpush1.msra.mxu0 0.0
  %114 = vmatprep.subr.mxu0 0.0
  %115 = vmatpush1.msra.mxu0 0.0
  %116 = vmatprep.subr.mxu0 0.0
  %117 = vmatpush1.msra.mxu0 0.0
  %118 = vmatprep.subr.mxu0 0.0
  %119 = vmatpush1.msra.mxu0 0.0
  %120 = vmatprep.subr.mxu0 0.0
  %121 = vmatpush1.msra.mxu0 0.0
  %122 = vmatprep.subr.mxu0 0.0
  %123 = vmatpush1.msra.mxu0 0.0
  %124 = vmatprep.subr.mxu0 0.0
  %125 = vmatpush1.msra.mxu0 0.0
  %126 = vmatprep.subr.mxu0 0.0
  %127 = vmatpush1.msra.mxu0 0.0
  %128 = vmatprep.subr.mxu0 0.0
  %129 = vmatpush1.msra.mxu0 0.0
  %130 = vmatprep.subr.mxu0 0.0
  %131 = vmatpush1.msra.mxu0 0.0
  %132 = vmatprep.subr.mxu0 0.0
  %133 = vmatpush1.msra.mxu0 0.0
  %134 = vmatprep.subr.mxu0 0.0
  %135 = vmatpush1.msra.mxu0 0.0
  %136 = vmatprep.subr.mxu0 0.0
  %137 = vmatpush1.msra.mxu0 0.0
  %138 = vmatprep.subr.mxu0 0.0
  %139 = vmatpush1.msra.mxu0 0.0
  %140 = vmatprep.subr.mxu0 0.0
  %141 = vmatpush1.msra.mxu0 0.0
  %142 = vmatprep.subr.mxu0 0.0
  %143 = vmatpush1.msra.mxu0 0.0
  %144 = vmatprep.subr.mxu0 0.0
  %145 = vmatpush1.msra.mxu0 0.0
  %146 = vmatprep.subr.mxu0 0.0
  %147 = vmatpush1.msra.mxu0 0.0
  %148 = vmatprep.subr.mxu0 0.0
  %149 = vmatpush1.msra.mxu0 0.0
  %150 = vmatprep.subr.mxu0 0.0
  %151 = vmatpush1.msra.mxu0 0.0
  %152 = vmatprep.subr.mxu0 0.0
  %153 = vmatpush1.msra.mxu0 0.0
  %154 = vmatprep.subr.mxu0 0.0
  %155 = vmatpush1.msra.mxu0 0.0
  %156 = vmatprep.subr.mxu0 0.0
  %157 = vmatpush1.msra.mxu0 0.0
  %158 = vmatprep.subr.mxu0 0.0
  %159 = vmatpush1.msra.mxu0 0.0
  %160 = vmatprep.subr.mxu0 0.0
  %161 = vmatpush1.msra.mxu0 0.0
  %162 = vmatprep.subr.mxu0 0.0
  %163 = vmatpush1.msra.mxu0 0.0
  %164 = vmatprep.subr.mxu0 0.0
  %165 = vmatpush1.msra.mxu0 0.0
  %166 = vmatprep.subr.mxu0 0.0
  %167 = vmatpush1.msra.mxu0 0.0
  %168 = vmatprep.subr.mxu0 0.0
  %169 = vmatpush1.msra.mxu0 0.0
  %170 = vmatprep.subr.mxu0 0.0
  %171 = vmatpush1.msra.mxu0 0.0
  %172 = vmatprep.mubr.f32.mxu0 0.0
  %173 = vmatmul.mubr.f32.gmra.mrb[0].mxu0 %v87
  %v174 = vpop.f32.mrb[0].mxu0
  %v175 = vadd.f32 0.0, %v174
  %v176 = vpop.f32.mrb[0].mxu0
  %v177 = vadd.f32 0.0, %v176
  %178 = vdwg.mxu0
  %179 = vmatprep.subr.mxu0 %v100
  %180 = vmatpush1.msra.mxu0 %v97
  %181 = vmatprep.subr.mxu0 0.0
  %182 = vmatpush1.msra.mxu0 0.0
  %183 = vmatprep.subr.mxu0 0.0
  %184 = vmatpush1.msra.mxu0 0.0
  %185 = vmatprep.subr.mxu0 0.0
  %186 = vmatpush1.msra.mxu0 0.0
  %187 = vmatprep.subr.mxu0 0.0
  %188 = vmatpush1.msra.mxu0 0.0
  %189 = vmatprep.subr.mxu0 0.0
  %190 = vmatpush1.msra.mxu0 0.0
  %191 = vmatprep.subr.mxu0 0.0
  %192 = vmatpush1.msra.mxu0 0.0
  %193 = vmatprep.subr.mxu0 0.0
  %194 = vmatpush1.msra.mxu0 0.0
  %195 = vmatprep.subr.mxu0 0.0
  %196 = vmatpush1.msra.mxu0 0.0
  %197 = vmatprep.subr.mxu0 0.0
  %198 = vmatpush1.msra.mxu0 0.0
  %199 = vmatprep.subr.mxu0 0.0
  %200 = vmatpush1.msra.mxu0 0.0
  %201 = vmatprep.subr.mxu0 0.0
  %202 = vmatpush1.msra.mxu0 0.0
  %203 = vmatprep.subr.mxu0 0.0
  %204 = vmatpush1.msra.mxu0 0.0
  %205 = vmatprep.subr.mxu0 0.0
  %206 = vmatpush1.msra.mxu0 0.0
  %207 = vmatprep.subr.mxu0 0.0
  %208 = vmatpush1.msra.mxu0 0.0
  %209 = vmatprep.subr.mxu0 0.0
  %210 = vmatpush1.msra.mxu0 0.0
  %211 = vmatprep.subr.mxu0 0.0
  %212 = vmatpush1.msra.mxu0 0.0
  %213 = vmatprep.subr.mxu0 0.0
  %214 = vmatpush1.msra.mxu0 0.0
  %215 = vmatprep.subr.mxu0 0.0
  %216 = vmatpush1.msra.mxu0 0.0
  %217 = vmatprep.subr.mxu0 0.0
  %218 = vmatpush1.msra.mxu0 0.0
  %219 = vmatprep.subr.mxu0 0.0
  %220 = vmatpush1.msra.mxu0 0.0
  %221 = vmatprep.subr.mxu0 0.0
  %222 = vmatpush1.msra.mxu0 0.0
  %223 = vmatprep.subr.mxu0 0.0
  %224 = vmatpush1.msra.mxu0 0.0
  %225 = vmatprep.subr.mxu0 0.0
  %226 = vmatpush1.msra.mxu0 0.0
  %227 = vmatprep.subr.mxu0 0.0
  %228 = vmatpush1.msra.mxu0 0.0
  %229 = vmatprep.subr.mxu0 0.0
  %230 = vmatpush1.msra.mxu0 0.0
  %231 = vmatprep.subr.mxu0 0.0
  %232 = vmatpush1.msra.mxu0 0.0
  %233 = vmatprep.subr.mxu0 0.0
  %234 = vmatpush1.msra.mxu0 0.0
  %235 = vmatprep.subr.mxu0 0.0
  %236 = vmatpush1.msra.mxu0 0.0
  %237 = vmatprep.subr.mxu0 0.0
  %238 = vmatpush1.msra.mxu0 0.0
  %239 = vmatprep.subr.mxu0 0.0
  %240 = vmatpush1.msra.mxu0 0.0
  %241 = vmatprep.subr.mxu0 0.0
  %242 = vmatpush1.msra.mxu0 0.0
  %243 = vmatprep.mubr.f32.mxu0 0.0
  %244 = vmatmul.mubr.f32.gmra.mrb[0].mxu0 %v87
  %v245 = vpop.f32.mrb[0].mxu0
  %v246 = vadd.f32 0.0, %v245
  %v247 = vpop.f32.mrb[0].mxu0
  %v248 = vadd.f32 0.0, %v247
  %249 = vdwg.mxu0
  %250 = vmatprep.subr.mxu0 %v106
  %251 = vmatpush1.msra.mxu0 %v103
  %252 = vmatprep.subr.mxu0 0.0
  %253 = vmatpush1.msra.mxu0 0.0
  %254 = vmatprep.subr.mxu0 0.0
  %255 = vmatpush1.msra.mxu0 0.0
  %256 = vmatprep.subr.mxu0 0.0
  %257 = vmatpush1.msra.mxu0 0.0
  %258 = vmatprep.subr.mxu0 0.0
  %259 = vmatpush1.msra.mxu0 0.0
  %260 = vmatprep.subr.mxu0 0.0
  %261 = vmatpush1.msra.mxu0 0.0
  %262 = vmatprep.subr.mxu0 0.0
  %263 = vmatpush1.msra.mxu0 0.0
  %264 = vmatprep.subr.mxu0 0.0
  %265 = vmatpush1.msra.mxu0 0.0
  %266 = vmatprep.subr.mxu0 0.0
  %267 = vmatpush1.msra.mxu0 0.0
  %268 = vmatprep.subr.mxu0 0.0
  %269 = vmatpush1.msra.mxu0 0.0
  %270 = vmatprep.subr.mxu0 0.0
  %271 = vmatpush1.msra.mxu0 0.0
  %272 = vmatprep.subr.mxu0 0.0
  %273 = vmatpush1.msra.mxu0 0.0
  %274 = vmatprep.subr.mxu0 0.0
  %275 = vmatpush1.msra.mxu0 0.0
  %276 = vmatprep.subr.mxu0 0.0
  %277 = vmatpush1.msra.mxu0 0.0
  %278 = vmatprep.subr.mxu0 0.0
  %279 = vmatpush1.msra.mxu0 0.0
  %280 = vmatprep.subr.mxu0 0.0
  %281 = vmatpush1.msra.mxu0 0.0
  %282 = vmatprep.subr.mxu0 0.0
  %283 = vmatpush1.msra.mxu0 0.0
  %284 = vmatprep.subr.mxu0 0.0
  %285 = vmatpush1.msra.mxu0 0.0
  %286 = vmatprep.subr.mxu0 0.0
  %287 = vmatpush1.msra.mxu0 0.0
  %288 = vmatprep.subr.mxu0 0.0
  %289 = vmatpush1.msra.mxu0 0.0
  %290 = vmatprep.subr.mxu0 0.0
  %291 = vmatpush1.msra.mxu0 0.0
  %292 = vmatprep.subr.mxu0 0.0
  %293 = vmatpush1.msra.mxu0 0.0
  %294 = vmatprep.subr.mxu0 0.0
  %295 = vmatpush1.msra.mxu0 0.0
  %296 = vmatprep.subr.mxu0 0.0
  %297 = vmatpush1.msra.mxu0 0.0
  %298 = vmatprep.subr.mxu0 0.0
  %299 = vmatpush1.msra.mxu0 0.0
  %300 = vmatprep.subr.mxu0 0.0
  %301 = vmatpush1.msra.mxu0 0.0
  %302 = vmatprep.subr.mxu0 0.0
  %303 = vmatpush1.msra.mxu0 0.0
  %304 = vmatprep.subr.mxu0 0.0
  %305 = vmatpush1.msra.mxu0 0.0
  %306 = vmatprep.subr.mxu0 0.0
  %307 = vmatpush1.msra.mxu0 0.0
  %308 = vmatprep.subr.mxu0 0.0
  %309 = vmatpush1.msra.mxu0 0.0
  %310 = vmatprep.subr.mxu0 0.0
  %311 = vmatpush1.msra.mxu0 0.0
  %312 = vmatprep.subr.mxu0 0.0
  %313 = vmatpush1.msra.mxu0 0.0
  %314 = vmatprep.mubr.f32.mxu0 0.0
  %315 = vmatmul.mubr.f32.gmra.mrb[0].mxu0 %v87
  %v316 = vpop.f32.mrb[0].mxu0
  %v317 = vadd.f32 0.0, %v316
  %v318 = vpop.f32.mrb[0].mxu0
  %v319 = vadd.f32 0.0, %v318
  %320 = vdwg.mxu0
  %v322 = vsel %vm85, %v63, 0
  %v325 = vsel %vm89, %v62, 0
  %v328 = vsel %vm89, %v61, 0
  %v331 = vsel %vm89, %v60, 0
  %v334 = vsel %vm89, %v59, 0
  %v337 = vsel %vm89, %v58, 0
  %v340 = vsel %vm89, %v57, 0
  %342 = vmatprep.subr.mxu0 %v328
  %343 = vmatpush1.msra.mxu0 %v325
  %344 = vmatprep.subr.mxu0 0.0
  %345 = vmatpush1.msra.mxu0 0.0
  %346 = vmatprep.subr.mxu0 0.0
  %347 = vmatpush1.msra.mxu0 0.0
  %348 = vmatprep.subr.mxu0 0.0
  %349 = vmatpush1.msra.mxu0 0.0
  %350 = vmatprep.subr.mxu0 0.0
  %351 = vmatpush1.msra.mxu0 0.0
  %352 = vmatprep.subr.mxu0 0.0
  %353 = vmatpush1.msra.mxu0 0.0
  %354 = vmatprep.subr.mxu0 0.0
  %355 = vmatpush1.msra.mxu0 0.0
  %356 = vmatprep.subr.mxu0 0.0
  %357 = vmatpush1.msra.mxu0 0.0
  %358 = vmatprep.subr.mxu0 0.0
  %359 = vmatpush1.msra.mxu0 0.0
  %360 = vmatprep.subr.mxu0 0.0
  %361 = vmatpush1.msra.mxu0 0.0
  %362 = vmatprep.subr.mxu0 0.0
  %363 = vmatpush1.msra.mxu0 0.0
  %364 = vmatprep.subr.mxu0 0.0
  %365 = vmatpush1.msra.mxu0 0.0
  %366 = vmatprep.subr.mxu0 0.0
  %367 = vmatpush1.msra.mxu0 0.0
  %368 = vmatprep.subr.mxu0 0.0
  %369 = vmatpush1.msra.mxu0 0.0
  %370 = vmatprep.subr.mxu0 0.0
  %371 = vmatpush1.msra.mxu0 0.0
  %372 = vmatprep.subr.mxu0 0.0
  %373 = vmatpush1.msra.mxu0 0.0
  %374 = vmatprep.subr.mxu0 0.0
  %375 = vmatpush1.msra.mxu0 0.0
  %376 = vmatprep.subr.mxu0 0.0
  %377 = vmatpush1.msra.mxu0 0.0
  %378 = vmatprep.subr.mxu0 0.0
  %379 = vmatpush1.msra.mxu0 0.0
  %380 = vmatprep.subr.mxu0 0.0
  %381 = vmatpush1.msra.mxu0 0.0
  %382 = vmatprep.subr.mxu0 0.0
  %383 = vmatpush1.msra.mxu0 0.0
  %384 = vmatprep.subr.mxu0 0.0
  %385 = vmatpush1.msra.mxu0 0.0
  %386 = vmatprep.subr.mxu0 0.0
  %387 = vmatpush1.msra.mxu0 0.0
  %388 = vmatprep.subr.mxu0 0.0
  %389 = vmatpush1.msra.mxu0 0.0
  %390 = vmatprep.subr.mxu0 0.0
  %391 = vmatpush1.msra.mxu0 0.0
  %392 = vmatprep.subr.mxu0 0.0
  %393 = vmatpush1.msra.mxu0 0.0
  %394 = vmatprep.subr.mxu0 0.0
  %395 = vmatpush1.msra.mxu0 0.0
  %396 = vmatprep.subr.mxu0 0.0
  %397 = vmatpush1.msra.mxu0 0.0
  %398 = vmatprep.subr.mxu0 0.0
  %399 = vmatpush1.msra.mxu0 0.0
  %400 = vmatprep.subr.mxu0 0.0
  %401 = vmatpush1.msra.mxu0 0.0
  %402 = vmatprep.subr.mxu0 0.0
  %403 = vmatpush1.msra.mxu0 0.0
  %404 = vmatprep.subr.mxu0 0.0
  %405 = vmatpush1.msra.mxu0 0.0
  %406 = vmatprep.mubr.f32.mxu0 0.0
  %407 = vmatmul.mubr.f32.gmra.mrb[0].mxu0 %v322
  %v408 = vpop.f32.mrb[0].mxu0
  %v409 = vadd.f32 %v175, %v408
  %v410 = vpop.f32.mrb[0].mxu0
  %v411 = vadd.f32 %v177, %v410
  %412 = vdwg.mxu0
  %413 = vmatprep.subr.mxu0 %v334
  %414 = vmatpush1.msra.mxu0 %v331
  %415 = vmatprep.subr.mxu0 0.0
  %416 = vmatpush1.msra.mxu0 0.0
  %417 = vmatprep.subr.mxu0 0.0
  %418 = vmatpush1.msra.mxu0 0.0
  %419 = vmatprep.subr.mxu0 0.0
  %420 = vmatpush1.msra.mxu0 0.0
  %421 = vmatprep.subr.mxu0 0.0
  %422 = vmatpush1.msra.mxu0 0.0
  %423 = vmatprep.subr.mxu0 0.0
  %424 = vmatpush1.msra.mxu0 0.0
  %425 = vmatprep.subr.mxu0 0.0
  %426 = vmatpush1.msra.mxu0 0.0
  %427 = vmatprep.subr.mxu0 0.0
  %428 = vmatpush1.msra.mxu0 0.0
  %429 = vmatprep.subr.mxu0 0.0
  %430 = vmatpush1.msra.mxu0 0.0
  %431 = vmatprep.subr.mxu0 0.0
  %432 = vmatpush1.msra.mxu0 0.0
  %433 = vmatprep.subr.mxu0 0.0
  %434 = vmatpush1.msra.mxu0 0.0
  %435 = vmatprep.subr.mxu0 0.0
  %436 = vmatpush1.msra.mxu0 0.0
  %437 = vmatprep.subr.mxu0 0.0
  %438 = vmatpush1.msra.mxu0 0.0
  %439 = vmatprep.subr.mxu0 0.0
  %440 = vmatpush1.msra.mxu0 0.0
  %441 = vmatprep.subr.mxu0 0.0
  %442 = vmatpush1.msra.mxu0 0.0
  %443 = vmatprep.subr.mxu0 0.0
  %444 = vmatpush1.msra.mxu0 0.0
  %445 = vmatprep.subr.mxu0 0.0
  %446 = vmatpush1.msra.mxu0 0.0
  %447 = vmatprep.subr.mxu0 0.0
  %448 = vmatpush1.msra.mxu0 0.0
  %449 = vmatprep.subr.mxu0 0.0
  %450 = vmatpush1.msra.mxu0 0.0
  %451 = vmatprep.subr.mxu0 0.0
  %452 = vmatpush1.msra.mxu0 0.0
  %453 = vmatprep.subr.mxu0 0.0
  %454 = vmatpush1.msra.mxu0 0.0
  %455 = vmatprep.subr.mxu0 0.0
  %456 = vmatpush1.msra.mxu0 0.0
  %457 = vmatprep.subr.mxu0 0.0
  %458 = vmatpush1.msra.mxu0 0.0
  %459 = vmatprep.subr.mxu0 0.0
  %460 = vmatpush1.msra.mxu0 0.0
  %461 = vmatprep.subr.mxu0 0.0
  %462 = vmatpush1.msra.mxu0 0.0
  %463 = vmatprep.subr.mxu0 0.0
  %464 = vmatpush1.msra.mxu0 0.0
  %465 = vmatprep.subr.mxu0 0.0
  %466 = vmatpush1.msra.mxu0 0.0
  %467 = vmatprep.subr.mxu0 0.0
  %468 = vmatpush1.msra.mxu0 0.0
  %469 = vmatprep.subr.mxu0 0.0
  %470 = vmatpush1.msra.mxu0 0.0
  %471 = vmatprep.subr.mxu0 0.0
  %472 = vmatpush1.msra.mxu0 0.0
  %473 = vmatprep.subr.mxu0 0.0
  %474 = vmatpush1.msra.mxu0 0.0
  %475 = vmatprep.subr.mxu0 0.0
  %476 = vmatpush1.msra.mxu0 0.0
  %477 = vmatprep.mubr.f32.mxu0 0.0
  %478 = vmatmul.mubr.f32.gmra.mrb[0].mxu0 %v322
  %v479 = vpop.f32.mrb[0].mxu0
  %v480 = vadd.f32 %v246, %v479
  %v481 = vpop.f32.mrb[0].mxu0
  %v482 = vadd.f32 %v248, %v481
  %483 = vdwg.mxu0
  %484 = vmatprep.subr.mxu0 %v340
  %485 = vmatpush1.msra.mxu0 %v337
  %486 = vmatprep.subr.mxu0 0.0
  %487 = vmatpush1.msra.mxu0 0.0
  %488 = vmatprep.subr.mxu0 0.0
  %489 = vmatpush1.msra.mxu0 0.0
  %490 = vmatprep.subr.mxu0 0.0
  %491 = vmatpush1.msra.mxu0 0.0
  %492 = vmatprep.subr.mxu0 0.0
  %493 = vmatpush1.msra.mxu0 0.0
  %494 = vmatprep.subr.mxu0 0.0
  %495 = vmatpush1.msra.mxu0 0.0
  %496 = vmatprep.subr.mxu0 0.0
  %497 = vmatpush1.msra.mxu0 0.0
  %498 = vmatprep.subr.mxu0 0.0
  %499 = vmatpush1.msra.mxu0 0.0
  %500 = vmatprep.subr.mxu0 0.0
  %501 = vmatpush1.msra.mxu0 0.0
  %502 = vmatprep.subr.mxu0 0.0
  %503 = vmatpush1.msra.mxu0 0.0
  %504 = vmatprep.subr.mxu0 0.0
  %505 = vmatpush1.msra.mxu0 0.0
  %506 = vmatprep.subr.mxu0 0.0
  %507 = vmatpush1.msra.mxu0 0.0
  %508 = vmatprep.subr.mxu0 0.0
  %509 = vmatpush1.msra.mxu0 0.0
  %510 = vmatprep.subr.mxu0 0.0
  %511 = vmatpush1.msra.mxu0 0.0
  %512 = vmatprep.subr.mxu0 0.0
  %513 = vmatpush1.msra.mxu0 0.0
  %514 = vmatprep.subr.mxu0 0.0
  %515 = vmatpush1.msra.mxu0 0.0
  %516 = vmatprep.subr.mxu0 0.0
  %517 = vmatpush1.msra.mxu0 0.0
  %518 = vmatprep.subr.mxu0 0.0
  %519 = vmatpush1.msra.mxu0 0.0
  %520 = vmatprep.subr.mxu0 0.0
  %521 = vmatpush1.msra.mxu0 0.0
  %522 = vmatprep.subr.mxu0 0.0
  %523 = vmatpush1.msra.mxu0 0.0
  %524 = vmatprep.subr.mxu0 0.0
  %525 = vmatpush1.msra.mxu0 0.0
  %526 = vmatprep.subr.mxu0 0.0
  %527 = vmatpush1.msra.mxu0 0.0
  %528 = vmatprep.subr.mxu0 0.0
  %529 = vmatpush1.msra.mxu0 0.0
  %530 = vmatprep.subr.mxu0 0.0
  %531 = vmatpush1.msra.mxu0 0.0
  %532 = vmatprep.subr.mxu0 0.0
  %533 = vmatpush1.msra.mxu0 0.0
  %534 = vmatprep.subr.mxu0 0.0
  %535 = vmatpush1.msra.mxu0 0.0
  %536 = vmatprep.subr.mxu0 0.0
  %537 = vmatpush1.msra.mxu0 0.0
  %538 = vmatprep.subr.mxu0 0.0
  %539 = vmatpush1.msra.mxu0 0.0
  %540 = vmatprep.subr.mxu0 0.0
  %541 = vmatpush1.msra.mxu0 0.0
  %542 = vmatprep.subr.mxu0 0.0
  %543 = vmatpush1.msra.mxu0 0.0
  %544 = vmatprep.subr.mxu0 0.0
  %545 = vmatpush1.msra.mxu0 0.0
  %546 = vmatprep.subr.mxu0 0.0
  %547 = vmatpush1.msra.mxu0 0.0
  %548 = vmatprep.mubr.f32.mxu0 0.0
  %549 = vmatmul.mubr.f32.gmra.mrb[0].mxu0 %v322
  %v550 = vpop.f32.mrb[0].mxu0
  %v551 = vadd.f32 %v317, %v550
  %v552 = vpop.f32.mrb[0].mxu0
  %v553 = vadd.f32 %v319, %v552
  %554 = vdwg.mxu0
  %555 = vrot.lane.b32.xlu0 %v29, 17
  %v556 = vpop.permute.xlu0 %555
  %557 = vrot.lane.b32.xlu0 %v36, 17
  %v558 = vpop.permute.xlu0 %557
  %559 = vrot.lane.b32.xlu0 %v30, 17
  %v560 = vpop.permute.xlu0 %559
  %561 = vrot.lane.b32.xlu0 %v37, 17
  %v562 = vpop.permute.xlu0 %561
  %563 = vrot.lane.b32.xlu0 %v31, 17
  %v564 = vpop.permute.xlu0 %563
  %565 = vrot.lane.b32.xlu0 %v38, 17
  %v566 = vpop.permute.xlu0 %565
  %vm567 = vcmp.lt.s32.totalorder %v55, 17
  %v568 = vsel %vm567, %v564, %v566
  %v569 = vsel %vm567, %v562, %v564
  %v570 = vsel %vm567, %v560, %v562
  %v571 = vsel %vm567, %v558, %v560
  %v572 = vsel %vm567, %v556, %v558
  %v573 = vsel %vm567, %v566, %v556
  %s574 = scalar_lea.vmem %s2, 8
  %v575 = vld [vmem:[%s574] sm:$0xf]
  %v577 = vsel %vm85, %v575, 0
  %v580 = vsel %vm89, %v573, 0
  %v583 = vsel %vm89, %v572, 0
  %v586 = vsel %vm89, %v571, 0
  %v589 = vsel %vm89, %v570, 0
  %v592 = vsel %vm89, %v569, 0
  %v595 = vsel %vm89, %v568, 0
  %597 = vmatprep.subr.mxu0 %v583
  %598 = vmatpush1.msra.mxu0 %v580
  %599 = vmatprep.subr.mxu0 0.0
  %600 = vmatpush1.msra.mxu0 0.0
  %601 = vmatprep.subr.mxu0 0.0
  %602 = vmatpush1.msra.mxu0 0.0
  %603 = vmatprep.subr.mxu0 0.0
  %604 = vmatpush1.msra.mxu0 0.0
  %605 = vmatprep.subr.mxu0 0.0
  %606 = vmatpush1.msra.mxu0 0.0
  %607 = vmatprep.subr.mxu0 0.0
  %608 = vmatpush1.msra.mxu0 0.0
  %609 = vmatprep.subr.mxu0 0.0
  %610 = vmatpush1.msra.mxu0 0.0
  %611 = vmatprep.subr.mxu0 0.0
  %612 = vmatpush1.msra.mxu0 0.0
  %613 = vmatprep.subr.mxu0 0.0
  %614 = vmatpush1.msra.mxu0 0.0
  %615 = vmatprep.subr.mxu0 0.0
  %616 = vmatpush1.msra.mxu0 0.0
  %617 = vmatprep.subr.mxu0 0.0
  %618 = vmatpush1.msra.mxu0 0.0
  %619 = vmatprep.subr.mxu0 0.0
  %620 = vmatpush1.msra.mxu0 0.0
  %621 = vmatprep.subr.mxu0 0.0
  %622 = vmatpush1.msra.mxu0 0.0
  %623 = vmatprep.subr.mxu0 0.0
  %624 = vmatpush1.msra.mxu0 0.0
  %625 = vmatprep.subr.mxu0 0.0
  %626 = vmatpush1.msra.mxu0 0.0
  %627 = vmatprep.subr.mxu0 0.0
  %628 = vmatpush1.msra.mxu0 0.0
  %629 = vmatprep.subr.mxu0 0.0
  %630 = vmatpush1.msra.mxu0 0.0
  %631 = vmatprep.subr.mxu0 0.0
  %632 = vmatpush1.msra.mxu0 0.0
  %633 = vmatprep.subr.mxu0 0.0
  %634 = vmatpush1.msra.mxu0 0.0
  %635 = vmatprep.subr.mxu0 0.0
  %636 = vmatpush1.msra.mxu0 0.0
  %637 = vmatprep.subr.mxu0 0.0
  %638 = vmatpush1.msra.mxu0 0.0
  %639 = vmatprep.subr.mxu0 0.0
  %640 = vmatpush1.msra.mxu0 0.0
  %641 = vmatprep.subr.mxu0 0.0
  %642 = vmatpush1.msra.mxu0 0.0
  %643 = vmatprep.subr.mxu0 0.0
  %644 = vmatpush1.msra.mxu0 0.0
  %645 = vmatprep.subr.mxu0 0.0
  %646 = vmatpush1.msra.mxu0 0.0
  %647 = vmatprep.subr.mxu0 0.0
  %648 = vmatpush1.msra.mxu0 0.0
  %649 = vmatprep.subr.mxu0 0.0
  %650 = vmatpush1.msra.mxu0 0.0
  %651 = vmatprep.subr.mxu0 0.0
  %652 = vmatpush1.msra.mxu0 0.0
  %653 = vmatprep.subr.mxu0 0.0
  %654 = vmatpush1.msra.mxu0 0.0
  %655 = vmatprep.subr.mxu0 0.0
  %656 = vmatpush1.msra.mxu0 0.0
  %657 = vmatprep.subr.mxu0 0.0
  %658 = vmatpush1.msra.mxu0 0.0
  %659 = vmatprep.subr.mxu0 0.0
  %660 = vmatpush1.msra.mxu0 0.0
  %661 = vmatprep.mubr.f32.mxu0 0.0
  %662 = vmatmul.mubr.f32.gmra.mrb[0].mxu0 %v577
  %v663 = vpop.f32.mrb[0].mxu0
  %v664 = vadd.f32 0.0, %v663
  %v665 = vpop.f32.mrb[0].mxu0
  %v666 = vadd.f32 0.0, %v665
  %667 = vdwg.mxu0
  %668 = vmatprep.subr.mxu0 %v589
  %669 = vmatpush1.msra.mxu0 %v586
  %670 = vmatprep.subr.mxu0 0.0
  %671 = vmatpush1.msra.mxu0 0.0
  %672 = vmatprep.subr.mxu0 0.0
  %673 = vmatpush1.msra.mxu0 0.0
  %674 = vmatprep.subr.mxu0 0.0
  %675 = vmatpush1.msra.mxu0 0.0
  %676 = vmatprep.subr.mxu0 0.0
  %677 = vmatpush1.msra.mxu0 0.0
  %678 = vmatprep.subr.mxu0 0.0
  %679 = vmatpush1.msra.mxu0 0.0
  %680 = vmatprep.subr.mxu0 0.0
  %681 = vmatpush1.msra.mxu0 0.0
  %682 = vmatprep.subr.mxu0 0.0
  %683 = vmatpush1.msra.mxu0 0.0
  %684 = vmatprep.subr.mxu0 0.0
  %685 = vmatpush1.msra.mxu0 0.0
  %686 = vmatprep.subr.mxu0 0.0
  %687 = vmatpush1.msra.mxu0 0.0
  %688 = vmatprep.subr.mxu0 0.0
  %689 = vmatpush1.msra.mxu0 0.0
  %690 = vmatprep.subr.mxu0 0.0
  %691 = vmatpush1.msra.mxu0 0.0
  %692 = vmatprep.subr.mxu0 0.0
  %693 = vmatpush1.msra.mxu0 0.0
  %694 = vmatprep.subr.mxu0 0.0
  %695 = vmatpush1.msra.mxu0 0.0
  %696 = vmatprep.subr.mxu0 0.0
  %697 = vmatpush1.msra.mxu0 0.0
  %698 = vmatprep.subr.mxu0 0.0
  %699 = vmatpush1.msra.mxu0 0.0
  %700 = vmatprep.subr.mxu0 0.0
  %701 = vmatpush1.msra.mxu0 0.0
  %702 = vmatprep.subr.mxu0 0.0
  %703 = vmatpush1.msra.mxu0 0.0
  %704 = vmatprep.subr.mxu0 0.0
  %705 = vmatpush1.msra.mxu0 0.0
  %706 = vmatprep.subr.mxu0 0.0
  %707 = vmatpush1.msra.mxu0 0.0
  %708 = vmatprep.subr.mxu0 0.0
  %709 = vmatpush1.msra.mxu0 0.0
  %710 = vmatprep.subr.mxu0 0.0
  %711 = vmatpush1.msra.mxu0 0.0
  %712 = vmatprep.subr.mxu0 0.0
  %713 = vmatpush1.msra.mxu0 0.0
  %714 = vmatprep.subr.mxu0 0.0
  %715 = vmatpush1.msra.mxu0 0.0
  %716 = vmatprep.subr.mxu0 0.0
  %717 = vmatpush1.msra.mxu0 0.0
  %718 = vmatprep.subr.mxu0 0.0
  %719 = vmatpush1.msra.mxu0 0.0
  %720 = vmatprep.subr.mxu0 0.0
  %721 = vmatpush1.msra.mxu0 0.0
  %722 = vmatprep.subr.mxu0 0.0
  %723 = vmatpush1.msra.mxu0 0.0
  %724 = vmatprep.subr.mxu0 0.0
  %725 = vmatpush1.msra.mxu0 0.0
  %726 = vmatprep.subr.mxu0 0.0
  %727 = vmatpush1.msra.mxu0 0.0
  %728 = vmatprep.subr.mxu0 0.0
  %729 = vmatpush1.msra.mxu0 0.0
  %730 = vmatprep.subr.mxu0 0.0
  %731 = vmatpush1.msra.mxu0 0.0
  %732 = vmatprep.mubr.f32.mxu0 0.0
  %733 = vmatmul.mubr.f32.gmra.mrb[0].mxu0 %v577
  %v734 = vpop.f32.mrb[0].mxu0
  %v735 = vadd.f32 0.0, %v734
  %v736 = vpop.f32.mrb[0].mxu0
  %v737 = vadd.f32 0.0, %v736
  %738 = vdwg.mxu0
  %739 = vmatprep.subr.mxu0 %v595
  %740 = vmatpush1.msra.mxu0 %v592
  %741 = vmatprep.subr.mxu0 0.0
  %742 = vmatpush1.msra.mxu0 0.0
  %743 = vmatprep.subr.mxu0 0.0
  %744 = vmatpush1.msra.mxu0 0.0
  %745 = vmatprep.subr.mxu0 0.0
  %746 = vmatpush1.msra.mxu0 0.0
  %747 = vmatprep.subr.mxu0 0.0
  %748 = vmatpush1.msra.mxu0 0.0
  %749 = vmatprep.subr.mxu0 0.0
  %750 = vmatpush1.msra.mxu0 0.0
  %751 = vmatprep.subr.mxu0 0.0
  %752 = vmatpush1.msra.mxu0 0.0
  %753 = vmatprep.subr.mxu0 0.0
  %754 = vmatpush1.msra.mxu0 0.0
  %755 = vmatprep.subr.mxu0 0.0
  %756 = vmatpush1.msra.mxu0 0.0
  %757 = vmatprep.subr.mxu0 0.0
  %758 = vmatpush1.msra.mxu0 0.0
  %759 = vmatprep.subr.mxu0 0.0
  %760 = vmatpush1.msra.mxu0 0.0
  %761 = vmatprep.subr.mxu0 0.0
  %762 = vmatpush1.msra.mxu0 0.0
  %763 = vmatprep.subr.mxu0 0.0
  %764 = vmatpush1.msra.mxu0 0.0
  %765 = vmatprep.subr.mxu0 0.0
  %766 = vmatpush1.msra.mxu0 0.0
  %767 = vmatprep.subr.mxu0 0.0
  %768 = vmatpush1.msra.mxu0 0.0
  %769 = vmatprep.subr.mxu0 0.0
  %770 = vmatpush1.msra.mxu0 0.0
  %771 = vmatprep.subr.mxu0 0.0
  %772 = vmatpush1.msra.mxu0 0.0
  %773 = vmatprep.subr.mxu0 0.0
  %774 = vmatpush1.msra.mxu0 0.0
  %775 = vmatprep.subr.mxu0 0.0
  %776 = vmatpush1.msra.mxu0 0.0
  %777 = vmatprep.subr.mxu0 0.0
  %778 = vmatpush1.msra.mxu0 0.0
  %779 = vmatprep.subr.mxu0 0.0
  %780 = vmatpush1.msra.mxu0 0.0
  %781 = vmatprep.subr.mxu0 0.0
  %782 = vmatpush1.msra.mxu0 0.0
  %783 = vmatprep.subr.mxu0 0.0
  %784 = vmatpush1.msra.mxu0 0.0
  %785 = vmatprep.subr.mxu0 0.0
  %786 = vmatpush1.msra.mxu0 0.0
  %787 = vmatprep.subr.mxu0 0.0
  %788 = vmatpush1.msra.mxu0 0.0
  %789 = vmatprep.subr.mxu0 0.0
  %790 = vmatpush1.msra.mxu0 0.0
  %791 = vmatprep.subr.mxu0 0.0
  %792 = vmatpush1.msra.mxu0 0.0
  %793 = vmatprep.subr.mxu0 0.0
  %794 = vmatpush1.msra.mxu0 0.0
  %795 = vmatprep.subr.mxu0 0.0
  %796 = vmatpush1.msra.mxu0 0.0
  %797 = vmatprep.subr.mxu0 0.0
  %798 = vmatpush1.msra.mxu0 0.0
  %799 = vmatprep.subr.mxu0 0.0
  %800 = vmatpush1.msra.mxu0 0.0
  %801 = vmatprep.subr.mxu0 0.0
  %802 = vmatpush1.msra.mxu0 0.0
  %803 = vmatprep.mubr.f32.mxu0 0.0
  %804 = vmatmul.mubr.f32.gmra.mrb[0].mxu0 %v577
  %v805 = vpop.f32.mrb[0].mxu0
  %v806 = vadd.f32 0.0, %v805
  %v807 = vpop.f32.mrb[0].mxu0
  %v808 = vadd.f32 0.0, %v807
  %809 = vdwg.mxu0
  %v810 = vadd.f32 %v409, %v664
  %v811 = vadd.f32 %v411, %v666
  %v812 = vadd.f32 %v480, %v735
  %v813 = vadd.f32 %v482, %v737
  %v814 = vadd.f32 %v551, %v806
  %v815 = vadd.f32 %v553, %v808
  %816 = vrot.lane.b32.xlu0 %v29, 1
  %v817 = vpop.permute.xlu0 %816
  %818 = vrot.lane.b32.xlu0 %v36, 1
  %v819 = vpop.permute.xlu0 %818
  %820 = vrot.lane.b32.xlu0 %v30, 1
  %v821 = vpop.permute.xlu0 %820
  %822 = vrot.lane.b32.xlu0 %v37, 1
  %v823 = vpop.permute.xlu0 %822
  %824 = vrot.lane.b32.xlu0 %v31, 1
  %v825 = vpop.permute.xlu0 %824
  %826 = vrot.lane.b32.xlu0 %v38, 1
  %v827 = vpop.permute.xlu0 %826
  %vm828 = vcmp.lt.s32.totalorder %v55, 1
  %v829 = vsel %vm828, %v825, %v827
  %v830 = vsel %vm828, %v823, %v825
  %v831 = vsel %vm828, %v821, %v823
  %v832 = vsel %vm828, %v819, %v821
  %v833 = vsel %vm828, %v817, %v819
  %v834 = vsel %vm828, %v827, %v817
  %s835 = scalar_lea.vmem %s2, 12
  %v836 = vld [vmem:[%s835] sm:$0xf]
  %v838 = vsel %vm85, %v836, 0
  %v841 = vsel %vm89, %v834, 0
  %v844 = vsel %vm89, %v833, 0
  %v847 = vsel %vm89, %v832, 0
  %v850 = vsel %vm89, %v831, 0
  %v853 = vsel %vm89, %v830, 0
  %v856 = vsel %vm89, %v829, 0
  %858 = vmatprep.subr.mxu0 %v844
  %859 = vmatpush1.msra.mxu0 %v841
  %860 = vmatprep.subr.mxu0 0.0
  %861 = vmatpush1.msra.mxu0 0.0
  %862 = vmatprep.subr.mxu0 0.0
  %863 = vmatpush1.msra.mxu0 0.0
  %864 = vmatprep.subr.mxu0 0.0
  %865 = vmatpush1.msra.mxu0 0.0
  %866 = vmatprep.subr.mxu0 0.0
  %867 = vmatpush1.msra.mxu0 0.0
  %868 = vmatprep.subr.mxu0 0.0
  %869 = vmatpush1.msra.mxu0 0.0
  %870 = vmatprep.subr.mxu0 0.0
  %871 = vmatpush1.msra.mxu0 0.0
  %872 = vmatprep.subr.mxu0 0.0
  %873 = vmatpush1.msra.mxu0 0.0
  %874 = vmatprep.subr.mxu0 0.0
  %875 = vmatpush1.msra.mxu0 0.0
  %876 = vmatprep.subr.mxu0 0.0
  %877 = vmatpush1.msra.mxu0 0.0
  %878 = vmatprep.subr.mxu0 0.0
  %879 = vmatpush1.msra.mxu0 0.0
  %880 = vmatprep.subr.mxu0 0.0
  %881 = vmatpush1.msra.mxu0 0.0
  %882 = vmatprep.subr.mxu0 0.0
  %883 = vmatpush1.msra.mxu0 0.0
  %884 = vmatprep.subr.mxu0 0.0
  %885 = vmatpush1.msra.mxu0 0.0
  %886 = vmatprep.subr.mxu0 0.0
  %887 = vmatpush1.msra.mxu0 0.0
  %888 = vmatprep.subr.mxu0 0.0
  %889 = vmatpush1.msra.mxu0 0.0
  %890 = vmatprep.subr.mxu0 0.0
  %891 = vmatpush1.msra.mxu0 0.0
  %892 = vmatprep.subr.mxu0 0.0
  %893 = vmatpush1.msra.mxu0 0.0
  %894 = vmatprep.subr.mxu0 0.0
  %895 = vmatpush1.msra.mxu0 0.0
  %896 = vmatprep.subr.mxu0 0.0
  %897 = vmatpush1.msra.mxu0 0.0
  %898 = vmatprep.subr.mxu0 0.0
  %899 = vmatpush1.msra.mxu0 0.0
  %900 = vmatprep.subr.mxu0 0.0
  %901 = vmatpush1.msra.mxu0 0.0
  %902 = vmatprep.subr.mxu0 0.0
  %903 = vmatpush1.msra.mxu0 0.0
  %904 = vmatprep.subr.mxu0 0.0
  %905 = vmatpush1.msra.mxu0 0.0
  %906 = vmatprep.subr.mxu0 0.0
  %907 = vmatpush1.msra.mxu0 0.0
  %908 = vmatprep.subr.mxu0 0.0
  %909 = vmatpush1.msra.mxu0 0.0
  %910 = vmatprep.subr.mxu0 0.0
  %911 = vmatpush1.msra.mxu0 0.0
  %912 = vmatprep.subr.mxu0 0.0
  %913 = vmatpush1.msra.mxu0 0.0
  %914 = vmatprep.subr.mxu0 0.0
  %915 = vmatpush1.msra.mxu0 0.0
  %916 = vmatprep.subr.mxu0 0.0
  %917 = vmatpush1.msra.mxu0 0.0
  %918 = vmatprep.subr.mxu0 0.0
  %919 = vmatpush1.msra.mxu0 0.0
  %920 = vmatprep.subr.mxu0 0.0
  %921 = vmatpush1.msra.mxu0 0.0
  %922 = vmatprep.mubr.f32.mxu0 0.0
  %923 = vmatmul.mubr.f32.gmra.mrb[0].mxu0 %v838
  %v924 = vpop.f32.mrb[0].mxu0
  %v925 = vadd.f32 0.0, %v924
  %v926 = vpop.f32.mrb[0].mxu0
  %v927 = vadd.f32 0.0, %v926
  %928 = vdwg.mxu0
  %929 = vmatprep.subr.mxu0 %v850
  %930 = vmatpush1.msra.mxu0 %v847
  %931 = vmatprep.subr.mxu0 0.0
  %932 = vmatpush1.msra.mxu0 0.0
  %933 = vmatprep.subr.mxu0 0.0
  %934 = vmatpush1.msra.mxu0 0.0
  %935 = vmatprep.subr.mxu0 0.0
  %936 = vmatpush1.msra.mxu0 0.0
  %937 = vmatprep.subr.mxu0 0.0
  %938 = vmatpush1.msra.mxu0 0.0
  %939 = vmatprep.subr.mxu0 0.0
  %940 = vmatpush1.msra.mxu0 0.0
  %941 = vmatprep.subr.mxu0 0.0
  %942 = vmatpush1.msra.mxu0 0.0
  %943 = vmatprep.subr.mxu0 0.0
  %944 = vmatpush1.msra.mxu0 0.0
  %945 = vmatprep.subr.mxu0 0.0
  %946 = vmatpush1.msra.mxu0 0.0
  %947 = vmatprep.subr.mxu0 0.0
  %948 = vmatpush1.msra.mxu0 0.0
  %949 = vmatprep.subr.mxu0 0.0
  %950 = vmatpush1.msra.mxu0 0.0
  %951 = vmatprep.subr.mxu0 0.0
  %952 = vmatpush1.msra.mxu0 0.0
  %953 = vmatprep.subr.mxu0 0.0
  %954 = vmatpush1.msra.mxu0 0.0
  %955 = vmatprep.subr.mxu0 0.0
  %956 = vmatpush1.msra.mxu0 0.0
  %957 = vmatprep.subr.mxu0 0.0
  %958 = vmatpush1.msra.mxu0 0.0
  %959 = vmatprep.subr.mxu0 0.0
  %960 = vmatpush1.msra.mxu0 0.0
  %961 = vmatprep.subr.mxu0 0.0
  %962 = vmatpush1.msra.mxu0 0.0
  %963 = vmatprep.subr.mxu0 0.0
  %964 = vmatpush1.msra.mxu0 0.0
  %965 = vmatprep.subr.mxu0 0.0
  %966 = vmatpush1.msra.mxu0 0.0
  %967 = vmatprep.subr.mxu0 0.0
  %968 = vmatpush1.msra.mxu0 0.0
  %969 = vmatprep.subr.mxu0 0.0
  %970 = vmatpush1.msra.mxu0 0.0
  %971 = vmatprep.subr.mxu0 0.0
  %972 = vmatpush1.msra.mxu0 0.0
  %973 = vmatprep.subr.mxu0 0.0
  %974 = vmatpush1.msra.mxu0 0.0
  %975 = vmatprep.subr.mxu0 0.0
  %976 = vmatpush1.msra.mxu0 0.0
  %977 = vmatprep.subr.mxu0 0.0
  %978 = vmatpush1.msra.mxu0 0.0
  %979 = vmatprep.subr.mxu0 0.0
  %980 = vmatpush1.msra.mxu0 0.0
  %981 = vmatprep.subr.mxu0 0.0
  %982 = vmatpush1.msra.mxu0 0.0
  %983 = vmatprep.subr.mxu0 0.0
  %984 = vmatpush1.msra.mxu0 0.0
  %985 = vmatprep.subr.mxu0 0.0
  %986 = vmatpush1.msra.mxu0 0.0
  %987 = vmatprep.subr.mxu0 0.0
  %988 = vmatpush1.msra.mxu0 0.0
  %989 = vmatprep.subr.mxu0 0.0
  %990 = vmatpush1.msra.mxu0 0.0
  %991 = vmatprep.subr.mxu0 0.0
  %992 = vmatpush1.msra.mxu0 0.0
  %993 = vmatprep.mubr.f32.mxu0 0.0
  %994 = vmatmul.mubr.f32.gmra.mrb[0].mxu0 %v838
  %v995 = vpop.f32.mrb[0].mxu0
  %v996 = vadd.f32 0.0, %v995
  %v997 = vpop.f32.mrb[0].mxu0
  %v998 = vadd.f32 0.0, %v997
  %999 = vdwg.mxu0
  %1000 = vmatprep.subr.mxu0 %v856
  %1001 = vmatpush1.msra.mxu0 %v853
  %1002 = vmatprep.subr.mxu0 0.0
  %1003 = vmatpush1.msra.mxu0 0.0
  %1004 = vmatprep.subr.mxu0 0.0
  %1005 = vmatpush1.msra.mxu0 0.0
  %1006 = vmatprep.subr.mxu0 0.0
  %1007 = vmatpush1.msra.mxu0 0.0
  %1008 = vmatprep.subr.mxu0 0.0
  %1009 = vmatpush1.msra.mxu0 0.0
  %1010 = vmatprep.subr.mxu0 0.0
  %1011 = vmatpush1.msra.mxu0 0.0
  %1012 = vmatprep.subr.mxu0 0.0
  %1013 = vmatpush1.msra.mxu0 0.0
  %1014 = vmatprep.subr.mxu0 0.0
  %1015 = vmatpush1.msra.mxu0 0.0
  %1016 = vmatprep.subr.mxu0 0.0
  %1017 = vmatpush1.msra.mxu0 0.0
  %1018 = vmatprep.subr.mxu0 0.0
  %1019 = vmatpush1.msra.mxu0 0.0
  %1020 = vmatprep.subr.mxu0 0.0
  %1021 = vmatpush1.msra.mxu0 0.0
  %1022 = vmatprep.subr.mxu0 0.0
  %1023 = vmatpush1.msra.mxu0 0.0
  %1024 = vmatprep.subr.mxu0 0.0
  %1025 = vmatpush1.msra.mxu0 0.0
  %1026 = vmatprep.subr.mxu0 0.0
  %1027 = vmatpush1.msra.mxu0 0.0
  %1028 = vmatprep.subr.mxu0 0.0
  %1029 = vmatpush1.msra.mxu0 0.0
  %1030 = vmatprep.subr.mxu0 0.0
  %1031 = vmatpush1.msra.mxu0 0.0
  %1032 = vmatprep.subr.mxu0 0.0
  %1033 = vmatpush1.msra.mxu0 0.0
  %1034 = vmatprep.subr.mxu0 0.0
  %1035 = vmatpush1.msra.mxu0 0.0
  %1036 = vmatprep.subr.mxu0 0.0
  %1037 = vmatpush1.msra.mxu0 0.0
  %1038 = vmatprep.subr.mxu0 0.0
  %1039 = vmatpush1.msra.mxu0 0.0
  %1040 = vmatprep.subr.mxu0 0.0
  %1041 = vmatpush1.msra.mxu0 0.0
  %1042 = vmatprep.subr.mxu0 0.0
  %1043 = vmatpush1.msra.mxu0 0.0
  %1044 = vmatprep.subr.mxu0 0.0
  %1045 = vmatpush1.msra.mxu0 0.0
  %1046 = vmatprep.subr.mxu0 0.0
  %1047 = vmatpush1.msra.mxu0 0.0
  %1048 = vmatprep.subr.mxu0 0.0
  %1049 = vmatpush1.msra.mxu0 0.0
  %1050 = vmatprep.subr.mxu0 0.0
  %1051 = vmatpush1.msra.mxu0 0.0
  %1052 = vmatprep.subr.mxu0 0.0
  %1053 = vmatpush1.msra.mxu0 0.0
  %1054 = vmatprep.subr.mxu0 0.0
  %1055 = vmatpush1.msra.mxu0 0.0
  %1056 = vmatprep.subr.mxu0 0.0
  %1057 = vmatpush1.msra.mxu0 0.0
  %1058 = vmatprep.subr.mxu0 0.0
  %1059 = vmatpush1.msra.mxu0 0.0
  %1060 = vmatprep.subr.mxu0 0.0
  %1061 = vmatpush1.msra.mxu0 0.0
  %1062 = vmatprep.subr.mxu0 0.0
  %1063 = vmatpush1.msra.mxu0 0.0
  %1064 = vmatprep.mubr.f32.mxu0 0.0
  %1065 = vmatmul.mubr.f32.gmra.mrb[0].mxu0 %v838
  %v1066 = vpop.f32.mrb[0].mxu0
  %v1067 = vadd.f32 0.0, %v1066
  %v1068 = vpop.f32.mrb[0].mxu0
  %v1069 = vadd.f32 0.0, %v1068
  %1070 = vdwg.mxu0
  %v1071 = vadd.f32 %v810, %v925
  %v1072 = vadd.f32 %v811, %v927
  %v1073 = vadd.f32 %v812, %v996
  %v1074 = vadd.f32 %v813, %v998
  %v1075 = vadd.f32 %v814, %v1067
  %v1076 = vadd.f32 %v815, %v1069
  %s1077 = scalar_lea.vmem %s2, 16
  %v1078 = vld [vmem:[%s1077] sm:$0xf]
  %v1080 = vsel %vm85, %v1078, 0
  %v1082 = vsel %vm89, %v29, 0
  %v1084 = vsel %vm89, %v36, 0
  %v1086 = vsel %vm89, %v30, 0
  %v1088 = vsel %vm89, %v37, 0
  %v1090 = vsel %vm89, %v31, 0
  %v1092 = vsel %vm89, %v38, 0
  %1094 = vmatprep.subr.mxu0 %v1084
  %1095 = vmatpush1.msra.mxu0 %v1082
  %1096 = vmatprep.subr.mxu0 0.0
  %1097 = vmatpush1.msra.mxu0 0.0
  %1098 = vmatprep.subr.mxu0 0.0
  %1099 = vmatpush1.msra.mxu0 0.0
  %1100 = vmatprep.subr.mxu0 0.0
  %1101 = vmatpush1.msra.mxu0 0.0
  %1102 = vmatprep.subr.mxu0 0.0
  %1103 = vmatpush1.msra.mxu0 0.0
  %1104 = vmatprep.subr.mxu0 0.0
  %1105 = vmatpush1.msra.mxu0 0.0
  %1106 = vmatprep.subr.mxu0 0.0
  %1107 = vmatpush1.msra.mxu0 0.0
  %1108 = vmatprep.subr.mxu0 0.0
  %1109 = vmatpush1.msra.mxu0 0.0
  %1110 = vmatprep.subr.mxu0 0.0
  %1111 = vmatpush1.msra.mxu0 0.0
  %1112 = vmatprep.subr.mxu0 0.0
  %1113 = vmatpush1.msra.mxu0 0.0
  %1114 = vmatprep.subr.mxu0 0.0
  %1115 = vmatpush1.msra.mxu0 0.0
  %1116 = vmatprep.subr.mxu0 0.0
  %1117 = vmatpush1.msra.mxu0 0.0
  %1118 = vmatprep.subr.mxu0 0.0
  %1119 = vmatpush1.msra.mxu0 0.0
  %1120 = vmatprep.subr.mxu0 0.0
  %1121 = vmatpush1.msra.mxu0 0.0
  %1122 = vmatprep.subr.mxu0 0.0
  %1123 = vmatpush1.msra.mxu0 0.0
  %1124 = vmatprep.subr.mxu0 0.0
  %1125 = vmatpush1.msra.mxu0 0.0
  %1126 = vmatprep.subr.mxu0 0.0
  %1127 = vmatpush1.msra.mxu0 0.0
  %1128 = vmatprep.subr.mxu0 0.0
  %1129 = vmatpush1.msra.mxu0 0.0
  %1130 = vmatprep.subr.mxu0 0.0
  %1131 = vmatpush1.msra.mxu0 0.0
  %1132 = vmatprep.subr.mxu0 0.0
  %1133 = vmatpush1.msra.mxu0 0.0
  %1134 = vmatprep.subr.mxu0 0.0
  %1135 = vmatpush1.msra.mxu0 0.0
  %1136 = vmatprep.subr.mxu0 0.0
  %1137 = vmatpush1.msra.mxu0 0.0
  %1138 = vmatprep.subr.mxu0 0.0
  %1139 = vmatpush1.msra.mxu0 0.0
  %1140 = vmatprep.subr.mxu0 0.0
  %1141 = vmatpush1.msra.mxu0 0.0
  %1142 = vmatprep.subr.mxu0 0.0
  %1143 = vmatpush1.msra.mxu0 0.0
  %1144 = vmatprep.subr.mxu0 0.0
  %1145 = vmatpush1.msra.mxu0 0.0
  %1146 = vmatprep.subr.mxu0 0.0
  %1147 = vmatpush1.msra.mxu0 0.0
  %1148 = vmatprep.subr.mxu0 0.0
  %1149 = vmatpush1.msra.mxu0 0.0
  %1150 = vmatprep.subr.mxu0 0.0
  %1151 = vmatpush1.msra.mxu0 0.0
  %1152 = vmatprep.subr.mxu0 0.0
  %1153 = vmatpush1.msra.mxu0 0.0
  %1154 = vmatprep.subr.mxu0 0.0
  %1155 = vmatpush1.msra.mxu0 0.0
  %1156 = vmatprep.subr.mxu0 0.0
  %1157 = vmatpush1.msra.mxu0 0.0
  %1158 = vmatprep.mubr.f32.mxu0 0.0
  %1159 = vmatmul.mubr.f32.gmra.mrb[0].mxu0 %v1080
  %v1160 = vpop.f32.mrb[0].mxu0
  %v1161 = vadd.f32 0.0, %v1160
  %v1162 = vpop.f32.mrb[0].mxu0
  %v1163 = vadd.f32 0.0, %v1162
  %1164 = vdwg.mxu0
  %1165 = vmatprep.subr.mxu0 %v1088
  %1166 = vmatpush1.msra.mxu0 %v1086
  %1167 = vmatprep.subr.mxu0 0.0
  %1168 = vmatpush1.msra.mxu0 0.0
  %1169 = vmatprep.subr.mxu0 0.0
  %1170 = vmatpush1.msra.mxu0 0.0
  %1171 = vmatprep.subr.mxu0 0.0
  %1172 = vmatpush1.msra.mxu0 0.0
  %1173 = vmatprep.subr.mxu0 0.0
  %1174 = vmatpush1.msra.mxu0 0.0
  %1175 = vmatprep.subr.mxu0 0.0
  %1176 = vmatpush1.msra.mxu0 0.0
  %1177 = vmatprep.subr.mxu0 0.0
  %1178 = vmatpush1.msra.mxu0 0.0
  %1179 = vmatprep.subr.mxu0 0.0
  %1180 = vmatpush1.msra.mxu0 0.0
  %1181 = vmatprep.subr.mxu0 0.0
  %1182 = vmatpush1.msra.mxu0 0.0
  %1183 = vmatprep.subr.mxu0 0.0
  %1184 = vmatpush1.msra.mxu0 0.0
  %1185 = vmatprep.subr.mxu0 0.0
  %1186 = vmatpush1.msra.mxu0 0.0
  %1187 = vmatprep.subr.mxu0 0.0
  %1188 = vmatpush1.msra.mxu0 0.0
  %1189 = vmatprep.subr.mxu0 0.0
  %1190 = vmatpush1.msra.mxu0 0.0
  %1191 = vmatprep.subr.mxu0 0.0
  %1192 = vmatpush1.msra.mxu0 0.0
  %1193 = vmatprep.subr.mxu0 0.0
  %1194 = vmatpush1.msra.mxu0 0.0
  %1195 = vmatprep.subr.mxu0 0.0
  %1196 = vmatpush1.msra.mxu0 0.0
  %1197 = vmatprep.subr.mxu0 0.0
  %1198 = vmatpush1.msra.mxu0 0.0
  %1199 = vmatprep.subr.mxu0 0.0
  %1200 = vmatpush1.msra.mxu0 0.0
  %1201 = vmatprep.subr.mxu0 0.0
  %1202 = vmatpush1.msra.mxu0 0.0
  %1203 = vmatprep.subr.mxu0 0.0
  %1204 = vmatpush1.msra.mxu0 0.0
  %1205 = vmatprep.subr.mxu0 0.0
  %1206 = vmatpush1.msra.mxu0 0.0
  %1207 = vmatprep.subr.mxu0 0.0
  %1208 = vmatpush1.msra.mxu0 0.0
  %1209 = vmatprep.subr.mxu0 0.0
  %1210 = vmatpush1.msra.mxu0 0.0
  %1211 = vmatprep.subr.mxu0 0.0
  %1212 = vmatpush1.msra.mxu0 0.0
  %1213 = vmatprep.subr.mxu0 0.0
  %1214 = vmatpush1.msra.mxu0 0.0
  %1215 = vmatprep.subr.mxu0 0.0
  %1216 = vmatpush1.msra.mxu0 0.0
  %1217 = vmatprep.subr.mxu0 0.0
  %1218 = vmatpush1.msra.mxu0 0.0
  %1219 = vmatprep.subr.mxu0 0.0
  %1220 = vmatpush1.msra.mxu0 0.0
  %1221 = vmatprep.subr.mxu0 0.0
  %1222 = vmatpush1.msra.mxu0 0.0
  %1223 = vmatprep.subr.mxu0 0.0
  %1224 = vmatpush1.msra.mxu0 0.0
  %1225 = vmatprep.subr.mxu0 0.0
  %1226 = vmatpush1.msra.mxu0 0.0
  %1227 = vmatprep.subr.mxu0 0.0
  %1228 = vmatpush1.msra.mxu0 0.0
  %1229 = vmatprep.mubr.f32.mxu0 0.0
  %1230 = vmatmul.mubr.f32.gmra.mrb[0].mxu0 %v1080
  %v1231 = vpop.f32.mrb[0].mxu0
  %v1232 = vadd.f32 0.0, %v1231
  %v1233 = vpop.f32.mrb[0].mxu0
  %v1234 = vadd.f32 0.0, %v1233
  %1235 = vdwg.mxu0
  %1236 = vmatprep.subr.mxu0 %v1092
  %1237 = vmatpush1.msra.mxu0 %v1090
  %1238 = vmatprep.subr.mxu0 0.0
  %1239 = vmatpush1.msra.mxu0 0.0
  %1240 = vmatprep.subr.mxu0 0.0
  %1241 = vmatpush1.msra.mxu0 0.0
  %1242 = vmatprep.subr.mxu0 0.0
  %1243 = vmatpush1.msra.mxu0 0.0
  %1244 = vmatprep.subr.mxu0 0.0
  %1245 = vmatpush1.msra.mxu0 0.0
  %1246 = vmatprep.subr.mxu0 0.0
  %1247 = vmatpush1.msra.mxu0 0.0
  %1248 = vmatprep.subr.mxu0 0.0
  %1249 = vmatpush1.msra.mxu0 0.0
  %1250 = vmatprep.subr.mxu0 0.0
  %1251 = vmatpush1.msra.mxu0 0.0
  %1252 = vmatprep.subr.mxu0 0.0
  %1253 = vmatpush1.msra.mxu0 0.0
  %1254 = vmatprep.subr.mxu0 0.0
  %1255 = vmatpush1.msra.mxu0 0.0
  %1256 = vmatprep.subr.mxu0 0.0
  %1257 = vmatpush1.msra.mxu0 0.0
  %1258 = vmatprep.subr.mxu0 0.0
  %1259 = vmatpush1.msra.mxu0 0.0
  %1260 = vmatprep.subr.mxu0 0.0
  %1261 = vmatpush1.msra.mxu0 0.0
  %1262 = vmatprep.subr.mxu0 0.0
  %1263 = vmatpush1.msra.mxu0 0.0
  %1264 = vmatprep.subr.mxu0 0.0
  %1265 = vmatpush1.msra.mxu0 0.0
  %1266 = vmatprep.subr.mxu0 0.0
  %1267 = vmatpush1.msra.mxu0 0.0
  %1268 = vmatprep.subr.mxu0 0.0
  %1269 = vmatpush1.msra.mxu0 0.0
  %1270 = vmatprep.subr.mxu0 0.0
  %1271 = vmatpush1.msra.mxu0 0.0
  %1272 = vmatprep.subr.mxu0 0.0
  %1273 = vmatpush1.msra.mxu0 0.0
  %1274 = vmatprep.subr.mxu0 0.0
  %1275 = vmatpush1.msra.mxu0 0.0
  %1276 = vmatprep.subr.mxu0 0.0
  %1277 = vmatpush1.msra.mxu0 0.0
  %1278 = vmatprep.subr.mxu0 0.0
  %1279 = vmatpush1.msra.mxu0 0.0
  %1280 = vmatprep.subr.mxu0 0.0
  %1281 = vmatpush1.msra.mxu0 0.0
  %1282 = vmatprep.subr.mxu0 0.0
  %1283 = vmatpush1.msra.mxu0 0.0
  %1284 = vmatprep.subr.mxu0 0.0
  %1285 = vmatpush1.msra.mxu0 0.0
  %1286 = vmatprep.subr.mxu0 0.0
  %1287 = vmatpush1.msra.mxu0 0.0
  %1288 = vmatprep.subr.mxu0 0.0
  %1289 = vmatpush1.msra.mxu0 0.0
  %1290 = vmatprep.subr.mxu0 0.0
  %1291 = vmatpush1.msra.mxu0 0.0
  %1292 = vmatprep.subr.mxu0 0.0
  %1293 = vmatpush1.msra.mxu0 0.0
  %1294 = vmatprep.subr.mxu0 0.0
  %1295 = vmatpush1.msra.mxu0 0.0
  %1296 = vmatprep.subr.mxu0 0.0
  %1297 = vmatpush1.msra.mxu0 0.0
  %1298 = vmatprep.subr.mxu0 0.0
  %1299 = vmatpush1.msra.mxu0 0.0
  %1300 = vmatprep.mubr.f32.mxu0 0.0
  %1301 = vmatmul.mubr.f32.gmra.mrb[0].mxu0 %v1080
  %v1302 = vpop.f32.mrb[0].mxu0
  %v1303 = vadd.f32 0.0, %v1302
  %v1304 = vpop.f32.mrb[0].mxu0
  %v1305 = vadd.f32 0.0, %v1304
  %1306 = vdwg.mxu0
  %v1307 = vadd.f32 %v1071, %v1161
  %v1308 = vadd.f32 %v1072, %v1163
  %v1309 = vadd.f32 %v1073, %v1232
  %v1310 = vadd.f32 %v1074, %v1234
  %v1311 = vadd.f32 %v1075, %v1303
  %v1312 = vadd.f32 %v1076, %v1305
  %1313 = vrot.lane.b32.xlu0 %v29, 127
  %v1314 = vpop.permute.xlu0 %1313
  %1315 = vrot.lane.b32.xlu0 %v36, 127
  %v1316 = vpop.permute.xlu0 %1315
  %1317 = vrot.lane.b32.xlu0 %v30, 127
  %v1318 = vpop.permute.xlu0 %1317
  %1319 = vrot.lane.b32.xlu0 %v37, 127
  %v1320 = vpop.permute.xlu0 %1319
  %1321 = vrot.lane.b32.xlu0 %v31, 127
  %v1322 = vpop.permute.xlu0 %1321
  %1323 = vrot.lane.b32.xlu0 %v38, 127
  %v1324 = vpop.permute.xlu0 %1323
  %vm1325 = vcmp.lt.s32.totalorder %v55, 127
  %v1326 = vsel %vm1325, %v1322, %v1324
  %v1327 = vsel %vm1325, %v1320, %v1322
  %v1328 = vsel %vm1325, %v1318, %v1320
  %v1329 = vsel %vm1325, %v1316, %v1318
  %v1330 = vsel %vm1325, %v1314, %v1316
  %v1331 = vsel %vm1325, %v1324, %v1314
  %s1332 = scalar_lea.vmem %s2, 20
  %v1333 = vld [vmem:[%s1332] sm:$0xf]
  %v1335 = vsel %vm85, %v1333, 0
  %v1338 = vsel %vm89, %v1330, 0
  %v1341 = vsel %vm89, %v1329, 0
  %v1344 = vsel %vm89, %v1328, 0
  %v1347 = vsel %vm89, %v1327, 0
  %v1350 = vsel %vm89, %v1326, 0
  %v1353 = vsel %vm89, %v1331, 0
  %1355 = vmatprep.subr.mxu0 %v1341
  %1356 = vmatpush1.msra.mxu0 %v1338
  %1357 = vmatprep.subr.mxu0 0.0
  %1358 = vmatpush1.msra.mxu0 0.0
  %1359 = vmatprep.subr.mxu0 0.0
  %1360 = vmatpush1.msra.mxu0 0.0
  %1361 = vmatprep.subr.mxu0 0.0
  %1362 = vmatpush1.msra.mxu0 0.0
  %1363 = vmatprep.subr.mxu0 0.0
  %1364 = vmatpush1.msra.mxu0 0.0
  %1365 = vmatprep.subr.mxu0 0.0
  %1366 = vmatpush1.msra.mxu0 0.0
  %1367 = vmatprep.subr.mxu0 0.0
  %1368 = vmatpush1.msra.mxu0 0.0
  %1369 = vmatprep.subr.mxu0 0.0
  %1370 = vmatpush1.msra.mxu0 0.0
  %1371 = vmatprep.subr.mxu0 0.0
  %1372 = vmatpush1.msra.mxu0 0.0
  %1373 = vmatprep.subr.mxu0 0.0
  %1374 = vmatpush1.msra.mxu0 0.0
  %1375 = vmatprep.subr.mxu0 0.0
  %1376 = vmatpush1.msra.mxu0 0.0
  %1377 = vmatprep.subr.mxu0 0.0
  %1378 = vmatpush1.msra.mxu0 0.0
  %1379 = vmatprep.subr.mxu0 0.0
  %1380 = vmatpush1.msra.mxu0 0.0
  %1381 = vmatprep.subr.mxu0 0.0
  %1382 = vmatpush1.msra.mxu0 0.0
  %1383 = vmatprep.subr.mxu0 0.0
  %1384 = vmatpush1.msra.mxu0 0.0
  %1385 = vmatprep.subr.mxu0 0.0
  %1386 = vmatpush1.msra.mxu0 0.0
  %1387 = vmatprep.subr.mxu0 0.0
  %1388 = vmatpush1.msra.mxu0 0.0
  %1389 = vmatprep.subr.mxu0 0.0
  %1390 = vmatpush1.msra.mxu0 0.0
  %1391 = vmatprep.subr.mxu0 0.0
  %1392 = vmatpush1.msra.mxu0 0.0
  %1393 = vmatprep.subr.mxu0 0.0
  %1394 = vmatpush1.msra.mxu0 0.0
  %1395 = vmatprep.subr.mxu0 0.0
  %1396 = vmatpush1.msra.mxu0 0.0
  %1397 = vmatprep.subr.mxu0 0.0
  %1398 = vmatpush1.msra.mxu0 0.0
  %1399 = vmatprep.subr.mxu0 0.0
  %1400 = vmatpush1.msra.mxu0 0.0
  %1401 = vmatprep.subr.mxu0 0.0
  %1402 = vmatpush1.msra.mxu0 0.0
  %1403 = vmatprep.subr.mxu0 0.0
  %1404 = vmatpush1.msra.mxu0 0.0
  %1405 = vmatprep.subr.mxu0 0.0
  %1406 = vmatpush1.msra.mxu0 0.0
  %1407 = vmatprep.subr.mxu0 0.0
  %1408 = vmatpush1.msra.mxu0 0.0
  %1409 = vmatprep.subr.mxu0 0.0
  %1410 = vmatpush1.msra.mxu0 0.0
  %1411 = vmatprep.subr.mxu0 0.0
  %1412 = vmatpush1.msra.mxu0 0.0
  %1413 = vmatprep.subr.mxu0 0.0
  %1414 = vmatpush1.msra.mxu0 0.0
  %1415 = vmatprep.subr.mxu0 0.0
  %1416 = vmatpush1.msra.mxu0 0.0
  %1417 = vmatprep.subr.mxu0 0.0
  %1418 = vmatpush1.msra.mxu0 0.0
  %1419 = vmatprep.mubr.f32.mxu0 0.0
  %1420 = vmatmul.mubr.f32.gmra.mrb[0].mxu0 %v1335
  %v1421 = vpop.f32.mrb[0].mxu0
  %v1422 = vadd.f32 0.0, %v1421
  %v1423 = vpop.f32.mrb[0].mxu0
  %v1424 = vadd.f32 0.0, %v1423
  %1425 = vdwg.mxu0
  %1426 = vmatprep.subr.mxu0 %v1347
  %1427 = vmatpush1.msra.mxu0 %v1344
  %1428 = vmatprep.subr.mxu0 0.0
  %1429 = vmatpush1.msra.mxu0 0.0
  %1430 = vmatprep.subr.mxu0 0.0
  %1431 = vmatpush1.msra.mxu0 0.0
  %1432 = vmatprep.subr.mxu0 0.0
  %1433 = vmatpush1.msra.mxu0 0.0
  %1434 = vmatprep.subr.mxu0 0.0
  %1435 = vmatpush1.msra.mxu0 0.0
  %1436 = vmatprep.subr.mxu0 0.0
  %1437 = vmatpush1.msra.mxu0 0.0
  %1438 = vmatprep.subr.mxu0 0.0
  %1439 = vmatpush1.msra.mxu0 0.0
  %1440 = vmatprep.subr.mxu0 0.0
  %1441 = vmatpush1.msra.mxu0 0.0
  %1442 = vmatprep.subr.mxu0 0.0
  %1443 = vmatpush1.msra.mxu0 0.0
  %1444 = vmatprep.subr.mxu0 0.0
  %1445 = vmatpush1.msra.mxu0 0.0
  %1446 = vmatprep.subr.mxu0 0.0
  %1447 = vmatpush1.msra.mxu0 0.0
  %1448 = vmatprep.subr.mxu0 0.0
  %1449 = vmatpush1.msra.mxu0 0.0
  %1450 = vmatprep.subr.mxu0 0.0
  %1451 = vmatpush1.msra.mxu0 0.0
  %1452 = vmatprep.subr.mxu0 0.0
  %1453 = vmatpush1.msra.mxu0 0.0
  %1454 = vmatprep.subr.mxu0 0.0
  %1455 = vmatpush1.msra.mxu0 0.0
  %1456 = vmatprep.subr.mxu0 0.0
  %1457 = vmatpush1.msra.mxu0 0.0
  %1458 = vmatprep.subr.mxu0 0.0
  %1459 = vmatpush1.msra.mxu0 0.0
  %1460 = vmatprep.subr.mxu0 0.0
  %1461 = vmatpush1.msra.mxu0 0.0
  %1462 = vmatprep.subr.mxu0 0.0
  %1463 = vmatpush1.msra.mxu0 0.0
  %1464 = vmatprep.subr.mxu0 0.0
  %1465 = vmatpush1.msra.mxu0 0.0
  %1466 = vmatprep.subr.mxu0 0.0
  %1467 = vmatpush1.msra.mxu0 0.0
  %1468 = vmatprep.subr.mxu0 0.0
  %1469 = vmatpush1.msra.mxu0 0.0
  %1470 = vmatprep.subr.mxu0 0.0
  %1471 = vmatpush1.msra.mxu0 0.0
  %1472 = vmatprep.subr.mxu0 0.0
  %1473 = vmatpush1.msra.mxu0 0.0
  %1474 = vmatprep.subr.mxu0 0.0
  %1475 = vmatpush1.msra.mxu0 0.0
  %1476 = vmatprep.subr.mxu0 0.0
  %1477 = vmatpush1.msra.mxu0 0.0
  %1478 = vmatprep.subr.mxu0 0.0
  %1479 = vmatpush1.msra.mxu0 0.0
  %1480 = vmatprep.subr.mxu0 0.0
  %1481 = vmatpush1.msra.mxu0 0.0
  %1482 = vmatprep.subr.mxu0 0.0
  %1483 = vmatpush1.msra.mxu0 0.0
  %1484 = vmatprep.subr.mxu0 0.0
  %1485 = vmatpush1.msra.mxu0 0.0
  %1486 = vmatprep.subr.mxu0 0.0
  %1487 = vmatpush1.msra.mxu0 0.0
  %1488 = vmatprep.subr.mxu0 0.0
  %1489 = vmatpush1.msra.mxu0 0.0
  %1490 = vmatprep.mubr.f32.mxu0 0.0
  %1491 = vmatmul.mubr.f32.gmra.mrb[0].mxu0 %v1335
  %v1492 = vpop.f32.mrb[0].mxu0
  %v1493 = vadd.f32 0.0, %v1492
  %v1494 = vpop.f32.mrb[0].mxu0
  %v1495 = vadd.f32 0.0, %v1494
  %1496 = vdwg.mxu0
  %1497 = vmatprep.subr.mxu0 %v1353
  %1498 = vmatpush1.msra.mxu0 %v1350
  %1499 = vmatprep.subr.mxu0 0.0
  %1500 = vmatpush1.msra.mxu0 0.0
  %1501 = vmatprep.subr.mxu0 0.0
  %1502 = vmatpush1.msra.mxu0 0.0
  %1503 = vmatprep.subr.mxu0 0.0
  %1504 = vmatpush1.msra.mxu0 0.0
  %1505 = vmatprep.subr.mxu0 0.0
  %1506 = vmatpush1.msra.mxu0 0.0
  %1507 = vmatprep.subr.mxu0 0.0
  %1508 = vmatpush1.msra.mxu0 0.0
  %1509 = vmatprep.subr.mxu0 0.0
  %1510 = vmatpush1.msra.mxu0 0.0
  %1511 = vmatprep.subr.mxu0 0.0
  %1512 = vmatpush1.msra.mxu0 0.0
  %1513 = vmatprep.subr.mxu0 0.0
  %1514 = vmatpush1.msra.mxu0 0.0
  %1515 = vmatprep.subr.mxu0 0.0
  %1516 = vmatpush1.msra.mxu0 0.0
  %1517 = vmatprep.subr.mxu0 0.0
  %1518 = vmatpush1.msra.mxu0 0.0
  %1519 = vmatprep.subr.mxu0 0.0
  %1520 = vmatpush1.msra.mxu0 0.0
  %1521 = vmatprep.subr.mxu0 0.0
  %1522 = vmatpush1.msra.mxu0 0.0
  %1523 = vmatprep.subr.mxu0 0.0
  %1524 = vmatpush1.msra.mxu0 0.0
  %1525 = vmatprep.subr.mxu0 0.0
  %1526 = vmatpush1.msra.mxu0 0.0
  %1527 = vmatprep.subr.mxu0 0.0
  %1528 = vmatpush1.msra.mxu0 0.0
  %1529 = vmatprep.subr.mxu0 0.0
  %1530 = vmatpush1.msra.mxu0 0.0
  %1531 = vmatprep.subr.mxu0 0.0
  %1532 = vmatpush1.msra.mxu0 0.0
  %1533 = vmatprep.subr.mxu0 0.0
  %1534 = vmatpush1.msra.mxu0 0.0
  %1535 = vmatprep.subr.mxu0 0.0
  %1536 = vmatpush1.msra.mxu0 0.0
  %1537 = vmatprep.subr.mxu0 0.0
  %1538 = vmatpush1.msra.mxu0 0.0
  %1539 = vmatprep.subr.mxu0 0.0
  %1540 = vmatpush1.msra.mxu0 0.0
  %1541 = vmatprep.subr.mxu0 0.0
  %1542 = vmatpush1.msra.mxu0 0.0
  %1543 = vmatprep.subr.mxu0 0.0
  %1544 = vmatpush1.msra.mxu0 0.0
  %1545 = vmatprep.subr.mxu0 0.0
  %1546 = vmatpush1.msra.mxu0 0.0
  %1547 = vmatprep.subr.mxu0 0.0
  %1548 = vmatpush1.msra.mxu0 0.0
  %1549 = vmatprep.subr.mxu0 0.0
  %1550 = vmatpush1.msra.mxu0 0.0
  %1551 = vmatprep.subr.mxu0 0.0
  %1552 = vmatpush1.msra.mxu0 0.0
  %1553 = vmatprep.subr.mxu0 0.0
  %1554 = vmatpush1.msra.mxu0 0.0
  %1555 = vmatprep.subr.mxu0 0.0
  %1556 = vmatpush1.msra.mxu0 0.0
  %1557 = vmatprep.subr.mxu0 0.0
  %1558 = vmatpush1.msra.mxu0 0.0
  %1559 = vmatprep.subr.mxu0 0.0
  %1560 = vmatpush1.msra.mxu0 0.0
  %1561 = vmatprep.mubr.f32.mxu0 0.0
  %1562 = vmatmul.mubr.f32.gmra.mrb[0].mxu0 %v1335
  %v1563 = vpop.f32.mrb[0].mxu0
  %v1564 = vadd.f32 0.0, %v1563
  %v1565 = vpop.f32.mrb[0].mxu0
  %v1566 = vadd.f32 0.0, %v1565
  %1567 = vdwg.mxu0
  %v1568 = vadd.f32 %v1307, %v1422
  %v1569 = vadd.f32 %v1308, %v1424
  %v1570 = vadd.f32 %v1309, %v1493
  %v1571 = vadd.f32 %v1310, %v1495
  %v1572 = vadd.f32 %v1311, %v1564
  %v1573 = vadd.f32 %v1312, %v1566
  %1574 = vrot.lane.b32.xlu0 %v29, 111
  %v1575 = vpop.permute.xlu0 %1574
  %1576 = vrot.lane.b32.xlu0 %v36, 111
  %v1577 = vpop.permute.xlu0 %1576
  %1578 = vrot.lane.b32.xlu0 %v30, 111
  %v1579 = vpop.permute.xlu0 %1578
  %1580 = vrot.lane.b32.xlu0 %v37, 111
  %v1581 = vpop.permute.xlu0 %1580
  %1582 = vrot.lane.b32.xlu0 %v31, 111
  %v1583 = vpop.permute.xlu0 %1582
  %1584 = vrot.lane.b32.xlu0 %v38, 111
  %v1585 = vpop.permute.xlu0 %1584
  %vm1586 = vcmp.lt.s32.totalorder %v55, 111
  %v1587 = vsel %vm1586, %v1583, %v1585
  %v1588 = vsel %vm1586, %v1581, %v1583
  %v1589 = vsel %vm1586, %v1579, %v1581
  %v1590 = vsel %vm1586, %v1577, %v1579
  %v1591 = vsel %vm1586, %v1575, %v1577
  %v1592 = vsel %vm1586, %v1585, %v1575
  %s1593 = scalar_lea.vmem %s2, 24
  %v1594 = vld [vmem:[%s1593] sm:$0xf]
  %v1596 = vsel %vm85, %v1594, 0
  %v1599 = vsel %vm89, %v1591, 0
  %v1602 = vsel %vm89, %v1590, 0
  %v1605 = vsel %vm89, %v1589, 0
  %v1608 = vsel %vm89, %v1588, 0
  %v1611 = vsel %vm89, %v1587, 0
  %v1614 = vsel %vm89, %v1592, 0
  %1616 = vmatprep.subr.mxu0 %v1602
  %1617 = vmatpush1.msra.mxu0 %v1599
  %1618 = vmatprep.subr.mxu0 0.0
  %1619 = vmatpush1.msra.mxu0 0.0
  %1620 = vmatprep.subr.mxu0 0.0
  %1621 = vmatpush1.msra.mxu0 0.0
  %1622 = vmatprep.subr.mxu0 0.0
  %1623 = vmatpush1.msra.mxu0 0.0
  %1624 = vmatprep.subr.mxu0 0.0
  %1625 = vmatpush1.msra.mxu0 0.0
  %1626 = vmatprep.subr.mxu0 0.0
  %1627 = vmatpush1.msra.mxu0 0.0
  %1628 = vmatprep.subr.mxu0 0.0
  %1629 = vmatpush1.msra.mxu0 0.0
  %1630 = vmatprep.subr.mxu0 0.0
  %1631 = vmatpush1.msra.mxu0 0.0
  %1632 = vmatprep.subr.mxu0 0.0
  %1633 = vmatpush1.msra.mxu0 0.0
  %1634 = vmatprep.subr.mxu0 0.0
  %1635 = vmatpush1.msra.mxu0 0.0
  %1636 = vmatprep.subr.mxu0 0.0
  %1637 = vmatpush1.msra.mxu0 0.0
  %1638 = vmatprep.subr.mxu0 0.0
  %1639 = vmatpush1.msra.mxu0 0.0
  %1640 = vmatprep.subr.mxu0 0.0
  %1641 = vmatpush1.msra.mxu0 0.0
  %1642 = vmatprep.subr.mxu0 0.0
  %1643 = vmatpush1.msra.mxu0 0.0
  %1644 = vmatprep.subr.mxu0 0.0
  %1645 = vmatpush1.msra.mxu0 0.0
  %1646 = vmatprep.subr.mxu0 0.0
  %1647 = vmatpush1.msra.mxu0 0.0
  %1648 = vmatprep.subr.mxu0 0.0
  %1649 = vmatpush1.msra.mxu0 0.0
  %1650 = vmatprep.subr.mxu0 0.0
  %1651 = vmatpush1.msra.mxu0 0.0
  %1652 = vmatprep.subr.mxu0 0.0
  %1653 = vmatpush1.msra.mxu0 0.0
  %1654 = vmatprep.subr.mxu0 0.0
  %1655 = vmatpush1.msra.mxu0 0.0
  %1656 = vmatprep.subr.mxu0 0.0
  %1657 = vmatpush1.msra.mxu0 0.0
  %1658 = vmatprep.subr.mxu0 0.0
  %1659 = vmatpush1.msra.mxu0 0.0
  %1660 = vmatprep.subr.mxu0 0.0
  %1661 = vmatpush1.msra.mxu0 0.0
  %1662 = vmatprep.subr.mxu0 0.0
  %1663 = vmatpush1.msra.mxu0 0.0
  %1664 = vmatprep.subr.mxu0 0.0
  %1665 = vmatpush1.msra.mxu0 0.0
  %1666 = vmatprep.subr.mxu0 0.0
  %1667 = vmatpush1.msra.mxu0 0.0
  %1668 = vmatprep.subr.mxu0 0.0
  %1669 = vmatpush1.msra.mxu0 0.0
  %1670 = vmatprep.subr.mxu0 0.0
  %1671 = vmatpush1.msra.mxu0 0.0
  %1672 = vmatprep.subr.mxu0 0.0
  %1673 = vmatpush1.msra.mxu0 0.0
  %1674 = vmatprep.subr.mxu0 0.0
  %1675 = vmatpush1.msra.mxu0 0.0
  %1676 = vmatprep.subr.mxu0 0.0
  %1677 = vmatpush1.msra.mxu0 0.0
  %1678 = vmatprep.subr.mxu0 0.0
  %1679 = vmatpush1.msra.mxu0 0.0
  %1680 = vmatprep.mubr.f32.mxu0 0.0
  %1681 = vmatmul.mubr.f32.gmra.mrb[0].mxu0 %v1596
  %v1682 = vpop.f32.mrb[0].mxu0
  %v1683 = vadd.f32 0.0, %v1682
  %v1684 = vpop.f32.mrb[0].mxu0
  %v1685 = vadd.f32 0.0, %v1684
  %1686 = vdwg.mxu0
  %1687 = vmatprep.subr.mxu0 %v1608
  %1688 = vmatpush1.msra.mxu0 %v1605
  %1689 = vmatprep.subr.mxu0 0.0
  %1690 = vmatpush1.msra.mxu0 0.0
  %1691 = vmatprep.subr.mxu0 0.0
  %1692 = vmatpush1.msra.mxu0 0.0
  %1693 = vmatprep.subr.mxu0 0.0
  %1694 = vmatpush1.msra.mxu0 0.0
  %1695 = vmatprep.subr.mxu0 0.0
  %1696 = vmatpush1.msra.mxu0 0.0
  %1697 = vmatprep.subr.mxu0 0.0
  %1698 = vmatpush1.msra.mxu0 0.0
  %1699 = vmatprep.subr.mxu0 0.0
  %1700 = vmatpush1.msra.mxu0 0.0
  %1701 = vmatprep.subr.mxu0 0.0
  %1702 = vmatpush1.msra.mxu0 0.0
  %1703 = vmatprep.subr.mxu0 0.0
  %1704 = vmatpush1.msra.mxu0 0.0
  %1705 = vmatprep.subr.mxu0 0.0
  %1706 = vmatpush1.msra.mxu0 0.0
  %1707 = vmatprep.subr.mxu0 0.0
  %1708 = vmatpush1.msra.mxu0 0.0
  %1709 = vmatprep.subr.mxu0 0.0
  %1710 = vmatpush1.msra.mxu0 0.0
  %1711 = vmatprep.subr.mxu0 0.0
  %1712 = vmatpush1.msra.mxu0 0.0
  %1713 = vmatprep.subr.mxu0 0.0
  %1714 = vmatpush1.msra.mxu0 0.0
  %1715 = vmatprep.subr.mxu0 0.0
  %1716 = vmatpush1.msra.mxu0 0.0
  %1717 = vmatprep.subr.mxu0 0.0
  %1718 = vmatpush1.msra.mxu0 0.0
  %1719 = vmatprep.subr.mxu0 0.0
  %1720 = vmatpush1.msra.mxu0 0.0
  %1721 = vmatprep.subr.mxu0 0.0
  %1722 = vmatpush1.msra.mxu0 0.0
  %1723 = vmatprep.subr.mxu0 0.0
  %1724 = vmatpush1.msra.mxu0 0.0
  %1725 = vmatprep.subr.mxu0 0.0
  %1726 = vmatpush1.msra.mxu0 0.0
  %1727 = vmatprep.subr.mxu0 0.0
  %1728 = vmatpush1.msra.mxu0 0.0
  %1729 = vmatprep.subr.mxu0 0.0
  %1730 = vmatpush1.msra.mxu0 0.0
  %1731 = vmatprep.subr.mxu0 0.0
  %1732 = vmatpush1.msra.mxu0 0.0
  %1733 = vmatprep.subr.mxu0 0.0
  %1734 = vmatpush1.msra.mxu0 0.0
  %1735 = vmatprep.subr.mxu0 0.0
  %1736 = vmatpush1.msra.mxu0 0.0
  %1737 = vmatprep.subr.mxu0 0.0
  %1738 = vmatpush1.msra.mxu0 0.0
  %1739 = vmatprep.subr.mxu0 0.0
  %1740 = vmatpush1.msra.mxu0 0.0
  %1741 = vmatprep.subr.mxu0 0.0
  %1742 = vmatpush1.msra.mxu0 0.0
  %1743 = vmatprep.subr.mxu0 0.0
  %1744 = vmatpush1.msra.mxu0 0.0
  %1745 = vmatprep.subr.mxu0 0.0
  %1746 = vmatpush1.msra.mxu0 0.0
  %1747 = vmatprep.subr.mxu0 0.0
  %1748 = vmatpush1.msra.mxu0 0.0
  %1749 = vmatprep.subr.mxu0 0.0
  %1750 = vmatpush1.msra.mxu0 0.0
  %1751 = vmatprep.mubr.f32.mxu0 0.0
  %1752 = vmatmul.mubr.f32.gmra.mrb[0].mxu0 %v1596
  %v1753 = vpop.f32.mrb[0].mxu0
  %v1754 = vadd.f32 0.0, %v1753
  %v1755 = vpop.f32.mrb[0].mxu0
  %v1756 = vadd.f32 0.0, %v1755
  %1757 = vdwg.mxu0
  %1758 = vmatprep.subr.mxu0 %v1614
  %1759 = vmatpush1.msra.mxu0 %v1611
  %1760 = vmatprep.subr.mxu0 0.0
  %1761 = vmatpush1.msra.mxu0 0.0
  %1762 = vmatprep.subr.mxu0 0.0
  %1763 = vmatpush1.msra.mxu0 0.0
  %1764 = vmatprep.subr.mxu0 0.0
  %1765 = vmatpush1.msra.mxu0 0.0
  %1766 = vmatprep.subr.mxu0 0.0
  %1767 = vmatpush1.msra.mxu0 0.0
  %1768 = vmatprep.subr.mxu0 0.0
  %1769 = vmatpush1.msra.mxu0 0.0
  %1770 = vmatprep.subr.mxu0 0.0
  %1771 = vmatpush1.msra.mxu0 0.0
  %1772 = vmatprep.subr.mxu0 0.0
  %1773 = vmatpush1.msra.mxu0 0.0
  %1774 = vmatprep.subr.mxu0 0.0
  %1775 = vmatpush1.msra.mxu0 0.0
  %1776 = vmatprep.subr.mxu0 0.0
  %1777 = vmatpush1.msra.mxu0 0.0
  %1778 = vmatprep.subr.mxu0 0.0
  %1779 = vmatpush1.msra.mxu0 0.0
  %1780 = vmatprep.subr.mxu0 0.0
  %1781 = vmatpush1.msra.mxu0 0.0
  %1782 = vmatprep.subr.mxu0 0.0
  %1783 = vmatpush1.msra.mxu0 0.0
  %1784 = vmatprep.subr.mxu0 0.0
  %1785 = vmatpush1.msra.mxu0 0.0
  %1786 = vmatprep.subr.mxu0 0.0
  %1787 = vmatpush1.msra.mxu0 0.0
  %1788 = vmatprep.subr.mxu0 0.0
  %1789 = vmatpush1.msra.mxu0 0.0
  %1790 = vmatprep.subr.mxu0 0.0
  %1791 = vmatpush1.msra.mxu0 0.0
  %1792 = vmatprep.subr.mxu0 0.0
  %1793 = vmatpush1.msra.mxu0 0.0
  %1794 = vmatprep.subr.mxu0 0.0
  %1795 = vmatpush1.msra.mxu0 0.0
  %1796 = vmatprep.subr.mxu0 0.0
  %1797 = vmatpush1.msra.mxu0 0.0
  %1798 = vmatprep.subr.mxu0 0.0
  %1799 = vmatpush1.msra.mxu0 0.0
  %1800 = vmatprep.subr.mxu0 0.0
  %1801 = vmatpush1.msra.mxu0 0.0
  %1802 = vmatprep.subr.mxu0 0.0
  %1803 = vmatpush1.msra.mxu0 0.0
  %1804 = vmatprep.subr.mxu0 0.0
  %1805 = vmatpush1.msra.mxu0 0.0
  %1806 = vmatprep.subr.mxu0 0.0
  %1807 = vmatpush1.msra.mxu0 0.0
  %1808 = vmatprep.subr.mxu0 0.0
  %1809 = vmatpush1.msra.mxu0 0.0
  %1810 = vmatprep.subr.mxu0 0.0
  %1811 = vmatpush1.msra.mxu0 0.0
  %1812 = vmatprep.subr.mxu0 0.0
  %1813 = vmatpush1.msra.mxu0 0.0
  %1814 = vmatprep.subr.mxu0 0.0
  %1815 = vmatpush1.msra.mxu0 0.0
  %1816 = vmatprep.subr.mxu0 0.0
  %1817 = vmatpush1.msra.mxu0 0.0
  %1818 = vmatprep.subr.mxu0 0.0
  %1819 = vmatpush1.msra.mxu0 0.0
  %1820 = vmatprep.subr.mxu0 0.0
  %1821 = vmatpush1.msra.mxu0 0.0
  %1822 = vmatprep.mubr.f32.mxu0 0.0
  %1823 = vmatmul.mubr.f32.gmra.mrb[0].mxu0 %v1596
  %v1824 = vpop.f32.mrb[0].mxu0
  %v1825 = vadd.f32 0.0, %v1824
  %v1826 = vpop.f32.mrb[0].mxu0
  %v1827 = vadd.f32 0.0, %v1826
  %1828 = vdwg.mxu0
  %v1829 = vadd.f32 %v1568, %v1683
  %v1830 = vadd.f32 %v1569, %v1685
  %v1831 = vadd.f32 %v1570, %v1754
  %v1832 = vadd.f32 %v1571, %v1756
  %v1833 = vadd.f32 %v1572, %v1825
  %v1834 = vadd.f32 %v1573, %v1827
  %1835 = vrot.lane.b32.xlu0 %v29, 110
  %v1836 = vpop.permute.xlu0 %1835
  %1837 = vrot.lane.b32.xlu0 %v36, 110
  %v1838 = vpop.permute.xlu0 %1837
  %1839 = vrot.lane.b32.xlu0 %v30, 110
  %v1840 = vpop.permute.xlu0 %1839
  %1841 = vrot.lane.b32.xlu0 %v37, 110
  %v1842 = vpop.permute.xlu0 %1841
  %1843 = vrot.lane.b32.xlu0 %v31, 110
  %v1844 = vpop.permute.xlu0 %1843
  %1845 = vrot.lane.b32.xlu0 %v38, 110
  %v1846 = vpop.permute.xlu0 %1845
  %vm1847 = vcmp.lt.s32.totalorder %v55, 110
  %v1848 = vsel %vm1847, %v1844, %v1846
  %v1849 = vsel %vm1847, %v1842, %v1844
  %v1850 = vsel %vm1847, %v1840, %v1842
  %v1851 = vsel %vm1847, %v1838, %v1840
  %v1852 = vsel %vm1847, %v1836, %v1838
  %v1853 = vsel %vm1847, %v1846, %v1836
  %s1854 = scalar_lea.vmem %s2, 28
  %v1855 = vld [vmem:[%s1854] sm:$0xf]
  %v1857 = vsel %vm85, %v1855, 0
  %v1860 = vsel %vm89, %v1852, 0
  %v1863 = vsel %vm89, %v1851, 0
  %v1866 = vsel %vm89, %v1850, 0
  %v1869 = vsel %vm89, %v1849, 0
  %v1872 = vsel %vm89, %v1848, 0
  %v1875 = vsel %vm89, %v1853, 0
  %1877 = vmatprep.subr.mxu0 %v1863
  %1878 = vmatpush1.msra.mxu0 %v1860
  %1879 = vmatprep.subr.mxu0 0.0
  %1880 = vmatpush1.msra.mxu0 0.0
  %1881 = vmatprep.subr.mxu0 0.0
  %1882 = vmatpush1.msra.mxu0 0.0
  %1883 = vmatprep.subr.mxu0 0.0
  %1884 = vmatpush1.msra.mxu0 0.0
  %1885 = vmatprep.subr.mxu0 0.0
  %1886 = vmatpush1.msra.mxu0 0.0
  %1887 = vmatprep.subr.mxu0 0.0
  %1888 = vmatpush1.msra.mxu0 0.0
  %1889 = vmatprep.subr.mxu0 0.0
  %1890 = vmatpush1.msra.mxu0 0.0
  %1891 = vmatprep.subr.mxu0 0.0
  %1892 = vmatpush1.msra.mxu0 0.0
  %1893 = vmatprep.subr.mxu0 0.0
  %1894 = vmatpush1.msra.mxu0 0.0
  %1895 = vmatprep.subr.mxu0 0.0
  %1896 = vmatpush1.msra.mxu0 0.0
  %1897 = vmatprep.subr.mxu0 0.0
  %1898 = vmatpush1.msra.mxu0 0.0
  %1899 = vmatprep.subr.mxu0 0.0
  %1900 = vmatpush1.msra.mxu0 0.0
  %1901 = vmatprep.subr.mxu0 0.0
  %1902 = vmatpush1.msra.mxu0 0.0
  %1903 = vmatprep.subr.mxu0 0.0
  %1904 = vmatpush1.msra.mxu0 0.0
  %1905 = vmatprep.subr.mxu0 0.0
  %1906 = vmatpush1.msra.mxu0 0.0
  %1907 = vmatprep.subr.mxu0 0.0
  %1908 = vmatpush1.msra.mxu0 0.0
  %1909 = vmatprep.subr.mxu0 0.0
  %1910 = vmatpush1.msra.mxu0 0.0
  %1911 = vmatprep.subr.mxu0 0.0
  %1912 = vmatpush1.msra.mxu0 0.0
  %1913 = vmatprep.subr.mxu0 0.0
  %1914 = vmatpush1.msra.mxu0 0.0
  %1915 = vmatprep.subr.mxu0 0.0
  %1916 = vmatpush1.msra.mxu0 0.0
  %1917 = vmatprep.subr.mxu0 0.0
  %1918 = vmatpush1.msra.mxu0 0.0
  %1919 = vmatprep.subr.mxu0 0.0
  %1920 = vmatpush1.msra.mxu0 0.0
  %1921 = vmatprep.subr.mxu0 0.0
  %1922 = vmatpush1.msra.mxu0 0.0
  %1923 = vmatprep.subr.mxu0 0.0
  %1924 = vmatpush1.msra.mxu0 0.0
  %1925 = vmatprep.subr.mxu0 0.0
  %1926 = vmatpush1.msra.mxu0 0.0
  %1927 = vmatprep.subr.mxu0 0.0
  %1928 = vmatpush1.msra.mxu0 0.0
  %1929 = vmatprep.subr.mxu0 0.0
  %1930 = vmatpush1.msra.mxu0 0.0
  %1931 = vmatprep.subr.mxu0 0.0
  %1932 = vmatpush1.msra.mxu0 0.0
  %1933 = vmatprep.subr.mxu0 0.0
  %1934 = vmatpush1.msra.mxu0 0.0
  %1935 = vmatprep.subr.mxu0 0.0
  %1936 = vmatpush1.msra.mxu0 0.0
  %1937 = vmatprep.subr.mxu0 0.0
  %1938 = vmatpush1.msra.mxu0 0.0
  %1939 = vmatprep.subr.mxu0 0.0
  %1940 = vmatpush1.msra.mxu0 0.0
  %1941 = vmatprep.mubr.f32.mxu0 0.0
  %1942 = vmatmul.mubr.f32.gmra.mrb[0].mxu0 %v1857
  %v1943 = vpop.f32.mrb[0].mxu0
  %v1944 = vadd.f32 0.0, %v1943
  %v1945 = vpop.f32.mrb[0].mxu0
  %v1946 = vadd.f32 0.0, %v1945
  %1947 = vdwg.mxu0
  %1948 = vmatprep.subr.mxu0 %v1869
  %1949 = vmatpush1.msra.mxu0 %v1866
  %1950 = vmatprep.subr.mxu0 0.0
  %1951 = vmatpush1.msra.mxu0 0.0
  %1952 = vmatprep.subr.mxu0 0.0
  %1953 = vmatpush1.msra.mxu0 0.0
  %1954 = vmatprep.subr.mxu0 0.0
  %1955 = vmatpush1.msra.mxu0 0.0
  %1956 = vmatprep.subr.mxu0 0.0
  %1957 = vmatpush1.msra.mxu0 0.0
  %1958 = vmatprep.subr.mxu0 0.0
  %1959 = vmatpush1.msra.mxu0 0.0
  %1960 = vmatprep.subr.mxu0 0.0
  %1961 = vmatpush1.msra.mxu0 0.0
  %1962 = vmatprep.subr.mxu0 0.0
  %1963 = vmatpush1.msra.mxu0 0.0
  %1964 = vmatprep.subr.mxu0 0.0
  %1965 = vmatpush1.msra.mxu0 0.0
  %1966 = vmatprep.subr.mxu0 0.0
  %1967 = vmatpush1.msra.mxu0 0.0
  %1968 = vmatprep.subr.mxu0 0.0
  %1969 = vmatpush1.msra.mxu0 0.0
  %1970 = vmatprep.subr.mxu0 0.0
  %1971 = vmatpush1.msra.mxu0 0.0
  %1972 = vmatprep.subr.mxu0 0.0
  %1973 = vmatpush1.msra.mxu0 0.0
  %1974 = vmatprep.subr.mxu0 0.0
  %1975 = vmatpush1.msra.mxu0 0.0
  %1976 = vmatprep.subr.mxu0 0.0
  %1977 = vmatpush1.msra.mxu0 0.0
  %1978 = vmatprep.subr.mxu0 0.0
  %1979 = vmatpush1.msra.mxu0 0.0
  %1980 = vmatprep.subr.mxu0 0.0
  %1981 = vmatpush1.msra.mxu0 0.0
  %1982 = vmatprep.subr.mxu0 0.0
  %1983 = vmatpush1.msra.mxu0 0.0
  %1984 = vmatprep.subr.mxu0 0.0
  %1985 = vmatpush1.msra.mxu0 0.0
  %1986 = vmatprep.subr.mxu0 0.0
  %1987 = vmatpush1.msra.mxu0 0.0
  %1988 = vmatprep.subr.mxu0 0.0
  %1989 = vmatpush1.msra.mxu0 0.0
  %1990 = vmatprep.subr.mxu0 0.0
  %1991 = vmatpush1.msra.mxu0 0.0
  %1992 = vmatprep.subr.mxu0 0.0
  %1993 = vmatpush1.msra.mxu0 0.0
  %1994 = vmatprep.subr.mxu0 0.0
  %1995 = vmatpush1.msra.mxu0 0.0
  %1996 = vmatprep.subr.mxu0 0.0
  %1997 = vmatpush1.msra.mxu0 0.0
  %1998 = vmatprep.subr.mxu0 0.0
  %1999 = vmatpush1.msra.mxu0 0.0
  %2000 = vmatprep.subr.mxu0 0.0
  %2001 = vmatpush1.msra.mxu0 0.0
  %2002 = vmatprep.subr.mxu0 0.0
  %2003 = vmatpush1.msra.mxu0 0.0
  %2004 = vmatprep.subr.mxu0 0.0
  %2005 = vmatpush1.msra.mxu0 0.0
  %2006 = vmatprep.subr.mxu0 0.0
  %2007 = vmatpush1.msra.mxu0 0.0
  %2008 = vmatprep.subr.mxu0 0.0
  %2009 = vmatpush1.msra.mxu0 0.0
  %2010 = vmatprep.subr.mxu0 0.0
  %2011 = vmatpush1.msra.mxu0 0.0
  %2012 = vmatprep.mubr.f32.mxu0 0.0
  %2013 = vmatmul.mubr.f32.gmra.mrb[0].mxu0 %v1857
  %v2014 = vpop.f32.mrb[0].mxu0
  %v2015 = vadd.f32 0.0, %v2014
  %v2016 = vpop.f32.mrb[0].mxu0
  %v2017 = vadd.f32 0.0, %v2016
  %2018 = vdwg.mxu0
  %2019 = vmatprep.subr.mxu0 %v1875
  %2020 = vmatpush1.msra.mxu0 %v1872
  %2021 = vmatprep.subr.mxu0 0.0
  %2022 = vmatpush1.msra.mxu0 0.0
  %2023 = vmatprep.subr.mxu0 0.0
  %2024 = vmatpush1.msra.mxu0 0.0
  %2025 = vmatprep.subr.mxu0 0.0
  %2026 = vmatpush1.msra.mxu0 0.0
  %2027 = vmatprep.subr.mxu0 0.0
  %2028 = vmatpush1.msra.mxu0 0.0
  %2029 = vmatprep.subr.mxu0 0.0
  %2030 = vmatpush1.msra.mxu0 0.0
  %2031 = vmatprep.subr.mxu0 0.0
  %2032 = vmatpush1.msra.mxu0 0.0
  %2033 = vmatprep.subr.mxu0 0.0
  %2034 = vmatpush1.msra.mxu0 0.0
  %2035 = vmatprep.subr.mxu0 0.0
  %2036 = vmatpush1.msra.mxu0 0.0
  %2037 = vmatprep.subr.mxu0 0.0
  %2038 = vmatpush1.msra.mxu0 0.0
  %2039 = vmatprep.subr.mxu0 0.0
  %2040 = vmatpush1.msra.mxu0 0.0
  %2041 = vmatprep.subr.mxu0 0.0
  %2042 = vmatpush1.msra.mxu0 0.0
  %2043 = vmatprep.subr.mxu0 0.0
  %2044 = vmatpush1.msra.mxu0 0.0
  %2045 = vmatprep.subr.mxu0 0.0
  %2046 = vmatpush1.msra.mxu0 0.0
  %2047 = vmatprep.subr.mxu0 0.0
  %2048 = vmatpush1.msra.mxu0 0.0
  %2049 = vmatprep.subr.mxu0 0.0
  %2050 = vmatpush1.msra.mxu0 0.0
  %2051 = vmatprep.subr.mxu0 0.0
  %2052 = vmatpush1.msra.mxu0 0.0
  %2053 = vmatprep.subr.mxu0 0.0
  %2054 = vmatpush1.msra.mxu0 0.0
  %2055 = vmatprep.subr.mxu0 0.0
  %2056 = vmatpush1.msra.mxu0 0.0
  %2057 = vmatprep.subr.mxu0 0.0
  %2058 = vmatpush1.msra.mxu0 0.0
  %2059 = vmatprep.subr.mxu0 0.0
  %2060 = vmatpush1.msra.mxu0 0.0
  %2061 = vmatprep.subr.mxu0 0.0
  %2062 = vmatpush1.msra.mxu0 0.0
  %2063 = vmatprep.subr.mxu0 0.0
  %2064 = vmatpush1.msra.mxu0 0.0
  %2065 = vmatprep.subr.mxu0 0.0
  %2066 = vmatpush1.msra.mxu0 0.0
  %2067 = vmatprep.subr.mxu0 0.0
  %2068 = vmatpush1.msra.mxu0 0.0
  %2069 = vmatprep.subr.mxu0 0.0
  %2070 = vmatpush1.msra.mxu0 0.0
  %2071 = vmatprep.subr.mxu0 0.0
  %2072 = vmatpush1.msra.mxu0 0.0
  %2073 = vmatprep.subr.mxu0 0.0
  %2074 = vmatpush1.msra.mxu0 0.0
  %2075 = vmatprep.subr.mxu0 0.0
  %2076 = vmatpush1.msra.mxu0 0.0
  %2077 = vmatprep.subr.mxu0 0.0
  %2078 = vmatpush1.msra.mxu0 0.0
  %2079 = vmatprep.subr.mxu0 0.0
  %2080 = vmatpush1.msra.mxu0 0.0
  %2081 = vmatprep.subr.mxu0 0.0
  %2082 = vmatpush1.msra.mxu0 0.0
  %2083 = vmatprep.mubr.f32.mxu0 0.0
  %2084 = vmatmul.mubr.f32.gmra.mrb[0].mxu0 %v1857
  %v2085 = vpop.f32.mrb[0].mxu0
  %v2086 = vadd.f32 0.0, %v2085
  %v2087 = vpop.f32.mrb[0].mxu0
  %v2088 = vadd.f32 0.0, %v2087
  %2089 = vdwg.mxu0
  %v2090 = vadd.f32 %v1829, %v1944
  %v2091 = vadd.f32 %v1830, %v1946
  %v2092 = vadd.f32 %v1831, %v2015
  %v2093 = vadd.f32 %v1832, %v2017
  %v2094 = vadd.f32 %v1833, %v2086
  %v2095 = vadd.f32 %v1834, %v2088
  %2096 = vrot.lane.b32.xlu0 %v29, 109
  %v2097 = vpop.permute.xlu0 %2096
  %2098 = vrot.lane.b32.xlu0 %v36, 109
  %v2099 = vpop.permute.xlu0 %2098
  %2100 = vrot.lane.b32.xlu0 %v30, 109
  %v2101 = vpop.permute.xlu0 %2100
  %2102 = vrot.lane.b32.xlu0 %v37, 109
  %v2103 = vpop.permute.xlu0 %2102
  %2104 = vrot.lane.b32.xlu0 %v31, 109
  %v2105 = vpop.permute.xlu0 %2104
  %2106 = vrot.lane.b32.xlu0 %v38, 109
  %v2107 = vpop.permute.xlu0 %2106
  %vm2108 = vcmp.lt.s32.totalorder %v55, 109
  %v2109 = vsel %vm2108, %v2105, %v2107
  %v2110 = vsel %vm2108, %v2103, %v2105
  %v2111 = vsel %vm2108, %v2101, %v2103
  %v2112 = vsel %vm2108, %v2099, %v2101
  %v2113 = vsel %vm2108, %v2097, %v2099
  %v2114 = vsel %vm2108, %v2107, %v2097
  %s2115 = scalar_lea.vmem %s2, 32
  %v2116 = vld [vmem:[%s2115] sm:$0xf]
  %v2118 = vsel %vm85, %v2116, 0
  %v2121 = vsel %vm89, %v2113, 0
  %v2124 = vsel %vm89, %v2112, 0
  %v2127 = vsel %vm89, %v2111, 0
  %v2130 = vsel %vm89, %v2110, 0
  %v2133 = vsel %vm89, %v2109, 0
  %v2136 = vsel %vm89, %v2114, 0
  %2138 = vmatprep.subr.mxu0 %v2124
  %2139 = vmatpush1.msra.mxu0 %v2121
  %2140 = vmatprep.subr.mxu0 0.0
  %2141 = vmatpush1.msra.mxu0 0.0
  %2142 = vmatprep.subr.mxu0 0.0
  %2143 = vmatpush1.msra.mxu0 0.0
  %2144 = vmatprep.subr.mxu0 0.0
  %2145 = vmatpush1.msra.mxu0 0.0
  %2146 = vmatprep.subr.mxu0 0.0
  %2147 = vmatpush1.msra.mxu0 0.0
  %2148 = vmatprep.subr.mxu0 0.0
  %2149 = vmatpush1.msra.mxu0 0.0
  %2150 = vmatprep.subr.mxu0 0.0
  %2151 = vmatpush1.msra.mxu0 0.0
  %2152 = vmatprep.subr.mxu0 0.0
  %2153 = vmatpush1.msra.mxu0 0.0
  %2154 = vmatprep.subr.mxu0 0.0
  %2155 = vmatpush1.msra.mxu0 0.0
  %2156 = vmatprep.subr.mxu0 0.0
  %2157 = vmatpush1.msra.mxu0 0.0
  %2158 = vmatprep.subr.mxu0 0.0
  %2159 = vmatpush1.msra.mxu0 0.0
  %2160 = vmatprep.subr.mxu0 0.0
  %2161 = vmatpush1.msra.mxu0 0.0
  %2162 = vmatprep.subr.mxu0 0.0
  %2163 = vmatpush1.msra.mxu0 0.0
  %2164 = vmatprep.subr.mxu0 0.0
  %2165 = vmatpush1.msra.mxu0 0.0
  %2166 = vmatprep.subr.mxu0 0.0
  %2167 = vmatpush1.msra.mxu0 0.0
  %2168 = vmatprep.subr.mxu0 0.0
  %2169 = vmatpush1.msra.mxu0 0.0
  %2170 = vmatprep.subr.mxu0 0.0
  %2171 = vmatpush1.msra.mxu0 0.0
  %2172 = vmatprep.subr.mxu0 0.0
  %2173 = vmatpush1.msra.mxu0 0.0
  %2174 = vmatprep.subr.mxu0 0.0
  %2175 = vmatpush1.msra.mxu0 0.0
  %2176 = vmatprep.subr.mxu0 0.0
  %2177 = vmatpush1.msra.mxu0 0.0
  %2178 = vmatprep.subr.mxu0 0.0
  %2179 = vmatpush1.msra.mxu0 0.0
  %2180 = vmatprep.subr.mxu0 0.0
  %2181 = vmatpush1.msra.mxu0 0.0
  %2182 = vmatprep.subr.mxu0 0.0
  %2183 = vmatpush1.msra.mxu0 0.0
  %2184 = vmatprep.subr.mxu0 0.0
  %2185 = vmatpush1.msra.mxu0 0.0
  %2186 = vmatprep.subr.mxu0 0.0
  %2187 = vmatpush1.msra.mxu0 0.0
  %2188 = vmatprep.subr.mxu0 0.0
  %2189 = vmatpush1.msra.mxu0 0.0
  %2190 = vmatprep.subr.mxu0 0.0
  %2191 = vmatpush1.msra.mxu0 0.0
  %2192 = vmatprep.subr.mxu0 0.0
  %2193 = vmatpush1.msra.mxu0 0.0
  %2194 = vmatprep.subr.mxu0 0.0
  %2195 = vmatpush1.msra.mxu0 0.0
  %2196 = vmatprep.subr.mxu0 0.0
  %2197 = vmatpush1.msra.mxu0 0.0
  %2198 = vmatprep.subr.mxu0 0.0
  %2199 = vmatpush1.msra.mxu0 0.0
  %2200 = vmatprep.subr.mxu0 0.0
  %2201 = vmatpush1.msra.mxu0 0.0
  %2202 = vmatprep.mubr.f32.mxu0 0.0
  %2203 = vmatmul.mubr.f32.gmra.mrb[0].mxu0 %v2118
  %v2204 = vpop.f32.mrb[0].mxu0
  %v2205 = vadd.f32 0.0, %v2204
  %v2206 = vpop.f32.mrb[0].mxu0
  %v2207 = vadd.f32 0.0, %v2206
  %2208 = vdwg.mxu0
  %2209 = vmatprep.subr.mxu0 %v2130
  %2210 = vmatpush1.msra.mxu0 %v2127
  %2211 = vmatprep.subr.mxu0 0.0
  %2212 = vmatpush1.msra.mxu0 0.0
  %2213 = vmatprep.subr.mxu0 0.0
  %2214 = vmatpush1.msra.mxu0 0.0
  %2215 = vmatprep.subr.mxu0 0.0
  %2216 = vmatpush1.msra.mxu0 0.0
  %2217 = vmatprep.subr.mxu0 0.0
  %2218 = vmatpush1.msra.mxu0 0.0
  %2219 = vmatprep.subr.mxu0 0.0
  %2220 = vmatpush1.msra.mxu0 0.0
  %2221 = vmatprep.subr.mxu0 0.0
  %2222 = vmatpush1.msra.mxu0 0.0
  %2223 = vmatprep.subr.mxu0 0.0
  %2224 = vmatpush1.msra.mxu0 0.0
  %2225 = vmatprep.subr.mxu0 0.0
  %2226 = vmatpush1.msra.mxu0 0.0
  %2227 = vmatprep.subr.mxu0 0.0
  %2228 = vmatpush1.msra.mxu0 0.0
  %2229 = vmatprep.subr.mxu0 0.0
  %2230 = vmatpush1.msra.mxu0 0.0
  %2231 = vmatprep.subr.mxu0 0.0
  %2232 = vmatpush1.msra.mxu0 0.0
  %2233 = vmatprep.subr.mxu0 0.0
  %2234 = vmatpush1.msra.mxu0 0.0
  %2235 = vmatprep.subr.mxu0 0.0
  %2236 = vmatpush1.msra.mxu0 0.0
  %2237 = vmatprep.subr.mxu0 0.0
  %2238 = vmatpush1.msra.mxu0 0.0
  %2239 = vmatprep.subr.mxu0 0.0
  %2240 = vmatpush1.msra.mxu0 0.0
  %2241 = vmatprep.subr.mxu0 0.0
  %2242 = vmatpush1.msra.mxu0 0.0
  %2243 = vmatprep.subr.mxu0 0.0
  %2244 = vmatpush1.msra.mxu0 0.0
  %2245 = vmatprep.subr.mxu0 0.0
  %2246 = vmatpush1.msra.mxu0 0.0
  %2247 = vmatprep.subr.mxu0 0.0
  %2248 = vmatpush1.msra.mxu0 0.0
  %2249 = vmatprep.subr.mxu0 0.0
  %2250 = vmatpush1.msra.mxu0 0.0
  %2251 = vmatprep.subr.mxu0 0.0
  %2252 = vmatpush1.msra.mxu0 0.0
  %2253 = vmatprep.subr.mxu0 0.0
  %2254 = vmatpush1.msra.mxu0 0.0
  %2255 = vmatprep.subr.mxu0 0.0
  %2256 = vmatpush1.msra.mxu0 0.0
  %2257 = vmatprep.subr.mxu0 0.0
  %2258 = vmatpush1.msra.mxu0 0.0
  %2259 = vmatprep.subr.mxu0 0.0
  %2260 = vmatpush1.msra.mxu0 0.0
  %2261 = vmatprep.subr.mxu0 0.0
  %2262 = vmatpush1.msra.mxu0 0.0
  %2263 = vmatprep.subr.mxu0 0.0
  %2264 = vmatpush1.msra.mxu0 0.0
  %2265 = vmatprep.subr.mxu0 0.0
  %2266 = vmatpush1.msra.mxu0 0.0
  %2267 = vmatprep.subr.mxu0 0.0
  %2268 = vmatpush1.msra.mxu0 0.0
  %2269 = vmatprep.subr.mxu0 0.0
  %2270 = vmatpush1.msra.mxu0 0.0
  %2271 = vmatprep.subr.mxu0 0.0
  %2272 = vmatpush1.msra.mxu0 0.0
  %2273 = vmatprep.mubr.f32.mxu0 0.0
  %2274 = vmatmul.mubr.f32.gmra.mrb[0].mxu0 %v2118
  %v2275 = vpop.f32.mrb[0].mxu0
  %v2276 = vadd.f32 0.0, %v2275
  %v2277 = vpop.f32.mrb[0].mxu0
  %v2278 = vadd.f32 0.0, %v2277
  %2279 = vdwg.mxu0
  %2280 = vmatprep.subr.mxu0 %v2136
  %2281 = vmatpush1.msra.mxu0 %v2133
  %2282 = vmatprep.subr.mxu0 0.0
  %2283 = vmatpush1.msra.mxu0 0.0
  %2284 = vmatprep.subr.mxu0 0.0
  %2285 = vmatpush1.msra.mxu0 0.0
  %2286 = vmatprep.subr.mxu0 0.0
  %2287 = vmatpush1.msra.mxu0 0.0
  %2288 = vmatprep.subr.mxu0 0.0
  %2289 = vmatpush1.msra.mxu0 0.0
  %2290 = vmatprep.subr.mxu0 0.0
  %2291 = vmatpush1.msra.mxu0 0.0
  %2292 = vmatprep.subr.mxu0 0.0
  %2293 = vmatpush1.msra.mxu0 0.0
  %2294 = vmatprep.subr.mxu0 0.0
  %2295 = vmatpush1.msra.mxu0 0.0
  %2296 = vmatprep.subr.mxu0 0.0
  %2297 = vmatpush1.msra.mxu0 0.0
  %2298 = vmatprep.subr.mxu0 0.0
  %2299 = vmatpush1.msra.mxu0 0.0
  %2300 = vmatprep.subr.mxu0 0.0
  %2301 = vmatpush1.msra.mxu0 0.0
  %2302 = vmatprep.subr.mxu0 0.0
  %2303 = vmatpush1.msra.mxu0 0.0
  %2304 = vmatprep.subr.mxu0 0.0
  %2305 = vmatpush1.msra.mxu0 0.0
  %2306 = vmatprep.subr.mxu0 0.0
  %2307 = vmatpush1.msra.mxu0 0.0
  %2308 = vmatprep.subr.mxu0 0.0
  %2309 = vmatpush1.msra.mxu0 0.0
  %2310 = vmatprep.subr.mxu0 0.0
  %2311 = vmatpush1.msra.mxu0 0.0
  %2312 = vmatprep.subr.mxu0 0.0
  %2313 = vmatpush1.msra.mxu0 0.0
  %2314 = vmatprep.subr.mxu0 0.0
  %2315 = vmatpush1.msra.mxu0 0.0
  %2316 = vmatprep.subr.mxu0 0.0
  %2317 = vmatpush1.msra.mxu0 0.0
  %2318 = vmatprep.subr.mxu0 0.0
  %2319 = vmatpush1.msra.mxu0 0.0
  %2320 = vmatprep.subr.mxu0 0.0
  %2321 = vmatpush1.msra.mxu0 0.0
  %2322 = vmatprep.subr.mxu0 0.0
  %2323 = vmatpush1.msra.mxu0 0.0
  %2324 = vmatprep.subr.mxu0 0.0
  %2325 = vmatpush1.msra.mxu0 0.0
  %2326 = vmatprep.subr.mxu0 0.0
  %2327 = vmatpush1.msra.mxu0 0.0
  %2328 = vmatprep.subr.mxu0 0.0
  %2329 = vmatpush1.msra.mxu0 0.0
  %2330 = vmatprep.subr.mxu0 0.0
  %2331 = vmatpush1.msra.mxu0 0.0
  %2332 = vmatprep.subr.mxu0 0.0
  %2333 = vmatpush1.msra.mxu0 0.0
  %2334 = vmatprep.subr.mxu0 0.0
  %2335 = vmatpush1.msra.mxu0 0.0
  %2336 = vmatprep.subr.mxu0 0.0
  %2337 = vmatpush1.msra.mxu0 0.0
  %2338 = vmatprep.subr.mxu0 0.0
  %2339 = vmatpush1.msra.mxu0 0.0
  %2340 = vmatprep.subr.mxu0 0.0
  %2341 = vmatpush1.msra.mxu0 0.0
  %2342 = vmatprep.subr.mxu0 0.0
  %2343 = vmatpush1.msra.mxu0 0.0
  %2344 = vmatprep.mubr.f32.mxu0 0.0
  %2345 = vmatmul.mubr.f32.gmra.mrb[0].mxu0 %v2118
  %v2346 = vpop.f32.mrb[0].mxu0
  %v2347 = vadd.f32 0.0, %v2346
  %v2348 = vpop.f32.mrb[0].mxu0
  %v2349 = vadd.f32 0.0, %v2348
  %2350 = vdwg.mxu0
  %v2351 = vadd.f32 %v2090, %v2205
  %v2352 = vadd.f32 %v2091, %v2207
  %v2353 = vadd.f32 %v2092, %v2276
  %v2354 = vadd.f32 %v2093, %v2278
  %v2355 = vadd.f32 %v2094, %v2347
  %v2356 = vadd.f32 %v2095, %v2349
  %v2358 = vlaneseq
  %v2359 = vshrl.u32 %v2358, 7
  %v2360 = vsub.s32 0, %v2359
  %v2361 = vrot.slane %v32, %v2360
  %v2362 = vlaneseq
  %v2363 = vshrl.u32 %v2362, 7
  %v2364 = vsub.s32 1, %v2363
  %v2365 = vrot.slane %v32, %v2364
  %v2366 = vlaneseq
  %v2367 = vshrl.u32 %v2366, 7
  %v2368 = vsub.s32 2, %v2367
  %v2369 = vrot.slane %v32, %v2368
  %v2370 = vlaneseq
  %v2371 = vshrl.u32 %v2370, 7
  %v2372 = vsub.s32 3, %v2371
  %v2373 = vrot.slane %v32, %v2372
  %v2374 = vlaneseq
  %v2375 = vshrl.u32 %v2374, 7
  %v2376 = vsub.s32 4, %v2375
  %v2377 = vrot.slane %v32, %v2376
  %v2378 = vlaneseq
  %v2379 = vshrl.u32 %v2378, 7
  %v2380 = vsub.s32 5, %v2379
  %v2381 = vrot.slane %v32, %v2380
  %v2388 = vmul.f32 %v2351, %v2361
  %v2389 = vmul.f32 %v2352, %v2365
  %v2390 = vmul.f32 %v2353, %v2369
  %v2391 = vmul.f32 %v2354, %v2373
  %v2392 = vmul.f32 %v2355, %v2377
  %v2393 = vmul.f32 %v2356, %v2381
  %v2394 = vsel %vm89, %v2388, 0.0
  %v2395 = vsel %vm89, %v2389, 0.0
  %v2396 = vadd.f32 %v2394, %v2395
  %v2397 = vsel %vm89, %v2390, 0.0
  %v2398 = vadd.f32 %v2396, %v2397
  %v2399 = vsel %vm89, %v2391, 0.0
  %v2400 = vadd.f32 %v2398, %v2399
  %v2401 = vsel %vm89, %v2392, 0.0
  %v2402 = vadd.f32 %v2400, %v2401
  %v2403 = vsel %vm89, %v2393, 0.0
  %v2404 = vadd.f32 %v2402, %v2403
  %2405 = vadd.xlane.f32.xlu0 %v2404
  %v2406 = vpop.xlane.xlu0 %2405
  %v2407 = vmul.f32 %v2406, 0.001953125
  %v2408 = vsub.f32 %v2351, %v2407
  %v2409 = vsub.f32 %v2352, %v2407
  %v2410 = vsub.f32 %v2353, %v2407
  %v2411 = vsub.f32 %v2354, %v2407
  %v2412 = vsub.f32 %v2355, %v2407
  %v2413 = vsub.f32 %v2356, %v2407
  %v2414 = vmul.f32 %v2408, %v2408
  %v2415 = vmul.f32 %v2409, %v2409
  %v2416 = vmul.f32 %v2410, %v2410
  %v2417 = vmul.f32 %v2411, %v2411
  %v2418 = vmul.f32 %v2412, %v2412
  %v2419 = vmul.f32 %v2413, %v2413
  %v2420 = vmul.f32 %v2414, %v2361
  %v2421 = vmul.f32 %v2415, %v2365
  %v2422 = vmul.f32 %v2416, %v2369
  %v2423 = vmul.f32 %v2417, %v2373
  %v2424 = vmul.f32 %v2418, %v2377
  %v2425 = vmul.f32 %v2419, %v2381
  %v2426 = vsel %vm89, %v2420, 0.0
  %v2427 = vsel %vm89, %v2421, 0.0
  %v2428 = vadd.f32 %v2426, %v2427
  %v2429 = vsel %vm89, %v2422, 0.0
  %v2430 = vadd.f32 %v2428, %v2429
  %v2431 = vsel %vm89, %v2423, 0.0
  %v2432 = vadd.f32 %v2430, %v2431
  %v2433 = vsel %vm89, %v2424, 0.0
  %v2434 = vadd.f32 %v2432, %v2433
  %v2435 = vsel %vm89, %v2425, 0.0
  %v2436 = vadd.f32 %v2434, %v2435
  %2437 = vadd.xlane.f32.xlu0 %v2436
  %v2438 = vpop.xlane.xlu0 %2437
  %v2439 = vmul.f32 %v2438, 0.001953125
  %v2440 = vadd.f32 %v2439, 1e-05
  %v2441 = vrsqrt.pop %v2440
  %v2442 = vmul.f32 %v2408, %v2441
  %v2443 = vmul.f32 %v2409, %v2441
  %v2444 = vmul.f32 %v2410, %v2441
  %v2445 = vmul.f32 %v2411, %v2441
  %v2446 = vmul.f32 %v2412, %v2441
  %v2447 = vmul.f32 %v2413, %v2441
  %v2448 = vld [vmem:[%s3] sm:$0xf]
  %2450 = vset.pattern.permute.xlu0 0
  %2451 = vperm.xlu0 %2450, %v2448
  %v2452 = vpop.permute.xlu0 %2451
  %v2454 = vmul.f32 %v2442, %v2452
  %v2455 = vmul.f32 %v2443, %v2452
  %v2456 = vmul.f32 %v2444, %v2452
  %v2457 = vmul.f32 %v2445, %v2452
  %v2458 = vmul.f32 %v2446, %v2452
  %v2459 = vmul.f32 %v2447, %v2452
  %v2460 = vld [vmem:[%s4] sm:$0xf]
  %2462 = vset.pattern.permute.xlu0 0
  %2463 = vperm.xlu0 %2462, %v2460
  %v2464 = vpop.permute.xlu0 %2463
  %v2466 = vadd.f32 %v2454, %v2464
  %v2467 = vadd.f32 %v2455, %v2464
  %v2468 = vadd.f32 %v2456, %v2464
  %v2469 = vadd.f32 %v2457, %v2464
  %v2470 = vadd.f32 %v2458, %v2464
  %v2471 = vadd.f32 %v2459, %v2464
  %v2472 = vmax.f32 %v2466, 0.0
  %v2473 = vmax.f32 %v2467, 0.0
  %v2474 = vmax.f32 %v2468, 0.0
  %v2475 = vmax.f32 %v2469, 0.0
  %v2476 = vmax.f32 %v2470, 0.0
  %v2477 = vmax.f32 %v2471, 0.0
  %v2478 = vmul.f32 %v2472, %v2361
  %v2479 = vmul.f32 %v2473, %v2365
  %v2480 = vmul.f32 %v2474, %v2369
  %v2481 = vmul.f32 %v2475, %v2373
  %v2482 = vmul.f32 %v2476, %v2377
  %v2483 = vmul.f32 %v2477, %v2381
  %2484 = vrot.lane.b32.xlu0 %v2478, 19
  %v2485 = vpop.permute.xlu0 %2484
  %2486 = vrot.lane.b32.xlu0 %v2479, 19
  %v2487 = vpop.permute.xlu0 %2486
  %2488 = vrot.lane.b32.xlu0 %v2480, 19
  %v2489 = vpop.permute.xlu0 %2488
  %2490 = vrot.lane.b32.xlu0 %v2481, 19
  %v2491 = vpop.permute.xlu0 %2490
  %2492 = vrot.lane.b32.xlu0 %v2482, 19
  %v2493 = vpop.permute.xlu0 %2492
  %2494 = vrot.lane.b32.xlu0 %v2483, 19
  %v2495 = vpop.permute.xlu0 %2494
  %v2496 = vsel %vm56, %v2493, %v2495
  %v2497 = vsel %vm56, %v2491, %v2493
  %v2498 = vsel %vm56, %v2489, %v2491
  %v2499 = vsel %vm56, %v2487, %v2489
  %v2500 = vsel %vm56, %v2485, %v2487
  %v2501 = vsel %vm56, %v2495, %v2485
  %v2502 = vld [vmem:[%s5] sm:$0xf]
  %2503 = vrot.lane.b32.xlu0 %v2478, 18
  %v2504 = vpop.permute.xlu0 %2503
  %2505 = vrot.lane.b32.xlu0 %v2479, 18
  %v2506 = vpop.permute.xlu0 %2505
  %2507 = vrot.lane.b32.xlu0 %v2480, 18
  %v2508 = vpop.permute.xlu0 %2507
  %2509 = vrot.lane.b32.xlu0 %v2481, 18
  %v2510 = vpop.permute.xlu0 %2509
  %2511 = vrot.lane.b32.xlu0 %v2482, 18
  %v2512 = vpop.permute.xlu0 %2511
  %2513 = vrot.lane.b32.xlu0 %v2483, 18
  %v2514 = vpop.permute.xlu0 %2513
  %v2515 = vsel %vm76, %v2512, %v2514
  %v2516 = vsel %vm76, %v2510, %v2512
  %v2517 = vsel %vm76, %v2508, %v2510
  %v2518 = vsel %vm76, %v2506, %v2508
  %v2519 = vsel %vm76, %v2504, %v2506
  %v2520 = vsel %vm76, %v2514, %v2504
  %s2521 = scalar_lea.vmem %s5, 4
  %v2522 = vld [vmem:[%s2521] sm:$0xf]
  %v2524 = vsel %vm85, %v2522, 0
  %v2527 = vsel %vm89, %v2520, 0
  %v2530 = vsel %vm89, %v2519, 0
  %v2533 = vsel %vm89, %v2518, 0
  %v2536 = vsel %vm89, %v2517, 0
  %v2539 = vsel %vm89, %v2516, 0
  %v2542 = vsel %vm89, %v2515, 0
  %2544 = vmatprep.subr.mxu0 %v2530
  %2545 = vmatpush1.msra.mxu0 %v2527
  %2546 = vmatprep.subr.mxu0 0.0
  %2547 = vmatpush1.msra.mxu0 0.0
  %2548 = vmatprep.subr.mxu0 0.0
  %2549 = vmatpush1.msra.mxu0 0.0
  %2550 = vmatprep.subr.mxu0 0.0
  %2551 = vmatpush1.msra.mxu0 0.0
  %2552 = vmatprep.subr.mxu0 0.0
  %2553 = vmatpush1.msra.mxu0 0.0
  %2554 = vmatprep.subr.mxu0 0.0
  %2555 = vmatpush1.msra.mxu0 0.0
  %2556 = vmatprep.subr.mxu0 0.0
  %2557 = vmatpush1.msra.mxu0 0.0
  %2558 = vmatprep.subr.mxu0 0.0
  %2559 = vmatpush1.msra.mxu0 0.0
  %2560 = vmatprep.subr.mxu0 0.0
  %2561 = vmatpush1.msra.mxu0 0.0
  %2562 = vmatprep.subr.mxu0 0.0
  %2563 = vmatpush1.msra.mxu0 0.0
  %2564 = vmatprep.subr.mxu0 0.0
  %2565 = vmatpush1.msra.mxu0 0.0
  %2566 = vmatprep.subr.mxu0 0.0
  %2567 = vmatpush1.msra.mxu0 0.0
  %2568 = vmatprep.subr.mxu0 0.0
  %2569 = vmatpush1.msra.mxu0 0.0
  %2570 = vmatprep.subr.mxu0 0.0
  %2571 = vmatpush1.msra.mxu0 0.0
  %2572 = vmatprep.subr.mxu0 0.0
  %2573 = vmatpush1.msra.mxu0 0.0
  %2574 = vmatprep.subr.mxu0 0.0
  %2575 = vmatpush1.msra.mxu0 0.0
  %2576 = vmatprep.subr.mxu0 0.0
  %2577 = vmatpush1.msra.mxu0 0.0
  %2578 = vmatprep.subr.mxu0 0.0
  %2579 = vmatpush1.msra.mxu0 0.0
  %2580 = vmatprep.subr.mxu0 0.0
  %2581 = vmatpush1.msra.mxu0 0.0
  %2582 = vmatprep.subr.mxu0 0.0
  %2583 = vmatpush1.msra.mxu0 0.0
  %2584 = vmatprep.subr.mxu0 0.0
  %2585 = vmatpush1.msra.mxu0 0.0
  %2586 = vmatprep.subr.mxu0 0.0
  %2587 = vmatpush1.msra.mxu0 0.0
  %2588 = vmatprep.subr.mxu0 0.0
  %2589 = vmatpush1.msra.mxu0 0.0
  %2590 = vmatprep.subr.mxu0 0.0
  %2591 = vmatpush1.msra.mxu0 0.0
  %2592 = vmatprep.subr.mxu0 0.0
  %2593 = vmatpush1.msra.mxu0 0.0
  %2594 = vmatprep.subr.mxu0 0.0
  %2595 = vmatpush1.msra.mxu0 0.0
  %2596 = vmatprep.subr.mxu0 0.0
  %2597 = vmatpush1.msra.mxu0 0.0
  %2598 = vmatprep.subr.mxu0 0.0
  %2599 = vmatpush1.msra.mxu0 0.0
  %2600 = vmatprep.subr.mxu0 0.0
  %2601 = vmatpush1.msra.mxu0 0.0
  %2602 = vmatprep.subr.mxu0 0.0
  %2603 = vmatpush1.msra.mxu0 0.0
  %2604 = vmatprep.subr.mxu0 0.0
  %2605 = vmatpush1.msra.mxu0 0.0
  %2606 = vmatprep.subr.mxu0 0.0
  %2607 = vmatpush1.msra.mxu0 0.0
  %2608 = vmatprep.mubr.f32.mxu0 0.0
  %2609 = vmatmul.mubr.f32.gmra.mrb[0].mxu0 %v2524
  %v2610 = vpop.f32.mrb[0].mxu0
  %v2611 = vadd.f32 0.0, %v2610
  %v2612 = vpop.f32.mrb[0].mxu0
  %v2613 = vadd.f32 0.0, %v2612
  %2614 = vdwg.mxu0
  %2615 = vmatprep.subr.mxu0 %v2536
  %2616 = vmatpush1.msra.mxu0 %v2533
  %2617 = vmatprep.subr.mxu0 0.0
  %2618 = vmatpush1.msra.mxu0 0.0
  %2619 = vmatprep.subr.mxu0 0.0
  %2620 = vmatpush1.msra.mxu0 0.0
  %2621 = vmatprep.subr.mxu0 0.0
  %2622 = vmatpush1.msra.mxu0 0.0
  %2623 = vmatprep.subr.mxu0 0.0
  %2624 = vmatpush1.msra.mxu0 0.0
  %2625 = vmatprep.subr.mxu0 0.0
  %2626 = vmatpush1.msra.mxu0 0.0
  %2627 = vmatprep.subr.mxu0 0.0
  %2628 = vmatpush1.msra.mxu0 0.0
  %2629 = vmatprep.subr.mxu0 0.0
  %2630 = vmatpush1.msra.mxu0 0.0
  %2631 = vmatprep.subr.mxu0 0.0
  %2632 = vmatpush1.msra.mxu0 0.0
  %2633 = vmatprep.subr.mxu0 0.0
  %2634 = vmatpush1.msra.mxu0 0.0
  %2635 = vmatprep.subr.mxu0 0.0
  %2636 = vmatpush1.msra.mxu0 0.0
  %2637 = vmatprep.subr.mxu0 0.0
  %2638 = vmatpush1.msra.mxu0 0.0
  %2639 = vmatprep.subr.mxu0 0.0
  %2640 = vmatpush1.msra.mxu0 0.0
  %2641 = vmatprep.subr.mxu0 0.0
  %2642 = vmatpush1.msra.mxu0 0.0
  %2643 = vmatprep.subr.mxu0 0.0
  %2644 = vmatpush1.msra.mxu0 0.0
  %2645 = vmatprep.subr.mxu0 0.0
  %2646 = vmatpush1.msra.mxu0 0.0
  %2647 = vmatprep.subr.mxu0 0.0
  %2648 = vmatpush1.msra.mxu0 0.0
  %2649 = vmatprep.subr.mxu0 0.0
  %2650 = vmatpush1.msra.mxu0 0.0
  %2651 = vmatprep.subr.mxu0 0.0
  %2652 = vmatpush1.msra.mxu0 0.0
  %2653 = vmatprep.subr.mxu0 0.0
  %2654 = vmatpush1.msra.mxu0 0.0
  %2655 = vmatprep.subr.mxu0 0.0
  %2656 = vmatpush1.msra.mxu0 0.0
  %2657 = vmatprep.subr.mxu0 0.0
  %2658 = vmatpush1.msra.mxu0 0.0
  %2659 = vmatprep.subr.mxu0 0.0
  %2660 = vmatpush1.msra.mxu0 0.0
  %2661 = vmatprep.subr.mxu0 0.0
  %2662 = vmatpush1.msra.mxu0 0.0
  %2663 = vmatprep.subr.mxu0 0.0
  %2664 = vmatpush1.msra.mxu0 0.0
  %2665 = vmatprep.subr.mxu0 0.0
  %2666 = vmatpush1.msra.mxu0 0.0
  %2667 = vmatprep.subr.mxu0 0.0
  %2668 = vmatpush1.msra.mxu0 0.0
  %2669 = vmatprep.subr.mxu0 0.0
  %2670 = vmatpush1.msra.mxu0 0.0
  %2671 = vmatprep.subr.mxu0 0.0
  %2672 = vmatpush1.msra.mxu0 0.0
  %2673 = vmatprep.subr.mxu0 0.0
  %2674 = vmatpush1.msra.mxu0 0.0
  %2675 = vmatprep.subr.mxu0 0.0
  %2676 = vmatpush1.msra.mxu0 0.0
  %2677 = vmatprep.subr.mxu0 0.0
  %2678 = vmatpush1.msra.mxu0 0.0
  %2679 = vmatprep.mubr.f32.mxu0 0.0
  %2680 = vmatmul.mubr.f32.gmra.mrb[0].mxu0 %v2524
  %v2681 = vpop.f32.mrb[0].mxu0
  %v2682 = vadd.f32 0.0, %v2681
  %v2683 = vpop.f32.mrb[0].mxu0
  %v2684 = vadd.f32 0.0, %v2683
  %2685 = vdwg.mxu0
  %2686 = vmatprep.subr.mxu0 %v2542
  %2687 = vmatpush1.msra.mxu0 %v2539
  %2688 = vmatprep.subr.mxu0 0.0
  %2689 = vmatpush1.msra.mxu0 0.0
  %2690 = vmatprep.subr.mxu0 0.0
  %2691 = vmatpush1.msra.mxu0 0.0
  %2692 = vmatprep.subr.mxu0 0.0
  %2693 = vmatpush1.msra.mxu0 0.0
  %2694 = vmatprep.subr.mxu0 0.0
  %2695 = vmatpush1.msra.mxu0 0.0
  %2696 = vmatprep.subr.mxu0 0.0
  %2697 = vmatpush1.msra.mxu0 0.0
  %2698 = vmatprep.subr.mxu0 0.0
  %2699 = vmatpush1.msra.mxu0 0.0
  %2700 = vmatprep.subr.mxu0 0.0
  %2701 = vmatpush1.msra.mxu0 0.0
  %2702 = vmatprep.subr.mxu0 0.0
  %2703 = vmatpush1.msra.mxu0 0.0
  %2704 = vmatprep.subr.mxu0 0.0
  %2705 = vmatpush1.msra.mxu0 0.0
  %2706 = vmatprep.subr.mxu0 0.0
  %2707 = vmatpush1.msra.mxu0 0.0
  %2708 = vmatprep.subr.mxu0 0.0
  %2709 = vmatpush1.msra.mxu0 0.0
  %2710 = vmatprep.subr.mxu0 0.0
  %2711 = vmatpush1.msra.mxu0 0.0
  %2712 = vmatprep.subr.mxu0 0.0
  %2713 = vmatpush1.msra.mxu0 0.0
  %2714 = vmatprep.subr.mxu0 0.0
  %2715 = vmatpush1.msra.mxu0 0.0
  %2716 = vmatprep.subr.mxu0 0.0
  %2717 = vmatpush1.msra.mxu0 0.0
  %2718 = vmatprep.subr.mxu0 0.0
  %2719 = vmatpush1.msra.mxu0 0.0
  %2720 = vmatprep.subr.mxu0 0.0
  %2721 = vmatpush1.msra.mxu0 0.0
  %2722 = vmatprep.subr.mxu0 0.0
  %2723 = vmatpush1.msra.mxu0 0.0
  %2724 = vmatprep.subr.mxu0 0.0
  %2725 = vmatpush1.msra.mxu0 0.0
  %2726 = vmatprep.subr.mxu0 0.0
  %2727 = vmatpush1.msra.mxu0 0.0
  %2728 = vmatprep.subr.mxu0 0.0
  %2729 = vmatpush1.msra.mxu0 0.0
  %2730 = vmatprep.subr.mxu0 0.0
  %2731 = vmatpush1.msra.mxu0 0.0
  %2732 = vmatprep.subr.mxu0 0.0
  %2733 = vmatpush1.msra.mxu0 0.0
  %2734 = vmatprep.subr.mxu0 0.0
  %2735 = vmatpush1.msra.mxu0 0.0
  %2736 = vmatprep.subr.mxu0 0.0
  %2737 = vmatpush1.msra.mxu0 0.0
  %2738 = vmatprep.subr.mxu0 0.0
  %2739 = vmatpush1.msra.mxu0 0.0
  %2740 = vmatprep.subr.mxu0 0.0
  %2741 = vmatpush1.msra.mxu0 0.0
  %2742 = vmatprep.subr.mxu0 0.0
  %2743 = vmatpush1.msra.mxu0 0.0
  %2744 = vmatprep.subr.mxu0 0.0
  %2745 = vmatpush1.msra.mxu0 0.0
  %2746 = vmatprep.subr.mxu0 0.0
  %2747 = vmatpush1.msra.mxu0 0.0
  %2748 = vmatprep.subr.mxu0 0.0
  %2749 = vmatpush1.msra.mxu0 0.0
  %2750 = vmatprep.mubr.f32.mxu0 0.0
  %2751 = vmatmul.mubr.f32.gmra.mrb[0].mxu0 %v2524
  %v2752 = vpop.f32.mrb[0].mxu0
  %v2753 = vadd.f32 0.0, %v2752
  %v2754 = vpop.f32.mrb[0].mxu0
  %v2755 = vadd.f32 0.0, %v2754
  %2756 = vdwg.mxu0
  %v2758 = vsel %vm85, %v2502, 0
  %v2761 = vsel %vm89, %v2501, 0
  %v2764 = vsel %vm89, %v2500, 0
  %v2767 = vsel %vm89, %v2499, 0
  %v2770 = vsel %vm89, %v2498, 0
  %v2773 = vsel %vm89, %v2497, 0
  %v2776 = vsel %vm89, %v2496, 0
  %2778 = vmatprep.subr.mxu0 %v2764
  %2779 = vmatpush1.msra.mxu0 %v2761
  %2780 = vmatprep.subr.mxu0 0.0
  %2781 = vmatpush1.msra.mxu0 0.0
  %2782 = vmatprep.subr.mxu0 0.0
  %2783 = vmatpush1.msra.mxu0 0.0
  %2784 = vmatprep.subr.mxu0 0.0
  %2785 = vmatpush1.msra.mxu0 0.0
  %2786 = vmatprep.subr.mxu0 0.0
  %2787 = vmatpush1.msra.mxu0 0.0
  %2788 = vmatprep.subr.mxu0 0.0
  %2789 = vmatpush1.msra.mxu0 0.0
  %2790 = vmatprep.subr.mxu0 0.0
  %2791 = vmatpush1.msra.mxu0 0.0
  %2792 = vmatprep.subr.mxu0 0.0
  %2793 = vmatpush1.msra.mxu0 0.0
  %2794 = vmatprep.subr.mxu0 0.0
  %2795 = vmatpush1.msra.mxu0 0.0
  %2796 = vmatprep.subr.mxu0 0.0
  %2797 = vmatpush1.msra.mxu0 0.0
  %2798 = vmatprep.subr.mxu0 0.0
  %2799 = vmatpush1.msra.mxu0 0.0
  %2800 = vmatprep.subr.mxu0 0.0
  %2801 = vmatpush1.msra.mxu0 0.0
  %2802 = vmatprep.subr.mxu0 0.0
  %2803 = vmatpush1.msra.mxu0 0.0
  %2804 = vmatprep.subr.mxu0 0.0
  %2805 = vmatpush1.msra.mxu0 0.0
  %2806 = vmatprep.subr.mxu0 0.0
  %2807 = vmatpush1.msra.mxu0 0.0
  %2808 = vmatprep.subr.mxu0 0.0
  %2809 = vmatpush1.msra.mxu0 0.0
  %2810 = vmatprep.subr.mxu0 0.0
  %2811 = vmatpush1.msra.mxu0 0.0
  %2812 = vmatprep.subr.mxu0 0.0
  %2813 = vmatpush1.msra.mxu0 0.0
  %2814 = vmatprep.subr.mxu0 0.0
  %2815 = vmatpush1.msra.mxu0 0.0
  %2816 = vmatprep.subr.mxu0 0.0
  %2817 = vmatpush1.msra.mxu0 0.0
  %2818 = vmatprep.subr.mxu0 0.0
  %2819 = vmatpush1.msra.mxu0 0.0
  %2820 = vmatprep.subr.mxu0 0.0
  %2821 = vmatpush1.msra.mxu0 0.0
  %2822 = vmatprep.subr.mxu0 0.0
  %2823 = vmatpush1.msra.mxu0 0.0
  %2824 = vmatprep.subr.mxu0 0.0
  %2825 = vmatpush1.msra.mxu0 0.0
  %2826 = vmatprep.subr.mxu0 0.0
  %2827 = vmatpush1.msra.mxu0 0.0
  %2828 = vmatprep.subr.mxu0 0.0
  %2829 = vmatpush1.msra.mxu0 0.0
  %2830 = vmatprep.subr.mxu0 0.0
  %2831 = vmatpush1.msra.mxu0 0.0
  %2832 = vmatprep.subr.mxu0 0.0
  %2833 = vmatpush1.msra.mxu0 0.0
  %2834 = vmatprep.subr.mxu0 0.0
  %2835 = vmatpush1.msra.mxu0 0.0
  %2836 = vmatprep.subr.mxu0 0.0
  %2837 = vmatpush1.msra.mxu0 0.0
  %2838 = vmatprep.subr.mxu0 0.0
  %2839 = vmatpush1.msra.mxu0 0.0
  %2840 = vmatprep.subr.mxu0 0.0
  %2841 = vmatpush1.msra.mxu0 0.0
  %2842 = vmatprep.mubr.f32.mxu0 0.0
  %2843 = vmatmul.mubr.f32.gmra.mrb[0].mxu0 %v2758
  %v2844 = vpop.f32.mrb[0].mxu0
  %v2845 = vadd.f32 %v2611, %v2844
  %v2846 = vpop.f32.mrb[0].mxu0
  %v2847 = vadd.f32 %v2613, %v2846
  %2848 = vdwg.mxu0
  %2849 = vmatprep.subr.mxu0 %v2770
  %2850 = vmatpush1.msra.mxu0 %v2767
  %2851 = vmatprep.subr.mxu0 0.0
  %2852 = vmatpush1.msra.mxu0 0.0
  %2853 = vmatprep.subr.mxu0 0.0
  %2854 = vmatpush1.msra.mxu0 0.0
  %2855 = vmatprep.subr.mxu0 0.0
  %2856 = vmatpush1.msra.mxu0 0.0
  %2857 = vmatprep.subr.mxu0 0.0
  %2858 = vmatpush1.msra.mxu0 0.0
  %2859 = vmatprep.subr.mxu0 0.0
  %2860 = vmatpush1.msra.mxu0 0.0
  %2861 = vmatprep.subr.mxu0 0.0
  %2862 = vmatpush1.msra.mxu0 0.0
  %2863 = vmatprep.subr.mxu0 0.0
  %2864 = vmatpush1.msra.mxu0 0.0
  %2865 = vmatprep.subr.mxu0 0.0
  %2866 = vmatpush1.msra.mxu0 0.0
  %2867 = vmatprep.subr.mxu0 0.0
  %2868 = vmatpush1.msra.mxu0 0.0
  %2869 = vmatprep.subr.mxu0 0.0
  %2870 = vmatpush1.msra.mxu0 0.0
  %2871 = vmatprep.subr.mxu0 0.0
  %2872 = vmatpush1.msra.mxu0 0.0
  %2873 = vmatprep.subr.mxu0 0.0
  %2874 = vmatpush1.msra.mxu0 0.0
  %2875 = vmatprep.subr.mxu0 0.0
  %2876 = vmatpush1.msra.mxu0 0.0
  %2877 = vmatprep.subr.mxu0 0.0
  %2878 = vmatpush1.msra.mxu0 0.0
  %2879 = vmatprep.subr.mxu0 0.0
  %2880 = vmatpush1.msra.mxu0 0.0
  %2881 = vmatprep.subr.mxu0 0.0
  %2882 = vmatpush1.msra.mxu0 0.0
  %2883 = vmatprep.subr.mxu0 0.0
  %2884 = vmatpush1.msra.mxu0 0.0
  %2885 = vmatprep.subr.mxu0 0.0
  %2886 = vmatpush1.msra.mxu0 0.0
  %2887 = vmatprep.subr.mxu0 0.0
  %2888 = vmatpush1.msra.mxu0 0.0
  %2889 = vmatprep.subr.mxu0 0.0
  %2890 = vmatpush1.msra.mxu0 0.0
  %2891 = vmatprep.subr.mxu0 0.0
  %2892 = vmatpush1.msra.mxu0 0.0
  %2893 = vmatprep.subr.mxu0 0.0
  %2894 = vmatpush1.msra.mxu0 0.0
  %2895 = vmatprep.subr.mxu0 0.0
  %2896 = vmatpush1.msra.mxu0 0.0
  %2897 = vmatprep.subr.mxu0 0.0
  %2898 = vmatpush1.msra.mxu0 0.0
  %2899 = vmatprep.subr.mxu0 0.0
  %2900 = vmatpush1.msra.mxu0 0.0
  %2901 = vmatprep.subr.mxu0 0.0
  %2902 = vmatpush1.msra.mxu0 0.0
  %2903 = vmatprep.subr.mxu0 0.0
  %2904 = vmatpush1.msra.mxu0 0.0
  %2905 = vmatprep.subr.mxu0 0.0
  %2906 = vmatpush1.msra.mxu0 0.0
  %2907 = vmatprep.subr.mxu0 0.0
  %2908 = vmatpush1.msra.mxu0 0.0
  %2909 = vmatprep.subr.mxu0 0.0
  %2910 = vmatpush1.msra.mxu0 0.0
  %2911 = vmatprep.subr.mxu0 0.0
  %2912 = vmatpush1.msra.mxu0 0.0
  %2913 = vmatprep.mubr.f32.mxu0 0.0
  %2914 = vmatmul.mubr.f32.gmra.mrb[0].mxu0 %v2758
  %v2915 = vpop.f32.mrb[0].mxu0
  %v2916 = vadd.f32 %v2682, %v2915
  %v2917 = vpop.f32.mrb[0].mxu0
  %v2918 = vadd.f32 %v2684, %v2917
  %2919 = vdwg.mxu0
  %2920 = vmatprep.subr.mxu0 %v2776
  %2921 = vmatpush1.msra.mxu0 %v2773
  %2922 = vmatprep.subr.mxu0 0.0
  %2923 = vmatpush1.msra.mxu0 0.0
  %2924 = vmatprep.subr.mxu0 0.0
  %2925 = vmatpush1.msra.mxu0 0.0
  %2926 = vmatprep.subr.mxu0 0.0
  %2927 = vmatpush1.msra.mxu0 0.0
  %2928 = vmatprep.subr.mxu0 0.0
  %2929 = vmatpush1.msra.mxu0 0.0
  %2930 = vmatprep.subr.mxu0 0.0
  %2931 = vmatpush1.msra.mxu0 0.0
  %2932 = vmatprep.subr.mxu0 0.0
  %2933 = vmatpush1.msra.mxu0 0.0
  %2934 = vmatprep.subr.mxu0 0.0
  %2935 = vmatpush1.msra.mxu0 0.0
  %2936 = vmatprep.subr.mxu0 0.0
  %2937 = vmatpush1.msra.mxu0 0.0
  %2938 = vmatprep.subr.mxu0 0.0
  %2939 = vmatpush1.msra.mxu0 0.0
  %2940 = vmatprep.subr.mxu0 0.0
  %2941 = vmatpush1.msra.mxu0 0.0
  %2942 = vmatprep.subr.mxu0 0.0
  %2943 = vmatpush1.msra.mxu0 0.0
  %2944 = vmatprep.subr.mxu0 0.0
  %2945 = vmatpush1.msra.mxu0 0.0
  %2946 = vmatprep.subr.mxu0 0.0
  %2947 = vmatpush1.msra.mxu0 0.0
  %2948 = vmatprep.subr.mxu0 0.0
  %2949 = vmatpush1.msra.mxu0 0.0
  %2950 = vmatprep.subr.mxu0 0.0
  %2951 = vmatpush1.msra.mxu0 0.0
  %2952 = vmatprep.subr.mxu0 0.0
  %2953 = vmatpush1.msra.mxu0 0.0
  %2954 = vmatprep.subr.mxu0 0.0
  %2955 = vmatpush1.msra.mxu0 0.0
  %2956 = vmatprep.subr.mxu0 0.0
  %2957 = vmatpush1.msra.mxu0 0.0
  %2958 = vmatprep.subr.mxu0 0.0
  %2959 = vmatpush1.msra.mxu0 0.0
  %2960 = vmatprep.subr.mxu0 0.0
  %2961 = vmatpush1.msra.mxu0 0.0
  %2962 = vmatprep.subr.mxu0 0.0
  %2963 = vmatpush1.msra.mxu0 0.0
  %2964 = vmatprep.subr.mxu0 0.0
  %2965 = vmatpush1.msra.mxu0 0.0
  %2966 = vmatprep.subr.mxu0 0.0
  %2967 = vmatpush1.msra.mxu0 0.0
  %2968 = vmatprep.subr.mxu0 0.0
  %2969 = vmatpush1.msra.mxu0 0.0
  %2970 = vmatprep.subr.mxu0 0.0
  %2971 = vmatpush1.msra.mxu0 0.0
  %2972 = vmatprep.subr.mxu0 0.0
  %2973 = vmatpush1.msra.mxu0 0.0
  %2974 = vmatprep.subr.mxu0 0.0
  %2975 = vmatpush1.msra.mxu0 0.0
  %2976 = vmatprep.subr.mxu0 0.0
  %2977 = vmatpush1.msra.mxu0 0.0
  %2978 = vmatprep.subr.mxu0 0.0
  %2979 = vmatpush1.msra.mxu0 0.0
  %2980 = vmatprep.subr.mxu0 0.0
  %2981 = vmatpush1.msra.mxu0 0.0
  %2982 = vmatprep.subr.mxu0 0.0
  %2983 = vmatpush1.msra.mxu0 0.0
  %2984 = vmatprep.mubr.f32.mxu0 0.0
  %2985 = vmatmul.mubr.f32.gmra.mrb[0].mxu0 %v2758
  %v2986 = vpop.f32.mrb[0].mxu0
  %v2987 = vadd.f32 %v2753, %v2986
  %v2988 = vpop.f32.mrb[0].mxu0
  %v2989 = vadd.f32 %v2755, %v2988
  %2990 = vdwg.mxu0
  %2991 = vrot.lane.b32.xlu0 %v2478, 17
  %v2992 = vpop.permute.xlu0 %2991
  %2993 = vrot.lane.b32.xlu0 %v2479, 17
  %v2994 = vpop.permute.xlu0 %2993
  %2995 = vrot.lane.b32.xlu0 %v2480, 17
  %v2996 = vpop.permute.xlu0 %2995
  %2997 = vrot.lane.b32.xlu0 %v2481, 17
  %v2998 = vpop.permute.xlu0 %2997
  %2999 = vrot.lane.b32.xlu0 %v2482, 17
  %v3000 = vpop.permute.xlu0 %2999
  %3001 = vrot.lane.b32.xlu0 %v2483, 17
  %v3002 = vpop.permute.xlu0 %3001
  %v3003 = vsel %vm567, %v3000, %v3002
  %v3004 = vsel %vm567, %v2998, %v3000
  %v3005 = vsel %vm567, %v2996, %v2998
  %v3006 = vsel %vm567, %v2994, %v2996
  %v3007 = vsel %vm567, %v2992, %v2994
  %v3008 = vsel %vm567, %v3002, %v2992
  %s3009 = scalar_lea.vmem %s5, 8
  %v3010 = vld [vmem:[%s3009] sm:$0xf]
  %v3012 = vsel %vm85, %v3010, 0
  %v3015 = vsel %vm89, %v3008, 0
  %v3018 = vsel %vm89, %v3007, 0
  %v3021 = vsel %vm89, %v3006, 0
  %v3024 = vsel %vm89, %v3005, 0
  %v3027 = vsel %vm89, %v3004, 0
  %v3030 = vsel %vm89, %v3003, 0
  %3032 = vmatprep.subr.mxu0 %v3018
  %3033 = vmatpush1.msra.mxu0 %v3015
  %3034 = vmatprep.subr.mxu0 0.0
  %3035 = vmatpush1.msra.mxu0 0.0
  %3036 = vmatprep.subr.mxu0 0.0
  %3037 = vmatpush1.msra.mxu0 0.0
  %3038 = vmatprep.subr.mxu0 0.0
  %3039 = vmatpush1.msra.mxu0 0.0
  %3040 = vmatprep.subr.mxu0 0.0
  %3041 = vmatpush1.msra.mxu0 0.0
  %3042 = vmatprep.subr.mxu0 0.0
  %3043 = vmatpush1.msra.mxu0 0.0
  %3044 = vmatprep.subr.mxu0 0.0
  %3045 = vmatpush1.msra.mxu0 0.0
  %3046 = vmatprep.subr.mxu0 0.0
  %3047 = vmatpush1.msra.mxu0 0.0
  %3048 = vmatprep.subr.mxu0 0.0
  %3049 = vmatpush1.msra.mxu0 0.0
  %3050 = vmatprep.subr.mxu0 0.0
  %3051 = vmatpush1.msra.mxu0 0.0
  %3052 = vmatprep.subr.mxu0 0.0
  %3053 = vmatpush1.msra.mxu0 0.0
  %3054 = vmatprep.subr.mxu0 0.0
  %3055 = vmatpush1.msra.mxu0 0.0
  %3056 = vmatprep.subr.mxu0 0.0
  %3057 = vmatpush1.msra.mxu0 0.0
  %3058 = vmatprep.subr.mxu0 0.0
  %3059 = vmatpush1.msra.mxu0 0.0
  %3060 = vmatprep.subr.mxu0 0.0
  %3061 = vmatpush1.msra.mxu0 0.0
  %3062 = vmatprep.subr.mxu0 0.0
  %3063 = vmatpush1.msra.mxu0 0.0
  %3064 = vmatprep.subr.mxu0 0.0
  %3065 = vmatpush1.msra.mxu0 0.0
  %3066 = vmatprep.subr.mxu0 0.0
  %3067 = vmatpush1.msra.mxu0 0.0
  %3068 = vmatprep.subr.mxu0 0.0
  %3069 = vmatpush1.msra.mxu0 0.0
  %3070 = vmatprep.subr.mxu0 0.0
  %3071 = vmatpush1.msra.mxu0 0.0
  %3072 = vmatprep.subr.mxu0 0.0
  %3073 = vmatpush1.msra.mxu0 0.0
  %3074 = vmatprep.subr.mxu0 0.0
  %3075 = vmatpush1.msra.mxu0 0.0
  %3076 = vmatprep.subr.mxu0 0.0
  %3077 = vmatpush1.msra.mxu0 0.0
  %3078 = vmatprep.subr.mxu0 0.0
  %3079 = vmatpush1.msra.mxu0 0.0
  %3080 = vmatprep.subr.mxu0 0.0
  %3081 = vmatpush1.msra.mxu0 0.0
  %3082 = vmatprep.subr.mxu0 0.0
  %3083 = vmatpush1.msra.mxu0 0.0
  %3084 = vmatprep.subr.mxu0 0.0
  %3085 = vmatpush1.msra.mxu0 0.0
  %3086 = vmatprep.subr.mxu0 0.0
  %3087 = vmatpush1.msra.mxu0 0.0
  %3088 = vmatprep.subr.mxu0 0.0
  %3089 = vmatpush1.msra.mxu0 0.0
  %3090 = vmatprep.subr.mxu0 0.0
  %3091 = vmatpush1.msra.mxu0 0.0
  %3092 = vmatprep.subr.mxu0 0.0
  %3093 = vmatpush1.msra.mxu0 0.0
  %3094 = vmatprep.subr.mxu0 0.0
  %3095 = vmatpush1.msra.mxu0 0.0
  %3096 = vmatprep.mubr.f32.mxu0 0.0
  %3097 = vmatmul.mubr.f32.gmra.mrb[0].mxu0 %v3012
  %v3098 = vpop.f32.mrb[0].mxu0
  %v3099 = vadd.f32 0.0, %v3098
  %v3100 = vpop.f32.mrb[0].mxu0
  %v3101 = vadd.f32 0.0, %v3100
  %3102 = vdwg.mxu0
  %3103 = vmatprep.subr.mxu0 %v3024
  %3104 = vmatpush1.msra.mxu0 %v3021
  %3105 = vmatprep.subr.mxu0 0.0
  %3106 = vmatpush1.msra.mxu0 0.0
  %3107 = vmatprep.subr.mxu0 0.0
  %3108 = vmatpush1.msra.mxu0 0.0
  %3109 = vmatprep.subr.mxu0 0.0
  %3110 = vmatpush1.msra.mxu0 0.0
  %3111 = vmatprep.subr.mxu0 0.0
  %3112 = vmatpush1.msra.mxu0 0.0
  %3113 = vmatprep.subr.mxu0 0.0
  %3114 = vmatpush1.msra.mxu0 0.0
  %3115 = vmatprep.subr.mxu0 0.0
  %3116 = vmatpush1.msra.mxu0 0.0
  %3117 = vmatprep.subr.mxu0 0.0
  %3118 = vmatpush1.msra.mxu0 0.0
  %3119 = vmatprep.subr.mxu0 0.0
  %3120 = vmatpush1.msra.mxu0 0.0
  %3121 = vmatprep.subr.mxu0 0.0
  %3122 = vmatpush1.msra.mxu0 0.0
  %3123 = vmatprep.subr.mxu0 0.0
  %3124 = vmatpush1.msra.mxu0 0.0
  %3125 = vmatprep.subr.mxu0 0.0
  %3126 = vmatpush1.msra.mxu0 0.0
  %3127 = vmatprep.subr.mxu0 0.0
  %3128 = vmatpush1.msra.mxu0 0.0
  %3129 = vmatprep.subr.mxu0 0.0
  %3130 = vmatpush1.msra.mxu0 0.0
  %3131 = vmatprep.subr.mxu0 0.0
  %3132 = vmatpush1.msra.mxu0 0.0
  %3133 = vmatprep.subr.mxu0 0.0
  %3134 = vmatpush1.msra.mxu0 0.0
  %3135 = vmatprep.subr.mxu0 0.0
  %3136 = vmatpush1.msra.mxu0 0.0
  %3137 = vmatprep.subr.mxu0 0.0
  %3138 = vmatpush1.msra.mxu0 0.0
  %3139 = vmatprep.subr.mxu0 0.0
  %3140 = vmatpush1.msra.mxu0 0.0
  %3141 = vmatprep.subr.mxu0 0.0
  %3142 = vmatpush1.msra.mxu0 0.0
  %3143 = vmatprep.subr.mxu0 0.0
  %3144 = vmatpush1.msra.mxu0 0.0
  %3145 = vmatprep.subr.mxu0 0.0
  %3146 = vmatpush1.msra.mxu0 0.0
  %3147 = vmatprep.subr.mxu0 0.0
  %3148 = vmatpush1.msra.mxu0 0.0
  %3149 = vmatprep.subr.mxu0 0.0
  %3150 = vmatpush1.msra.mxu0 0.0
  %3151 = vmatprep.subr.mxu0 0.0
  %3152 = vmatpush1.msra.mxu0 0.0
  %3153 = vmatprep.subr.mxu0 0.0
  %3154 = vmatpush1.msra.mxu0 0.0
  %3155 = vmatprep.subr.mxu0 0.0
  %3156 = vmatpush1.msra.mxu0 0.0
  %3157 = vmatprep.subr.mxu0 0.0
  %3158 = vmatpush1.msra.mxu0 0.0
  %3159 = vmatprep.subr.mxu0 0.0
  %3160 = vmatpush1.msra.mxu0 0.0
  %3161 = vmatprep.subr.mxu0 0.0
  %3162 = vmatpush1.msra.mxu0 0.0
  %3163 = vmatprep.subr.mxu0 0.0
  %3164 = vmatpush1.msra.mxu0 0.0
  %3165 = vmatprep.subr.mxu0 0.0
  %3166 = vmatpush1.msra.mxu0 0.0
  %3167 = vmatprep.mubr.f32.mxu0 0.0
  %3168 = vmatmul.mubr.f32.gmra.mrb[0].mxu0 %v3012
  %v3169 = vpop.f32.mrb[0].mxu0
  %v3170 = vadd.f32 0.0, %v3169
  %v3171 = vpop.f32.mrb[0].mxu0
  %v3172 = vadd.f32 0.0, %v3171
  %3173 = vdwg.mxu0
  %3174 = vmatprep.subr.mxu0 %v3030
  %3175 = vmatpush1.msra.mxu0 %v3027
  %3176 = vmatprep.subr.mxu0 0.0
  %3177 = vmatpush1.msra.mxu0 0.0
  %3178 = vmatprep.subr.mxu0 0.0
  %3179 = vmatpush1.msra.mxu0 0.0
  %3180 = vmatprep.subr.mxu0 0.0
  %3181 = vmatpush1.msra.mxu0 0.0
  %3182 = vmatprep.subr.mxu0 0.0
  %3183 = vmatpush1.msra.mxu0 0.0
  %3184 = vmatprep.subr.mxu0 0.0
  %3185 = vmatpush1.msra.mxu0 0.0
  %3186 = vmatprep.subr.mxu0 0.0
  %3187 = vmatpush1.msra.mxu0 0.0
  %3188 = vmatprep.subr.mxu0 0.0
  %3189 = vmatpush1.msra.mxu0 0.0
  %3190 = vmatprep.subr.mxu0 0.0
  %3191 = vmatpush1.msra.mxu0 0.0
  %3192 = vmatprep.subr.mxu0 0.0
  %3193 = vmatpush1.msra.mxu0 0.0
  %3194 = vmatprep.subr.mxu0 0.0
  %3195 = vmatpush1.msra.mxu0 0.0
  %3196 = vmatprep.subr.mxu0 0.0
  %3197 = vmatpush1.msra.mxu0 0.0
  %3198 = vmatprep.subr.mxu0 0.0
  %3199 = vmatpush1.msra.mxu0 0.0
  %3200 = vmatprep.subr.mxu0 0.0
  %3201 = vmatpush1.msra.mxu0 0.0
  %3202 = vmatprep.subr.mxu0 0.0
  %3203 = vmatpush1.msra.mxu0 0.0
  %3204 = vmatprep.subr.mxu0 0.0
  %3205 = vmatpush1.msra.mxu0 0.0
  %3206 = vmatprep.subr.mxu0 0.0
  %3207 = vmatpush1.msra.mxu0 0.0
  %3208 = vmatprep.subr.mxu0 0.0
  %3209 = vmatpush1.msra.mxu0 0.0
  %3210 = vmatprep.subr.mxu0 0.0
  %3211 = vmatpush1.msra.mxu0 0.0
  %3212 = vmatprep.subr.mxu0 0.0
  %3213 = vmatpush1.msra.mxu0 0.0
  %3214 = vmatprep.subr.mxu0 0.0
  %3215 = vmatpush1.msra.mxu0 0.0
  %3216 = vmatprep.subr.mxu0 0.0
  %3217 = vmatpush1.msra.mxu0 0.0
  %3218 = vmatprep.subr.mxu0 0.0
  %3219 = vmatpush1.msra.mxu0 0.0
  %3220 = vmatprep.subr.mxu0 0.0
  %3221 = vmatpush1.msra.mxu0 0.0
  %3222 = vmatprep.subr.mxu0 0.0
  %3223 = vmatpush1.msra.mxu0 0.0
  %3224 = vmatprep.subr.mxu0 0.0
  %3225 = vmatpush1.msra.mxu0 0.0
  %3226 = vmatprep.subr.mxu0 0.0
  %3227 = vmatpush1.msra.mxu0 0.0
  %3228 = vmatprep.subr.mxu0 0.0
  %3229 = vmatpush1.msra.mxu0 0.0
  %3230 = vmatprep.subr.mxu0 0.0
  %3231 = vmatpush1.msra.mxu0 0.0
  %3232 = vmatprep.subr.mxu0 0.0
  %3233 = vmatpush1.msra.mxu0 0.0
  %3234 = vmatprep.subr.mxu0 0.0
  %3235 = vmatpush1.msra.mxu0 0.0
  %3236 = vmatprep.subr.mxu0 0.0
  %3237 = vmatpush1.msra.mxu0 0.0
  %3238 = vmatprep.mubr.f32.mxu0 0.0
  %3239 = vmatmul.mubr.f32.gmra.mrb[0].mxu0 %v3012
  %v3240 = vpop.f32.mrb[0].mxu0
  %v3241 = vadd.f32 0.0, %v3240
  %v3242 = vpop.f32.mrb[0].mxu0
  %v3243 = vadd.f32 0.0, %v3242
  %3244 = vdwg.mxu0
  %v3245 = vadd.f32 %v2845, %v3099
  %v3246 = vadd.f32 %v2847, %v3101
  %v3247 = vadd.f32 %v2916, %v3170
  %v3248 = vadd.f32 %v2918, %v3172
  %v3249 = vadd.f32 %v2987, %v3241
  %v3250 = vadd.f32 %v2989, %v3243
  %3251 = vrot.lane.b32.xlu0 %v2478, 1
  %v3252 = vpop.permute.xlu0 %3251
  %3253 = vrot.lane.b32.xlu0 %v2479, 1
  %v3254 = vpop.permute.xlu0 %3253
  %3255 = vrot.lane.b32.xlu0 %v2480, 1
  %v3256 = vpop.permute.xlu0 %3255
  %3257 = vrot.lane.b32.xlu0 %v2481, 1
  %v3258 = vpop.permute.xlu0 %3257
  %3259 = vrot.lane.b32.xlu0 %v2482, 1
  %v3260 = vpop.permute.xlu0 %3259
  %3261 = vrot.lane.b32.xlu0 %v2483, 1
  %v3262 = vpop.permute.xlu0 %3261
  %v3263 = vsel %vm828, %v3260, %v3262
  %v3264 = vsel %vm828, %v3258, %v3260
  %v3265 = vsel %vm828, %v3256, %v3258
  %v3266 = vsel %vm828, %v3254, %v3256
  %v3267 = vsel %vm828, %v3252, %v3254
  %v3268 = vsel %vm828, %v3262, %v3252
  %s3269 = scalar_lea.vmem %s5, 12
  %v3270 = vld [vmem:[%s3269] sm:$0xf]
  %v3272 = vsel %vm85, %v3270, 0
  %v3275 = vsel %vm89, %v3268, 0
  %v3278 = vsel %vm89, %v3267, 0
  %v3281 = vsel %vm89, %v3266, 0
  %v3284 = vsel %vm89, %v3265, 0
  %v3287 = vsel %vm89, %v3264, 0
  %v3290 = vsel %vm89, %v3263, 0
  %3292 = vmatprep.subr.mxu0 %v3278
  %3293 = vmatpush1.msra.mxu0 %v3275
  %3294 = vmatprep.subr.mxu0 0.0
  %3295 = vmatpush1.msra.mxu0 0.0
  %3296 = vmatprep.subr.mxu0 0.0
  %3297 = vmatpush1.msra.mxu0 0.0
  %3298 = vmatprep.subr.mxu0 0.0
  %3299 = vmatpush1.msra.mxu0 0.0
  %3300 = vmatprep.subr.mxu0 0.0
  %3301 = vmatpush1.msra.mxu0 0.0
  %3302 = vmatprep.subr.mxu0 0.0
  %3303 = vmatpush1.msra.mxu0 0.0
  %3304 = vmatprep.subr.mxu0 0.0
  %3305 = vmatpush1.msra.mxu0 0.0
  %3306 = vmatprep.subr.mxu0 0.0
  %3307 = vmatpush1.msra.mxu0 0.0
  %3308 = vmatprep.subr.mxu0 0.0
  %3309 = vmatpush1.msra.mxu0 0.0
  %3310 = vmatprep.subr.mxu0 0.0
  %3311 = vmatpush1.msra.mxu0 0.0
  %3312 = vmatprep.subr.mxu0 0.0
  %3313 = vmatpush1.msra.mxu0 0.0
  %3314 = vmatprep.subr.mxu0 0.0
  %3315 = vmatpush1.msra.mxu0 0.0
  %3316 = vmatprep.subr.mxu0 0.0
  %3317 = vmatpush1.msra.mxu0 0.0
  %3318 = vmatprep.subr.mxu0 0.0
  %3319 = vmatpush1.msra.mxu0 0.0
  %3320 = vmatprep.subr.mxu0 0.0
  %3321 = vmatpush1.msra.mxu0 0.0
  %3322 = vmatprep.subr.mxu0 0.0
  %3323 = vmatpush1.msra.mxu0 0.0
  %3324 = vmatprep.subr.mxu0 0.0
  %3325 = vmatpush1.msra.mxu0 0.0
  %3326 = vmatprep.subr.mxu0 0.0
  %3327 = vmatpush1.msra.mxu0 0.0
  %3328 = vmatprep.subr.mxu0 0.0
  %3329 = vmatpush1.msra.mxu0 0.0
  %3330 = vmatprep.subr.mxu0 0.0
  %3331 = vmatpush1.msra.mxu0 0.0
  %3332 = vmatprep.subr.mxu0 0.0
  %3333 = vmatpush1.msra.mxu0 0.0
  %3334 = vmatprep.subr.mxu0 0.0
  %3335 = vmatpush1.msra.mxu0 0.0
  %3336 = vmatprep.subr.mxu0 0.0
  %3337 = vmatpush1.msra.mxu0 0.0
  %3338 = vmatprep.subr.mxu0 0.0
  %3339 = vmatpush1.msra.mxu0 0.0
  %3340 = vmatprep.subr.mxu0 0.0
  %3341 = vmatpush1.msra.mxu0 0.0
  %3342 = vmatprep.subr.mxu0 0.0
  %3343 = vmatpush1.msra.mxu0 0.0
  %3344 = vmatprep.subr.mxu0 0.0
  %3345 = vmatpush1.msra.mxu0 0.0
  %3346 = vmatprep.subr.mxu0 0.0
  %3347 = vmatpush1.msra.mxu0 0.0
  %3348 = vmatprep.subr.mxu0 0.0
  %3349 = vmatpush1.msra.mxu0 0.0
  %3350 = vmatprep.subr.mxu0 0.0
  %3351 = vmatpush1.msra.mxu0 0.0
  %3352 = vmatprep.subr.mxu0 0.0
  %3353 = vmatpush1.msra.mxu0 0.0
  %3354 = vmatprep.subr.mxu0 0.0
  %3355 = vmatpush1.msra.mxu0 0.0
  %3356 = vmatprep.mubr.f32.mxu0 0.0
  %3357 = vmatmul.mubr.f32.gmra.mrb[0].mxu0 %v3272
  %v3358 = vpop.f32.mrb[0].mxu0
  %v3359 = vadd.f32 0.0, %v3358
  %v3360 = vpop.f32.mrb[0].mxu0
  %v3361 = vadd.f32 0.0, %v3360
  %3362 = vdwg.mxu0
  %3363 = vmatprep.subr.mxu0 %v3284
  %3364 = vmatpush1.msra.mxu0 %v3281
  %3365 = vmatprep.subr.mxu0 0.0
  %3366 = vmatpush1.msra.mxu0 0.0
  %3367 = vmatprep.subr.mxu0 0.0
  %3368 = vmatpush1.msra.mxu0 0.0
  %3369 = vmatprep.subr.mxu0 0.0
  %3370 = vmatpush1.msra.mxu0 0.0
  %3371 = vmatprep.subr.mxu0 0.0
  %3372 = vmatpush1.msra.mxu0 0.0
  %3373 = vmatprep.subr.mxu0 0.0
  %3374 = vmatpush1.msra.mxu0 0.0
  %3375 = vmatprep.subr.mxu0 0.0
  %3376 = vmatpush1.msra.mxu0 0.0
  %3377 = vmatprep.subr.mxu0 0.0
  %3378 = vmatpush1.msra.mxu0 0.0
  %3379 = vmatprep.subr.mxu0 0.0
  %3380 = vmatpush1.msra.mxu0 0.0
  %3381 = vmatprep.subr.mxu0 0.0
  %3382 = vmatpush1.msra.mxu0 0.0
  %3383 = vmatprep.subr.mxu0 0.0
  %3384 = vmatpush1.msra.mxu0 0.0
  %3385 = vmatprep.subr.mxu0 0.0
  %3386 = vmatpush1.msra.mxu0 0.0
  %3387 = vmatprep.subr.mxu0 0.0
  %3388 = vmatpush1.msra.mxu0 0.0
  %3389 = vmatprep.subr.mxu0 0.0
  %3390 = vmatpush1.msra.mxu0 0.0
  %3391 = vmatprep.subr.mxu0 0.0
  %3392 = vmatpush1.msra.mxu0 0.0
  %3393 = vmatprep.subr.mxu0 0.0
  %3394 = vmatpush1.msra.mxu0 0.0
  %3395 = vmatprep.subr.mxu0 0.0
  %3396 = vmatpush1.msra.mxu0 0.0
  %3397 = vmatprep.subr.mxu0 0.0
  %3398 = vmatpush1.msra.mxu0 0.0
  %3399 = vmatprep.subr.mxu0 0.0
  %3400 = vmatpush1.msra.mxu0 0.0
  %3401 = vmatprep.subr.mxu0 0.0
  %3402 = vmatpush1.msra.mxu0 0.0
  %3403 = vmatprep.subr.mxu0 0.0
  %3404 = vmatpush1.msra.mxu0 0.0
  %3405 = vmatprep.subr.mxu0 0.0
  %3406 = vmatpush1.msra.mxu0 0.0
  %3407 = vmatprep.subr.mxu0 0.0
  %3408 = vmatpush1.msra.mxu0 0.0
  %3409 = vmatprep.subr.mxu0 0.0
  %3410 = vmatpush1.msra.mxu0 0.0
  %3411 = vmatprep.subr.mxu0 0.0
  %3412 = vmatpush1.msra.mxu0 0.0
  %3413 = vmatprep.subr.mxu0 0.0
  %3414 = vmatpush1.msra.mxu0 0.0
  %3415 = vmatprep.subr.mxu0 0.0
  %3416 = vmatpush1.msra.mxu0 0.0
  %3417 = vmatprep.subr.mxu0 0.0
  %3418 = vmatpush1.msra.mxu0 0.0
  %3419 = vmatprep.subr.mxu0 0.0
  %3420 = vmatpush1.msra.mxu0 0.0
  %3421 = vmatprep.subr.mxu0 0.0
  %3422 = vmatpush1.msra.mxu0 0.0
  %3423 = vmatprep.subr.mxu0 0.0
  %3424 = vmatpush1.msra.mxu0 0.0
  %3425 = vmatprep.subr.mxu0 0.0
  %3426 = vmatpush1.msra.mxu0 0.0
  %3427 = vmatprep.mubr.f32.mxu0 0.0
  %3428 = vmatmul.mubr.f32.gmra.mrb[0].mxu0 %v3272
  %v3429 = vpop.f32.mrb[0].mxu0
  %v3430 = vadd.f32 0.0, %v3429
  %v3431 = vpop.f32.mrb[0].mxu0
  %v3432 = vadd.f32 0.0, %v3431
  %3433 = vdwg.mxu0
  %3434 = vmatprep.subr.mxu0 %v3290
  %3435 = vmatpush1.msra.mxu0 %v3287
  %3436 = vmatprep.subr.mxu0 0.0
  %3437 = vmatpush1.msra.mxu0 0.0
  %3438 = vmatprep.subr.mxu0 0.0
  %3439 = vmatpush1.msra.mxu0 0.0
  %3440 = vmatprep.subr.mxu0 0.0
  %3441 = vmatpush1.msra.mxu0 0.0
  %3442 = vmatprep.subr.mxu0 0.0
  %3443 = vmatpush1.msra.mxu0 0.0
  %3444 = vmatprep.subr.mxu0 0.0
  %3445 = vmatpush1.msra.mxu0 0.0
  %3446 = vmatprep.subr.mxu0 0.0
  %3447 = vmatpush1.msra.mxu0 0.0
  %3448 = vmatprep.subr.mxu0 0.0
  %3449 = vmatpush1.msra.mxu0 0.0
  %3450 = vmatprep.subr.mxu0 0.0
  %3451 = vmatpush1.msra.mxu0 0.0
  %3452 = vmatprep.subr.mxu0 0.0
  %3453 = vmatpush1.msra.mxu0 0.0
  %3454 = vmatprep.subr.mxu0 0.0
  %3455 = vmatpush1.msra.mxu0 0.0
  %3456 = vmatprep.subr.mxu0 0.0
  %3457 = vmatpush1.msra.mxu0 0.0
  %3458 = vmatprep.subr.mxu0 0.0
  %3459 = vmatpush1.msra.mxu0 0.0
  %3460 = vmatprep.subr.mxu0 0.0
  %3461 = vmatpush1.msra.mxu0 0.0
  %3462 = vmatprep.subr.mxu0 0.0
  %3463 = vmatpush1.msra.mxu0 0.0
  %3464 = vmatprep.subr.mxu0 0.0
  %3465 = vmatpush1.msra.mxu0 0.0
  %3466 = vmatprep.subr.mxu0 0.0
  %3467 = vmatpush1.msra.mxu0 0.0
  %3468 = vmatprep.subr.mxu0 0.0
  %3469 = vmatpush1.msra.mxu0 0.0
  %3470 = vmatprep.subr.mxu0 0.0
  %3471 = vmatpush1.msra.mxu0 0.0
  %3472 = vmatprep.subr.mxu0 0.0
  %3473 = vmatpush1.msra.mxu0 0.0
  %3474 = vmatprep.subr.mxu0 0.0
  %3475 = vmatpush1.msra.mxu0 0.0
  %3476 = vmatprep.subr.mxu0 0.0
  %3477 = vmatpush1.msra.mxu0 0.0
  %3478 = vmatprep.subr.mxu0 0.0
  %3479 = vmatpush1.msra.mxu0 0.0
  %3480 = vmatprep.subr.mxu0 0.0
  %3481 = vmatpush1.msra.mxu0 0.0
  %3482 = vmatprep.subr.mxu0 0.0
  %3483 = vmatpush1.msra.mxu0 0.0
  %3484 = vmatprep.subr.mxu0 0.0
  %3485 = vmatpush1.msra.mxu0 0.0
  %3486 = vmatprep.subr.mxu0 0.0
  %3487 = vmatpush1.msra.mxu0 0.0
  %3488 = vmatprep.subr.mxu0 0.0
  %3489 = vmatpush1.msra.mxu0 0.0
  %3490 = vmatprep.subr.mxu0 0.0
  %3491 = vmatpush1.msra.mxu0 0.0
  %3492 = vmatprep.subr.mxu0 0.0
  %3493 = vmatpush1.msra.mxu0 0.0
  %3494 = vmatprep.subr.mxu0 0.0
  %3495 = vmatpush1.msra.mxu0 0.0
  %3496 = vmatprep.subr.mxu0 0.0
  %3497 = vmatpush1.msra.mxu0 0.0
  %3498 = vmatprep.mubr.f32.mxu0 0.0
  %3499 = vmatmul.mubr.f32.gmra.mrb[0].mxu0 %v3272
  %v3500 = vpop.f32.mrb[0].mxu0
  %v3501 = vadd.f32 0.0, %v3500
  %v3502 = vpop.f32.mrb[0].mxu0
  %v3503 = vadd.f32 0.0, %v3502
  %3504 = vdwg.mxu0
  %v3505 = vadd.f32 %v3245, %v3359
  %v3506 = vadd.f32 %v3246, %v3361
  %v3507 = vadd.f32 %v3247, %v3430
  %v3508 = vadd.f32 %v3248, %v3432
  %v3509 = vadd.f32 %v3249, %v3501
  %v3510 = vadd.f32 %v3250, %v3503
  %s3511 = scalar_lea.vmem %s5, 16
  %v3512 = vld [vmem:[%s3511] sm:$0xf]
  %v3514 = vsel %vm85, %v3512, 0
  %v3517 = vsel %vm89, %v2478, 0
  %v3520 = vsel %vm89, %v2479, 0
  %v3523 = vsel %vm89, %v2480, 0
  %v3526 = vsel %vm89, %v2481, 0
  %v3529 = vsel %vm89, %v2482, 0
  %v3532 = vsel %vm89, %v2483, 0
  %3534 = vmatprep.subr.mxu0 %v3520
  %3535 = vmatpush1.msra.mxu0 %v3517
  %3536 = vmatprep.subr.mxu0 0.0
  %3537 = vmatpush1.msra.mxu0 0.0
  %3538 = vmatprep.subr.mxu0 0.0
  %3539 = vmatpush1.msra.mxu0 0.0
  %3540 = vmatprep.subr.mxu0 0.0
  %3541 = vmatpush1.msra.mxu0 0.0
  %3542 = vmatprep.subr.mxu0 0.0
  %3543 = vmatpush1.msra.mxu0 0.0
  %3544 = vmatprep.subr.mxu0 0.0
  %3545 = vmatpush1.msra.mxu0 0.0
  %3546 = vmatprep.subr.mxu0 0.0
  %3547 = vmatpush1.msra.mxu0 0.0
  %3548 = vmatprep.subr.mxu0 0.0
  %3549 = vmatpush1.msra.mxu0 0.0
  %3550 = vmatprep.subr.mxu0 0.0
  %3551 = vmatpush1.msra.mxu0 0.0
  %3552 = vmatprep.subr.mxu0 0.0
  %3553 = vmatpush1.msra.mxu0 0.0
  %3554 = vmatprep.subr.mxu0 0.0
  %3555 = vmatpush1.msra.mxu0 0.0
  %3556 = vmatprep.subr.mxu0 0.0
  %3557 = vmatpush1.msra.mxu0 0.0
  %3558 = vmatprep.subr.mxu0 0.0
  %3559 = vmatpush1.msra.mxu0 0.0
  %3560 = vmatprep.subr.mxu0 0.0
  %3561 = vmatpush1.msra.mxu0 0.0
  %3562 = vmatprep.subr.mxu0 0.0
  %3563 = vmatpush1.msra.mxu0 0.0
  %3564 = vmatprep.subr.mxu0 0.0
  %3565 = vmatpush1.msra.mxu0 0.0
  %3566 = vmatprep.subr.mxu0 0.0
  %3567 = vmatpush1.msra.mxu0 0.0
  %3568 = vmatprep.subr.mxu0 0.0
  %3569 = vmatpush1.msra.mxu0 0.0
  %3570 = vmatprep.subr.mxu0 0.0
  %3571 = vmatpush1.msra.mxu0 0.0
  %3572 = vmatprep.subr.mxu0 0.0
  %3573 = vmatpush1.msra.mxu0 0.0
  %3574 = vmatprep.subr.mxu0 0.0
  %3575 = vmatpush1.msra.mxu0 0.0
  %3576 = vmatprep.subr.mxu0 0.0
  %3577 = vmatpush1.msra.mxu0 0.0
  %3578 = vmatprep.subr.mxu0 0.0
  %3579 = vmatpush1.msra.mxu0 0.0
  %3580 = vmatprep.subr.mxu0 0.0
  %3581 = vmatpush1.msra.mxu0 0.0
  %3582 = vmatprep.subr.mxu0 0.0
  %3583 = vmatpush1.msra.mxu0 0.0
  %3584 = vmatprep.subr.mxu0 0.0
  %3585 = vmatpush1.msra.mxu0 0.0
  %3586 = vmatprep.subr.mxu0 0.0
  %3587 = vmatpush1.msra.mxu0 0.0
  %3588 = vmatprep.subr.mxu0 0.0
  %3589 = vmatpush1.msra.mxu0 0.0
  %3590 = vmatprep.subr.mxu0 0.0
  %3591 = vmatpush1.msra.mxu0 0.0
  %3592 = vmatprep.subr.mxu0 0.0
  %3593 = vmatpush1.msra.mxu0 0.0
  %3594 = vmatprep.subr.mxu0 0.0
  %3595 = vmatpush1.msra.mxu0 0.0
  %3596 = vmatprep.subr.mxu0 0.0
  %3597 = vmatpush1.msra.mxu0 0.0
  %3598 = vmatprep.mubr.f32.mxu0 0.0
  %3599 = vmatmul.mubr.f32.gmra.mrb[0].mxu0 %v3514
  %v3600 = vpop.f32.mrb[0].mxu0
  %v3601 = vadd.f32 0.0, %v3600
  %v3602 = vpop.f32.mrb[0].mxu0
  %v3603 = vadd.f32 0.0, %v3602
  %3604 = vdwg.mxu0
  %3605 = vmatprep.subr.mxu0 %v3526
  %3606 = vmatpush1.msra.mxu0 %v3523
  %3607 = vmatprep.subr.mxu0 0.0
  %3608 = vmatpush1.msra.mxu0 0.0
  %3609 = vmatprep.subr.mxu0 0.0
  %3610 = vmatpush1.msra.mxu0 0.0
  %3611 = vmatprep.subr.mxu0 0.0
  %3612 = vmatpush1.msra.mxu0 0.0
  %3613 = vmatprep.subr.mxu0 0.0
  %3614 = vmatpush1.msra.mxu0 0.0
  %3615 = vmatprep.subr.mxu0 0.0
  %3616 = vmatpush1.msra.mxu0 0.0
  %3617 = vmatprep.subr.mxu0 0.0
  %3618 = vmatpush1.msra.mxu0 0.0
  %3619 = vmatprep.subr.mxu0 0.0
  %3620 = vmatpush1.msra.mxu0 0.0
  %3621 = vmatprep.subr.mxu0 0.0
  %3622 = vmatpush1.msra.mxu0 0.0
  %3623 = vmatprep.subr.mxu0 0.0
  %3624 = vmatpush1.msra.mxu0 0.0
  %3625 = vmatprep.subr.mxu0 0.0
  %3626 = vmatpush1.msra.mxu0 0.0
  %3627 = vmatprep.subr.mxu0 0.0
  %3628 = vmatpush1.msra.mxu0 0.0
  %3629 = vmatprep.subr.mxu0 0.0
  %3630 = vmatpush1.msra.mxu0 0.0
  %3631 = vmatprep.subr.mxu0 0.0
  %3632 = vmatpush1.msra.mxu0 0.0
  %3633 = vmatprep.subr.mxu0 0.0
  %3634 = vmatpush1.msra.mxu0 0.0
  %3635 = vmatprep.subr.mxu0 0.0
  %3636 = vmatpush1.msra.mxu0 0.0
  %3637 = vmatprep.subr.mxu0 0.0
  %3638 = vmatpush1.msra.mxu0 0.0
  %3639 = vmatprep.subr.mxu0 0.0
  %3640 = vmatpush1.msra.mxu0 0.0
  %3641 = vmatprep.subr.mxu0 0.0
  %3642 = vmatpush1.msra.mxu0 0.0
  %3643 = vmatprep.subr.mxu0 0.0
  %3644 = vmatpush1.msra.mxu0 0.0
  %3645 = vmatprep.subr.mxu0 0.0
  %3646 = vmatpush1.msra.mxu0 0.0
  %3647 = vmatprep.subr.mxu0 0.0
  %3648 = vmatpush1.msra.mxu0 0.0
  %3649 = vmatprep.subr.mxu0 0.0
  %3650 = vmatpush1.msra.mxu0 0.0
  %3651 = vmatprep.subr.mxu0 0.0
  %3652 = vmatpush1.msra.mxu0 0.0
  %3653 = vmatprep.subr.mxu0 0.0
  %3654 = vmatpush1.msra.mxu0 0.0
  %3655 = vmatprep.subr.mxu0 0.0
  %3656 = vmatpush1.msra.mxu0 0.0
  %3657 = vmatprep.subr.mxu0 0.0
  %3658 = vmatpush1.msra.mxu0 0.0
  %3659 = vmatprep.subr.mxu0 0.0
  %3660 = vmatpush1.msra.mxu0 0.0
  %3661 = vmatprep.subr.mxu0 0.0
  %3662 = vmatpush1.msra.mxu0 0.0
  %3663 = vmatprep.subr.mxu0 0.0
  %3664 = vmatpush1.msra.mxu0 0.0
  %3665 = vmatprep.subr.mxu0 0.0
  %3666 = vmatpush1.msra.mxu0 0.0
  %3667 = vmatprep.subr.mxu0 0.0
  %3668 = vmatpush1.msra.mxu0 0.0
  %3669 = vmatprep.mubr.f32.mxu0 0.0
  %3670 = vmatmul.mubr.f32.gmra.mrb[0].mxu0 %v3514
  %v3671 = vpop.f32.mrb[0].mxu0
  %v3672 = vadd.f32 0.0, %v3671
  %v3673 = vpop.f32.mrb[0].mxu0
  %v3674 = vadd.f32 0.0, %v3673
  %3675 = vdwg.mxu0
  %3676 = vmatprep.subr.mxu0 %v3532
  %3677 = vmatpush1.msra.mxu0 %v3529
  %3678 = vmatprep.subr.mxu0 0.0
  %3679 = vmatpush1.msra.mxu0 0.0
  %3680 = vmatprep.subr.mxu0 0.0
  %3681 = vmatpush1.msra.mxu0 0.0
  %3682 = vmatprep.subr.mxu0 0.0
  %3683 = vmatpush1.msra.mxu0 0.0
  %3684 = vmatprep.subr.mxu0 0.0
  %3685 = vmatpush1.msra.mxu0 0.0
  %3686 = vmatprep.subr.mxu0 0.0
  %3687 = vmatpush1.msra.mxu0 0.0
  %3688 = vmatprep.subr.mxu0 0.0
  %3689 = vmatpush1.msra.mxu0 0.0
  %3690 = vmatprep.subr.mxu0 0.0
  %3691 = vmatpush1.msra.mxu0 0.0
  %3692 = vmatprep.subr.mxu0 0.0
  %3693 = vmatpush1.msra.mxu0 0.0
  %3694 = vmatprep.subr.mxu0 0.0
  %3695 = vmatpush1.msra.mxu0 0.0
  %3696 = vmatprep.subr.mxu0 0.0
  %3697 = vmatpush1.msra.mxu0 0.0
  %3698 = vmatprep.subr.mxu0 0.0
  %3699 = vmatpush1.msra.mxu0 0.0
  %3700 = vmatprep.subr.mxu0 0.0
  %3701 = vmatpush1.msra.mxu0 0.0
  %3702 = vmatprep.subr.mxu0 0.0
  %3703 = vmatpush1.msra.mxu0 0.0
  %3704 = vmatprep.subr.mxu0 0.0
  %3705 = vmatpush1.msra.mxu0 0.0
  %3706 = vmatprep.subr.mxu0 0.0
  %3707 = vmatpush1.msra.mxu0 0.0
  %3708 = vmatprep.subr.mxu0 0.0
  %3709 = vmatpush1.msra.mxu0 0.0
  %3710 = vmatprep.subr.mxu0 0.0
  %3711 = vmatpush1.msra.mxu0 0.0
  %3712 = vmatprep.subr.mxu0 0.0
  %3713 = vmatpush1.msra.mxu0 0.0
  %3714 = vmatprep.subr.mxu0 0.0
  %3715 = vmatpush1.msra.mxu0 0.0
  %3716 = vmatprep.subr.mxu0 0.0
  %3717 = vmatpush1.msra.mxu0 0.0
  %3718 = vmatprep.subr.mxu0 0.0
  %3719 = vmatpush1.msra.mxu0 0.0
  %3720 = vmatprep.subr.mxu0 0.0
  %3721 = vmatpush1.msra.mxu0 0.0
  %3722 = vmatprep.subr.mxu0 0.0
  %3723 = vmatpush1.msra.mxu0 0.0
  %3724 = vmatprep.subr.mxu0 0.0
  %3725 = vmatpush1.msra.mxu0 0.0
  %3726 = vmatprep.subr.mxu0 0.0
  %3727 = vmatpush1.msra.mxu0 0.0
  %3728 = vmatprep.subr.mxu0 0.0
  %3729 = vmatpush1.msra.mxu0 0.0
  %3730 = vmatprep.subr.mxu0 0.0
  %3731 = vmatpush1.msra.mxu0 0.0
  %3732 = vmatprep.subr.mxu0 0.0
  %3733 = vmatpush1.msra.mxu0 0.0
  %3734 = vmatprep.subr.mxu0 0.0
  %3735 = vmatpush1.msra.mxu0 0.0
  %3736 = vmatprep.subr.mxu0 0.0
  %3737 = vmatpush1.msra.mxu0 0.0
  %3738 = vmatprep.subr.mxu0 0.0
  %3739 = vmatpush1.msra.mxu0 0.0
  %3740 = vmatprep.mubr.f32.mxu0 0.0
  %3741 = vmatmul.mubr.f32.gmra.mrb[0].mxu0 %v3514
  %v3742 = vpop.f32.mrb[0].mxu0
  %v3743 = vadd.f32 0.0, %v3742
  %v3744 = vpop.f32.mrb[0].mxu0
  %v3745 = vadd.f32 0.0, %v3744
  %3746 = vdwg.mxu0
  %v3747 = vadd.f32 %v3505, %v3601
  %v3748 = vadd.f32 %v3506, %v3603
  %v3749 = vadd.f32 %v3507, %v3672
  %v3750 = vadd.f32 %v3508, %v3674
  %v3751 = vadd.f32 %v3509, %v3743
  %v3752 = vadd.f32 %v3510, %v3745
  %3753 = vrot.lane.b32.xlu0 %v2478, 127
  %v3754 = vpop.permute.xlu0 %3753
  %3755 = vrot.lane.b32.xlu0 %v2479, 127
  %v3756 = vpop.permute.xlu0 %3755
  %3757 = vrot.lane.b32.xlu0 %v2480, 127
  %v3758 = vpop.permute.xlu0 %3757
  %3759 = vrot.lane.b32.xlu0 %v2481, 127
  %v3760 = vpop.permute.xlu0 %3759
  %3761 = vrot.lane.b32.xlu0 %v2482, 127
  %v3762 = vpop.permute.xlu0 %3761
  %3763 = vrot.lane.b32.xlu0 %v2483, 127
  %v3764 = vpop.permute.xlu0 %3763
  %v3765 = vsel %vm1325, %v3762, %v3764
  %v3766 = vsel %vm1325, %v3760, %v3762
  %v3767 = vsel %vm1325, %v3758, %v3760
  %v3768 = vsel %vm1325, %v3756, %v3758
  %v3769 = vsel %vm1325, %v3754, %v3756
  %v3770 = vsel %vm1325, %v3764, %v3754
  %s3771 = scalar_lea.vmem %s5, 20
  %v3772 = vld [vmem:[%s3771] sm:$0xf]
  %v3774 = vsel %vm85, %v3772, 0
  %v3777 = vsel %vm89, %v3769, 0
  %v3780 = vsel %vm89, %v3768, 0
  %v3783 = vsel %vm89, %v3767, 0
  %v3786 = vsel %vm89, %v3766, 0
  %v3789 = vsel %vm89, %v3765, 0
  %v3792 = vsel %vm89, %v3770, 0
  %3794 = vmatprep.subr.mxu0 %v3780
  %3795 = vmatpush1.msra.mxu0 %v3777
  %3796 = vmatprep.subr.mxu0 0.0
  %3797 = vmatpush1.msra.mxu0 0.0
  %3798 = vmatprep.subr.mxu0 0.0
  %3799 = vmatpush1.msra.mxu0 0.0
  %3800 = vmatprep.subr.mxu0 0.0
  %3801 = vmatpush1.msra.mxu0 0.0
  %3802 = vmatprep.subr.mxu0 0.0
  %3803 = vmatpush1.msra.mxu0 0.0
  %3804 = vmatprep.subr.mxu0 0.0
  %3805 = vmatpush1.msra.mxu0 0.0
  %3806 = vmatprep.subr.mxu0 0.0
  %3807 = vmatpush1.msra.mxu0 0.0
  %3808 = vmatprep.subr.mxu0 0.0
  %3809 = vmatpush1.msra.mxu0 0.0
  %3810 = vmatprep.subr.mxu0 0.0
  %3811 = vmatpush1.msra.mxu0 0.0
  %3812 = vmatprep.subr.mxu0 0.0
  %3813 = vmatpush1.msra.mxu0 0.0
  %3814 = vmatprep.subr.mxu0 0.0
  %3815 = vmatpush1.msra.mxu0 0.0
  %3816 = vmatprep.subr.mxu0 0.0
  %3817 = vmatpush1.msra.mxu0 0.0
  %3818 = vmatprep.subr.mxu0 0.0
  %3819 = vmatpush1.msra.mxu0 0.0
  %3820 = vmatprep.subr.mxu0 0.0
  %3821 = vmatpush1.msra.mxu0 0.0
  %3822 = vmatprep.subr.mxu0 0.0
  %3823 = vmatpush1.msra.mxu0 0.0
  %3824 = vmatprep.subr.mxu0 0.0
  %3825 = vmatpush1.msra.mxu0 0.0
  %3826 = vmatprep.subr.mxu0 0.0
  %3827 = vmatpush1.msra.mxu0 0.0
  %3828 = vmatprep.subr.mxu0 0.0
  %3829 = vmatpush1.msra.mxu0 0.0
  %3830 = vmatprep.subr.mxu0 0.0
  %3831 = vmatpush1.msra.mxu0 0.0
  %3832 = vmatprep.subr.mxu0 0.0
  %3833 = vmatpush1.msra.mxu0 0.0
  %3834 = vmatprep.subr.mxu0 0.0
  %3835 = vmatpush1.msra.mxu0 0.0
  %3836 = vmatprep.subr.mxu0 0.0
  %3837 = vmatpush1.msra.mxu0 0.0
  %3838 = vmatprep.subr.mxu0 0.0
  %3839 = vmatpush1.msra.mxu0 0.0
  %3840 = vmatprep.subr.mxu0 0.0
  %3841 = vmatpush1.msra.mxu0 0.0
  %3842 = vmatprep.subr.mxu0 0.0
  %3843 = vmatpush1.msra.mxu0 0.0
  %3844 = vmatprep.subr.mxu0 0.0
  %3845 = vmatpush1.msra.mxu0 0.0
  %3846 = vmatprep.subr.mxu0 0.0
  %3847 = vmatpush1.msra.mxu0 0.0
  %3848 = vmatprep.subr.mxu0 0.0
  %3849 = vmatpush1.msra.mxu0 0.0
  %3850 = vmatprep.subr.mxu0 0.0
  %3851 = vmatpush1.msra.mxu0 0.0
  %3852 = vmatprep.subr.mxu0 0.0
  %3853 = vmatpush1.msra.mxu0 0.0
  %3854 = vmatprep.subr.mxu0 0.0
  %3855 = vmatpush1.msra.mxu0 0.0
  %3856 = vmatprep.subr.mxu0 0.0
  %3857 = vmatpush1.msra.mxu0 0.0
  %3858 = vmatprep.mubr.f32.mxu0 0.0
  %3859 = vmatmul.mubr.f32.gmra.mrb[0].mxu0 %v3774
  %v3860 = vpop.f32.mrb[0].mxu0
  %v3861 = vadd.f32 0.0, %v3860
  %v3862 = vpop.f32.mrb[0].mxu0
  %v3863 = vadd.f32 0.0, %v3862
  %3864 = vdwg.mxu0
  %3865 = vmatprep.subr.mxu0 %v3786
  %3866 = vmatpush1.msra.mxu0 %v3783
  %3867 = vmatprep.subr.mxu0 0.0
  %3868 = vmatpush1.msra.mxu0 0.0
  %3869 = vmatprep.subr.mxu0 0.0
  %3870 = vmatpush1.msra.mxu0 0.0
  %3871 = vmatprep.subr.mxu0 0.0
  %3872 = vmatpush1.msra.mxu0 0.0
  %3873 = vmatprep.subr.mxu0 0.0
  %3874 = vmatpush1.msra.mxu0 0.0
  %3875 = vmatprep.subr.mxu0 0.0
  %3876 = vmatpush1.msra.mxu0 0.0
  %3877 = vmatprep.subr.mxu0 0.0
  %3878 = vmatpush1.msra.mxu0 0.0
  %3879 = vmatprep.subr.mxu0 0.0
  %3880 = vmatpush1.msra.mxu0 0.0
  %3881 = vmatprep.subr.mxu0 0.0
  %3882 = vmatpush1.msra.mxu0 0.0
  %3883 = vmatprep.subr.mxu0 0.0
  %3884 = vmatpush1.msra.mxu0 0.0
  %3885 = vmatprep.subr.mxu0 0.0
  %3886 = vmatpush1.msra.mxu0 0.0
  %3887 = vmatprep.subr.mxu0 0.0
  %3888 = vmatpush1.msra.mxu0 0.0
  %3889 = vmatprep.subr.mxu0 0.0
  %3890 = vmatpush1.msra.mxu0 0.0
  %3891 = vmatprep.subr.mxu0 0.0
  %3892 = vmatpush1.msra.mxu0 0.0
  %3893 = vmatprep.subr.mxu0 0.0
  %3894 = vmatpush1.msra.mxu0 0.0
  %3895 = vmatprep.subr.mxu0 0.0
  %3896 = vmatpush1.msra.mxu0 0.0
  %3897 = vmatprep.subr.mxu0 0.0
  %3898 = vmatpush1.msra.mxu0 0.0
  %3899 = vmatprep.subr.mxu0 0.0
  %3900 = vmatpush1.msra.mxu0 0.0
  %3901 = vmatprep.subr.mxu0 0.0
  %3902 = vmatpush1.msra.mxu0 0.0
  %3903 = vmatprep.subr.mxu0 0.0
  %3904 = vmatpush1.msra.mxu0 0.0
  %3905 = vmatprep.subr.mxu0 0.0
  %3906 = vmatpush1.msra.mxu0 0.0
  %3907 = vmatprep.subr.mxu0 0.0
  %3908 = vmatpush1.msra.mxu0 0.0
  %3909 = vmatprep.subr.mxu0 0.0
  %3910 = vmatpush1.msra.mxu0 0.0
  %3911 = vmatprep.subr.mxu0 0.0
  %3912 = vmatpush1.msra.mxu0 0.0
  %3913 = vmatprep.subr.mxu0 0.0
  %3914 = vmatpush1.msra.mxu0 0.0
  %3915 = vmatprep.subr.mxu0 0.0
  %3916 = vmatpush1.msra.mxu0 0.0
  %3917 = vmatprep.subr.mxu0 0.0
  %3918 = vmatpush1.msra.mxu0 0.0
  %3919 = vmatprep.subr.mxu0 0.0
  %3920 = vmatpush1.msra.mxu0 0.0
  %3921 = vmatprep.subr.mxu0 0.0
  %3922 = vmatpush1.msra.mxu0 0.0
  %3923 = vmatprep.subr.mxu0 0.0
  %3924 = vmatpush1.msra.mxu0 0.0
  %3925 = vmatprep.subr.mxu0 0.0
  %3926 = vmatpush1.msra.mxu0 0.0
  %3927 = vmatprep.subr.mxu0 0.0
  %3928 = vmatpush1.msra.mxu0 0.0
  %3929 = vmatprep.mubr.f32.mxu0 0.0
  %3930 = vmatmul.mubr.f32.gmra.mrb[0].mxu0 %v3774
  %v3931 = vpop.f32.mrb[0].mxu0
  %v3932 = vadd.f32 0.0, %v3931
  %v3933 = vpop.f32.mrb[0].mxu0
  %v3934 = vadd.f32 0.0, %v3933
  %3935 = vdwg.mxu0
  %3936 = vmatprep.subr.mxu0 %v3792
  %3937 = vmatpush1.msra.mxu0 %v3789
  %3938 = vmatprep.subr.mxu0 0.0
  %3939 = vmatpush1.msra.mxu0 0.0
  %3940 = vmatprep.subr.mxu0 0.0
  %3941 = vmatpush1.msra.mxu0 0.0
  %3942 = vmatprep.subr.mxu0 0.0
  %3943 = vmatpush1.msra.mxu0 0.0
  %3944 = vmatprep.subr.mxu0 0.0
  %3945 = vmatpush1.msra.mxu0 0.0
  %3946 = vmatprep.subr.mxu0 0.0
  %3947 = vmatpush1.msra.mxu0 0.0
  %3948 = vmatprep.subr.mxu0 0.0
  %3949 = vmatpush1.msra.mxu0 0.0
  %3950 = vmatprep.subr.mxu0 0.0
  %3951 = vmatpush1.msra.mxu0 0.0
  %3952 = vmatprep.subr.mxu0 0.0
  %3953 = vmatpush1.msra.mxu0 0.0
  %3954 = vmatprep.subr.mxu0 0.0
  %3955 = vmatpush1.msra.mxu0 0.0
  %3956 = vmatprep.subr.mxu0 0.0
  %3957 = vmatpush1.msra.mxu0 0.0
  %3958 = vmatprep.subr.mxu0 0.0
  %3959 = vmatpush1.msra.mxu0 0.0
  %3960 = vmatprep.subr.mxu0 0.0
  %3961 = vmatpush1.msra.mxu0 0.0
  %3962 = vmatprep.subr.mxu0 0.0
  %3963 = vmatpush1.msra.mxu0 0.0
  %3964 = vmatprep.subr.mxu0 0.0
  %3965 = vmatpush1.msra.mxu0 0.0
  %3966 = vmatprep.subr.mxu0 0.0
  %3967 = vmatpush1.msra.mxu0 0.0
  %3968 = vmatprep.subr.mxu0 0.0
  %3969 = vmatpush1.msra.mxu0 0.0
  %3970 = vmatprep.subr.mxu0 0.0
  %3971 = vmatpush1.msra.mxu0 0.0
  %3972 = vmatprep.subr.mxu0 0.0
  %3973 = vmatpush1.msra.mxu0 0.0
  %3974 = vmatprep.subr.mxu0 0.0
  %3975 = vmatpush1.msra.mxu0 0.0
  %3976 = vmatprep.subr.mxu0 0.0
  %3977 = vmatpush1.msra.mxu0 0.0
  %3978 = vmatprep.subr.mxu0 0.0
  %3979 = vmatpush1.msra.mxu0 0.0
  %3980 = vmatprep.subr.mxu0 0.0
  %3981 = vmatpush1.msra.mxu0 0.0
  %3982 = vmatprep.subr.mxu0 0.0
  %3983 = vmatpush1.msra.mxu0 0.0
  %3984 = vmatprep.subr.mxu0 0.0
  %3985 = vmatpush1.msra.mxu0 0.0
  %3986 = vmatprep.subr.mxu0 0.0
  %3987 = vmatpush1.msra.mxu0 0.0
  %3988 = vmatprep.subr.mxu0 0.0
  %3989 = vmatpush1.msra.mxu0 0.0
  %3990 = vmatprep.subr.mxu0 0.0
  %3991 = vmatpush1.msra.mxu0 0.0
  %3992 = vmatprep.subr.mxu0 0.0
  %3993 = vmatpush1.msra.mxu0 0.0
  %3994 = vmatprep.subr.mxu0 0.0
  %3995 = vmatpush1.msra.mxu0 0.0
  %3996 = vmatprep.subr.mxu0 0.0
  %3997 = vmatpush1.msra.mxu0 0.0
  %3998 = vmatprep.subr.mxu0 0.0
  %3999 = vmatpush1.msra.mxu0 0.0
  %4000 = vmatprep.mubr.f32.mxu0 0.0
  %4001 = vmatmul.mubr.f32.gmra.mrb[0].mxu0 %v3774
  %v4002 = vpop.f32.mrb[0].mxu0
  %v4003 = vadd.f32 0.0, %v4002
  %v4004 = vpop.f32.mrb[0].mxu0
  %v4005 = vadd.f32 0.0, %v4004
  %4006 = vdwg.mxu0
  %v4007 = vadd.f32 %v3747, %v3861
  %v4008 = vadd.f32 %v3748, %v3863
  %v4009 = vadd.f32 %v3749, %v3932
  %v4010 = vadd.f32 %v3750, %v3934
  %v4011 = vadd.f32 %v3751, %v4003
  %v4012 = vadd.f32 %v3752, %v4005
  %4013 = vrot.lane.b32.xlu0 %v2478, 111
  %v4014 = vpop.permute.xlu0 %4013
  %4015 = vrot.lane.b32.xlu0 %v2479, 111
  %v4016 = vpop.permute.xlu0 %4015
  %4017 = vrot.lane.b32.xlu0 %v2480, 111
  %v4018 = vpop.permute.xlu0 %4017
  %4019 = vrot.lane.b32.xlu0 %v2481, 111
  %v4020 = vpop.permute.xlu0 %4019
  %4021 = vrot.lane.b32.xlu0 %v2482, 111
  %v4022 = vpop.permute.xlu0 %4021
  %4023 = vrot.lane.b32.xlu0 %v2483, 111
  %v4024 = vpop.permute.xlu0 %4023
  %v4025 = vsel %vm1586, %v4022, %v4024
  %v4026 = vsel %vm1586, %v4020, %v4022
  %v4027 = vsel %vm1586, %v4018, %v4020
  %v4028 = vsel %vm1586, %v4016, %v4018
  %v4029 = vsel %vm1586, %v4014, %v4016
  %v4030 = vsel %vm1586, %v4024, %v4014
  %s4031 = scalar_lea.vmem %s5, 24
  %v4032 = vld [vmem:[%s4031] sm:$0xf]
  %v4034 = vsel %vm85, %v4032, 0
  %v4037 = vsel %vm89, %v4029, 0
  %v4040 = vsel %vm89, %v4028, 0
  %v4043 = vsel %vm89, %v4027, 0
  %v4046 = vsel %vm89, %v4026, 0
  %v4049 = vsel %vm89, %v4025, 0
  %v4052 = vsel %vm89, %v4030, 0
  %4054 = vmatprep.subr.mxu0 %v4040
  %4055 = vmatpush1.msra.mxu0 %v4037
  %4056 = vmatprep.subr.mxu0 0.0
  %4057 = vmatpush1.msra.mxu0 0.0
  %4058 = vmatprep.subr.mxu0 0.0
  %4059 = vmatpush1.msra.mxu0 0.0
  %4060 = vmatprep.subr.mxu0 0.0
  %4061 = vmatpush1.msra.mxu0 0.0
  %4062 = vmatprep.subr.mxu0 0.0
  %4063 = vmatpush1.msra.mxu0 0.0
  %4064 = vmatprep.subr.mxu0 0.0
  %4065 = vmatpush1.msra.mxu0 0.0
  %4066 = vmatprep.subr.mxu0 0.0
  %4067 = vmatpush1.msra.mxu0 0.0
  %4068 = vmatprep.subr.mxu0 0.0
  %4069 = vmatpush1.msra.mxu0 0.0
  %4070 = vmatprep.subr.mxu0 0.0
  %4071 = vmatpush1.msra.mxu0 0.0
  %4072 = vmatprep.subr.mxu0 0.0
  %4073 = vmatpush1.msra.mxu0 0.0
  %4074 = vmatprep.subr.mxu0 0.0
  %4075 = vmatpush1.msra.mxu0 0.0
  %4076 = vmatprep.subr.mxu0 0.0
  %4077 = vmatpush1.msra.mxu0 0.0
  %4078 = vmatprep.subr.mxu0 0.0
  %4079 = vmatpush1.msra.mxu0 0.0
  %4080 = vmatprep.subr.mxu0 0.0
  %4081 = vmatpush1.msra.mxu0 0.0
  %4082 = vmatprep.subr.mxu0 0.0
  %4083 = vmatpush1.msra.mxu0 0.0
  %4084 = vmatprep.subr.mxu0 0.0
  %4085 = vmatpush1.msra.mxu0 0.0
  %4086 = vmatprep.subr.mxu0 0.0
  %4087 = vmatpush1.msra.mxu0 0.0
  %4088 = vmatprep.subr.mxu0 0.0
  %4089 = vmatpush1.msra.mxu0 0.0
  %4090 = vmatprep.subr.mxu0 0.0
  %4091 = vmatpush1.msra.mxu0 0.0
  %4092 = vmatprep.subr.mxu0 0.0
  %4093 = vmatpush1.msra.mxu0 0.0
  %4094 = vmatprep.subr.mxu0 0.0
  %4095 = vmatpush1.msra.mxu0 0.0
  %4096 = vmatprep.subr.mxu0 0.0
  %4097 = vmatpush1.msra.mxu0 0.0
  %4098 = vmatprep.subr.mxu0 0.0
  %4099 = vmatpush1.msra.mxu0 0.0
  %4100 = vmatprep.subr.mxu0 0.0
  %4101 = vmatpush1.msra.mxu0 0.0
  %4102 = vmatprep.subr.mxu0 0.0
  %4103 = vmatpush1.msra.mxu0 0.0
  %4104 = vmatprep.subr.mxu0 0.0
  %4105 = vmatpush1.msra.mxu0 0.0
  %4106 = vmatprep.subr.mxu0 0.0
  %4107 = vmatpush1.msra.mxu0 0.0
  %4108 = vmatprep.subr.mxu0 0.0
  %4109 = vmatpush1.msra.mxu0 0.0
  %4110 = vmatprep.subr.mxu0 0.0
  %4111 = vmatpush1.msra.mxu0 0.0
  %4112 = vmatprep.subr.mxu0 0.0
  %4113 = vmatpush1.msra.mxu0 0.0
  %4114 = vmatprep.subr.mxu0 0.0
  %4115 = vmatpush1.msra.mxu0 0.0
  %4116 = vmatprep.subr.mxu0 0.0
  %4117 = vmatpush1.msra.mxu0 0.0
  %4118 = vmatprep.mubr.f32.mxu0 0.0
  %4119 = vmatmul.mubr.f32.gmra.mrb[0].mxu0 %v4034
  %v4120 = vpop.f32.mrb[0].mxu0
  %v4121 = vadd.f32 0.0, %v4120
  %v4122 = vpop.f32.mrb[0].mxu0
  %v4123 = vadd.f32 0.0, %v4122
  %4124 = vdwg.mxu0
  %4125 = vmatprep.subr.mxu0 %v4046
  %4126 = vmatpush1.msra.mxu0 %v4043
  %4127 = vmatprep.subr.mxu0 0.0
  %4128 = vmatpush1.msra.mxu0 0.0
  %4129 = vmatprep.subr.mxu0 0.0
  %4130 = vmatpush1.msra.mxu0 0.0
  %4131 = vmatprep.subr.mxu0 0.0
  %4132 = vmatpush1.msra.mxu0 0.0
  %4133 = vmatprep.subr.mxu0 0.0
  %4134 = vmatpush1.msra.mxu0 0.0
  %4135 = vmatprep.subr.mxu0 0.0
  %4136 = vmatpush1.msra.mxu0 0.0
  %4137 = vmatprep.subr.mxu0 0.0
  %4138 = vmatpush1.msra.mxu0 0.0
  %4139 = vmatprep.subr.mxu0 0.0
  %4140 = vmatpush1.msra.mxu0 0.0
  %4141 = vmatprep.subr.mxu0 0.0
  %4142 = vmatpush1.msra.mxu0 0.0
  %4143 = vmatprep.subr.mxu0 0.0
  %4144 = vmatpush1.msra.mxu0 0.0
  %4145 = vmatprep.subr.mxu0 0.0
  %4146 = vmatpush1.msra.mxu0 0.0
  %4147 = vmatprep.subr.mxu0 0.0
  %4148 = vmatpush1.msra.mxu0 0.0
  %4149 = vmatprep.subr.mxu0 0.0
  %4150 = vmatpush1.msra.mxu0 0.0
  %4151 = vmatprep.subr.mxu0 0.0
  %4152 = vmatpush1.msra.mxu0 0.0
  %4153 = vmatprep.subr.mxu0 0.0
  %4154 = vmatpush1.msra.mxu0 0.0
  %4155 = vmatprep.subr.mxu0 0.0
  %4156 = vmatpush1.msra.mxu0 0.0
  %4157 = vmatprep.subr.mxu0 0.0
  %4158 = vmatpush1.msra.mxu0 0.0
  %4159 = vmatprep.subr.mxu0 0.0
  %4160 = vmatpush1.msra.mxu0 0.0
  %4161 = vmatprep.subr.mxu0 0.0
  %4162 = vmatpush1.msra.mxu0 0.0
  %4163 = vmatprep.subr.mxu0 0.0
  %4164 = vmatpush1.msra.mxu0 0.0
  %4165 = vmatprep.subr.mxu0 0.0
  %4166 = vmatpush1.msra.mxu0 0.0
  %4167 = vmatprep.subr.mxu0 0.0
  %4168 = vmatpush1.msra.mxu0 0.0
  %4169 = vmatprep.subr.mxu0 0.0
  %4170 = vmatpush1.msra.mxu0 0.0
  %4171 = vmatprep.subr.mxu0 0.0
  %4172 = vmatpush1.msra.mxu0 0.0
  %4173 = vmatprep.subr.mxu0 0.0
  %4174 = vmatpush1.msra.mxu0 0.0
  %4175 = vmatprep.subr.mxu0 0.0
  %4176 = vmatpush1.msra.mxu0 0.0
  %4177 = vmatprep.subr.mxu0 0.0
  %4178 = vmatpush1.msra.mxu0 0.0
  %4179 = vmatprep.subr.mxu0 0.0
  %4180 = vmatpush1.msra.mxu0 0.0
  %4181 = vmatprep.subr.mxu0 0.0
  %4182 = vmatpush1.msra.mxu0 0.0
  %4183 = vmatprep.subr.mxu0 0.0
  %4184 = vmatpush1.msra.mxu0 0.0
  %4185 = vmatprep.subr.mxu0 0.0
  %4186 = vmatpush1.msra.mxu0 0.0
  %4187 = vmatprep.subr.mxu0 0.0
  %4188 = vmatpush1.msra.mxu0 0.0
  %4189 = vmatprep.mubr.f32.mxu0 0.0
  %4190 = vmatmul.mubr.f32.gmra.mrb[0].mxu0 %v4034
  %v4191 = vpop.f32.mrb[0].mxu0
  %v4192 = vadd.f32 0.0, %v4191
  %v4193 = vpop.f32.mrb[0].mxu0
  %v4194 = vadd.f32 0.0, %v4193
  %4195 = vdwg.mxu0
  %4196 = vmatprep.subr.mxu0 %v4052
  %4197 = vmatpush1.msra.mxu0 %v4049
  %4198 = vmatprep.subr.mxu0 0.0
  %4199 = vmatpush1.msra.mxu0 0.0
  %4200 = vmatprep.subr.mxu0 0.0
  %4201 = vmatpush1.msra.mxu0 0.0
  %4202 = vmatprep.subr.mxu0 0.0
  %4203 = vmatpush1.msra.mxu0 0.0
  %4204 = vmatprep.subr.mxu0 0.0
  %4205 = vmatpush1.msra.mxu0 0.0
  %4206 = vmatprep.subr.mxu0 0.0
  %4207 = vmatpush1.msra.mxu0 0.0
  %4208 = vmatprep.subr.mxu0 0.0
  %4209 = vmatpush1.msra.mxu0 0.0
  %4210 = vmatprep.subr.mxu0 0.0
  %4211 = vmatpush1.msra.mxu0 0.0
  %4212 = vmatprep.subr.mxu0 0.0
  %4213 = vmatpush1.msra.mxu0 0.0
  %4214 = vmatprep.subr.mxu0 0.0
  %4215 = vmatpush1.msra.mxu0 0.0
  %4216 = vmatprep.subr.mxu0 0.0
  %4217 = vmatpush1.msra.mxu0 0.0
  %4218 = vmatprep.subr.mxu0 0.0
  %4219 = vmatpush1.msra.mxu0 0.0
  %4220 = vmatprep.subr.mxu0 0.0
  %4221 = vmatpush1.msra.mxu0 0.0
  %4222 = vmatprep.subr.mxu0 0.0
  %4223 = vmatpush1.msra.mxu0 0.0
  %4224 = vmatprep.subr.mxu0 0.0
  %4225 = vmatpush1.msra.mxu0 0.0
  %4226 = vmatprep.subr.mxu0 0.0
  %4227 = vmatpush1.msra.mxu0 0.0
  %4228 = vmatprep.subr.mxu0 0.0
  %4229 = vmatpush1.msra.mxu0 0.0
  %4230 = vmatprep.subr.mxu0 0.0
  %4231 = vmatpush1.msra.mxu0 0.0
  %4232 = vmatprep.subr.mxu0 0.0
  %4233 = vmatpush1.msra.mxu0 0.0
  %4234 = vmatprep.subr.mxu0 0.0
  %4235 = vmatpush1.msra.mxu0 0.0
  %4236 = vmatprep.subr.mxu0 0.0
  %4237 = vmatpush1.msra.mxu0 0.0
  %4238 = vmatprep.subr.mxu0 0.0
  %4239 = vmatpush1.msra.mxu0 0.0
  %4240 = vmatprep.subr.mxu0 0.0
  %4241 = vmatpush1.msra.mxu0 0.0
  %4242 = vmatprep.subr.mxu0 0.0
  %4243 = vmatpush1.msra.mxu0 0.0
  %4244 = vmatprep.subr.mxu0 0.0
  %4245 = vmatpush1.msra.mxu0 0.0
  %4246 = vmatprep.subr.mxu0 0.0
  %4247 = vmatpush1.msra.mxu0 0.0
  %4248 = vmatprep.subr.mxu0 0.0
  %4249 = vmatpush1.msra.mxu0 0.0
  %4250 = vmatprep.subr.mxu0 0.0
  %4251 = vmatpush1.msra.mxu0 0.0
  %4252 = vmatprep.subr.mxu0 0.0
  %4253 = vmatpush1.msra.mxu0 0.0
  %4254 = vmatprep.subr.mxu0 0.0
  %4255 = vmatpush1.msra.mxu0 0.0
  %4256 = vmatprep.subr.mxu0 0.0
  %4257 = vmatpush1.msra.mxu0 0.0
  %4258 = vmatprep.subr.mxu0 0.0
  %4259 = vmatpush1.msra.mxu0 0.0
  %4260 = vmatprep.mubr.f32.mxu0 0.0
  %4261 = vmatmul.mubr.f32.gmra.mrb[0].mxu0 %v4034
  %v4262 = vpop.f32.mrb[0].mxu0
  %v4263 = vadd.f32 0.0, %v4262
  %v4264 = vpop.f32.mrb[0].mxu0
  %v4265 = vadd.f32 0.0, %v4264
  %4266 = vdwg.mxu0
  %v4267 = vadd.f32 %v4007, %v4121
  %v4268 = vadd.f32 %v4008, %v4123
  %v4269 = vadd.f32 %v4009, %v4192
  %v4270 = vadd.f32 %v4010, %v4194
  %v4271 = vadd.f32 %v4011, %v4263
  %v4272 = vadd.f32 %v4012, %v4265
  %4273 = vrot.lane.b32.xlu0 %v2478, 110
  %v4274 = vpop.permute.xlu0 %4273
  %4275 = vrot.lane.b32.xlu0 %v2479, 110
  %v4276 = vpop.permute.xlu0 %4275
  %4277 = vrot.lane.b32.xlu0 %v2480, 110
  %v4278 = vpop.permute.xlu0 %4277
  %4279 = vrot.lane.b32.xlu0 %v2481, 110
  %v4280 = vpop.permute.xlu0 %4279
  %4281 = vrot.lane.b32.xlu0 %v2482, 110
  %v4282 = vpop.permute.xlu0 %4281
  %4283 = vrot.lane.b32.xlu0 %v2483, 110
  %v4284 = vpop.permute.xlu0 %4283
  %v4285 = vsel %vm1847, %v4282, %v4284
  %v4286 = vsel %vm1847, %v4280, %v4282
  %v4287 = vsel %vm1847, %v4278, %v4280
  %v4288 = vsel %vm1847, %v4276, %v4278
  %v4289 = vsel %vm1847, %v4274, %v4276
  %v4290 = vsel %vm1847, %v4284, %v4274
  %s4291 = scalar_lea.vmem %s5, 28
  %v4292 = vld [vmem:[%s4291] sm:$0xf]
  %v4294 = vsel %vm85, %v4292, 0
  %v4297 = vsel %vm89, %v4289, 0
  %v4300 = vsel %vm89, %v4288, 0
  %v4303 = vsel %vm89, %v4287, 0
  %v4306 = vsel %vm89, %v4286, 0
  %v4309 = vsel %vm89, %v4285, 0
  %v4312 = vsel %vm89, %v4290, 0
  %4314 = vmatprep.subr.mxu0 %v4300
  %4315 = vmatpush1.msra.mxu0 %v4297
  %4316 = vmatprep.subr.mxu0 0.0
  %4317 = vmatpush1.msra.mxu0 0.0
  %4318 = vmatprep.subr.mxu0 0.0
  %4319 = vmatpush1.msra.mxu0 0.0
  %4320 = vmatprep.subr.mxu0 0.0
  %4321 = vmatpush1.msra.mxu0 0.0
  %4322 = vmatprep.subr.mxu0 0.0
  %4323 = vmatpush1.msra.mxu0 0.0
  %4324 = vmatprep.subr.mxu0 0.0
  %4325 = vmatpush1.msra.mxu0 0.0
  %4326 = vmatprep.subr.mxu0 0.0
  %4327 = vmatpush1.msra.mxu0 0.0
  %4328 = vmatprep.subr.mxu0 0.0
  %4329 = vmatpush1.msra.mxu0 0.0
  %4330 = vmatprep.subr.mxu0 0.0
  %4331 = vmatpush1.msra.mxu0 0.0
  %4332 = vmatprep.subr.mxu0 0.0
  %4333 = vmatpush1.msra.mxu0 0.0
  %4334 = vmatprep.subr.mxu0 0.0
  %4335 = vmatpush1.msra.mxu0 0.0
  %4336 = vmatprep.subr.mxu0 0.0
  %4337 = vmatpush1.msra.mxu0 0.0
  %4338 = vmatprep.subr.mxu0 0.0
  %4339 = vmatpush1.msra.mxu0 0.0
  %4340 = vmatprep.subr.mxu0 0.0
  %4341 = vmatpush1.msra.mxu0 0.0
  %4342 = vmatprep.subr.mxu0 0.0
  %4343 = vmatpush1.msra.mxu0 0.0
  %4344 = vmatprep.subr.mxu0 0.0
  %4345 = vmatpush1.msra.mxu0 0.0
  %4346 = vmatprep.subr.mxu0 0.0
  %4347 = vmatpush1.msra.mxu0 0.0
  %4348 = vmatprep.subr.mxu0 0.0
  %4349 = vmatpush1.msra.mxu0 0.0
  %4350 = vmatprep.subr.mxu0 0.0
  %4351 = vmatpush1.msra.mxu0 0.0
  %4352 = vmatprep.subr.mxu0 0.0
  %4353 = vmatpush1.msra.mxu0 0.0
  %4354 = vmatprep.subr.mxu0 0.0
  %4355 = vmatpush1.msra.mxu0 0.0
  %4356 = vmatprep.subr.mxu0 0.0
  %4357 = vmatpush1.msra.mxu0 0.0
  %4358 = vmatprep.subr.mxu0 0.0
  %4359 = vmatpush1.msra.mxu0 0.0
  %4360 = vmatprep.subr.mxu0 0.0
  %4361 = vmatpush1.msra.mxu0 0.0
  %4362 = vmatprep.subr.mxu0 0.0
  %4363 = vmatpush1.msra.mxu0 0.0
  %4364 = vmatprep.subr.mxu0 0.0
  %4365 = vmatpush1.msra.mxu0 0.0
  %4366 = vmatprep.subr.mxu0 0.0
  %4367 = vmatpush1.msra.mxu0 0.0
  %4368 = vmatprep.subr.mxu0 0.0
  %4369 = vmatpush1.msra.mxu0 0.0
  %4370 = vmatprep.subr.mxu0 0.0
  %4371 = vmatpush1.msra.mxu0 0.0
  %4372 = vmatprep.subr.mxu0 0.0
  %4373 = vmatpush1.msra.mxu0 0.0
  %4374 = vmatprep.subr.mxu0 0.0
  %4375 = vmatpush1.msra.mxu0 0.0
  %4376 = vmatprep.subr.mxu0 0.0
  %4377 = vmatpush1.msra.mxu0 0.0
  %4378 = vmatprep.mubr.f32.mxu0 0.0
  %4379 = vmatmul.mubr.f32.gmra.mrb[0].mxu0 %v4294
  %v4380 = vpop.f32.mrb[0].mxu0
  %v4381 = vadd.f32 0.0, %v4380
  %v4382 = vpop.f32.mrb[0].mxu0
  %v4383 = vadd.f32 0.0, %v4382
  %4384 = vdwg.mxu0
  %4385 = vmatprep.subr.mxu0 %v4306
  %4386 = vmatpush1.msra.mxu0 %v4303
  %4387 = vmatprep.subr.mxu0 0.0
  %4388 = vmatpush1.msra.mxu0 0.0
  %4389 = vmatprep.subr.mxu0 0.0
  %4390 = vmatpush1.msra.mxu0 0.0
  %4391 = vmatprep.subr.mxu0 0.0
  %4392 = vmatpush1.msra.mxu0 0.0
  %4393 = vmatprep.subr.mxu0 0.0
  %4394 = vmatpush1.msra.mxu0 0.0
  %4395 = vmatprep.subr.mxu0 0.0
  %4396 = vmatpush1.msra.mxu0 0.0
  %4397 = vmatprep.subr.mxu0 0.0
  %4398 = vmatpush1.msra.mxu0 0.0
  %4399 = vmatprep.subr.mxu0 0.0
  %4400 = vmatpush1.msra.mxu0 0.0
  %4401 = vmatprep.subr.mxu0 0.0
  %4402 = vmatpush1.msra.mxu0 0.0
  %4403 = vmatprep.subr.mxu0 0.0
  %4404 = vmatpush1.msra.mxu0 0.0
  %4405 = vmatprep.subr.mxu0 0.0
  %4406 = vmatpush1.msra.mxu0 0.0
  %4407 = vmatprep.subr.mxu0 0.0
  %4408 = vmatpush1.msra.mxu0 0.0
  %4409 = vmatprep.subr.mxu0 0.0
  %4410 = vmatpush1.msra.mxu0 0.0
  %4411 = vmatprep.subr.mxu0 0.0
  %4412 = vmatpush1.msra.mxu0 0.0
  %4413 = vmatprep.subr.mxu0 0.0
  %4414 = vmatpush1.msra.mxu0 0.0
  %4415 = vmatprep.subr.mxu0 0.0
  %4416 = vmatpush1.msra.mxu0 0.0
  %4417 = vmatprep.subr.mxu0 0.0
  %4418 = vmatpush1.msra.mxu0 0.0
  %4419 = vmatprep.subr.mxu0 0.0
  %4420 = vmatpush1.msra.mxu0 0.0
  %4421 = vmatprep.subr.mxu0 0.0
  %4422 = vmatpush1.msra.mxu0 0.0
  %4423 = vmatprep.subr.mxu0 0.0
  %4424 = vmatpush1.msra.mxu0 0.0
  %4425 = vmatprep.subr.mxu0 0.0
  %4426 = vmatpush1.msra.mxu0 0.0
  %4427 = vmatprep.subr.mxu0 0.0
  %4428 = vmatpush1.msra.mxu0 0.0
  %4429 = vmatprep.subr.mxu0 0.0
  %4430 = vmatpush1.msra.mxu0 0.0
  %4431 = vmatprep.subr.mxu0 0.0
  %4432 = vmatpush1.msra.mxu0 0.0
  %4433 = vmatprep.subr.mxu0 0.0
  %4434 = vmatpush1.msra.mxu0 0.0
  %4435 = vmatprep.subr.mxu0 0.0
  %4436 = vmatpush1.msra.mxu0 0.0
  %4437 = vmatprep.subr.mxu0 0.0
  %4438 = vmatpush1.msra.mxu0 0.0
  %4439 = vmatprep.subr.mxu0 0.0
  %4440 = vmatpush1.msra.mxu0 0.0
  %4441 = vmatprep.subr.mxu0 0.0
  %4442 = vmatpush1.msra.mxu0 0.0
  %4443 = vmatprep.subr.mxu0 0.0
  %4444 = vmatpush1.msra.mxu0 0.0
  %4445 = vmatprep.subr.mxu0 0.0
  %4446 = vmatpush1.msra.mxu0 0.0
  %4447 = vmatprep.subr.mxu0 0.0
  %4448 = vmatpush1.msra.mxu0 0.0
  %4449 = vmatprep.mubr.f32.mxu0 0.0
  %4450 = vmatmul.mubr.f32.gmra.mrb[0].mxu0 %v4294
  %v4451 = vpop.f32.mrb[0].mxu0
  %v4452 = vadd.f32 0.0, %v4451
  %v4453 = vpop.f32.mrb[0].mxu0
  %v4454 = vadd.f32 0.0, %v4453
  %4455 = vdwg.mxu0
  %4456 = vmatprep.subr.mxu0 %v4312
  %4457 = vmatpush1.msra.mxu0 %v4309
  %4458 = vmatprep.subr.mxu0 0.0
  %4459 = vmatpush1.msra.mxu0 0.0
  %4460 = vmatprep.subr.mxu0 0.0
  %4461 = vmatpush1.msra.mxu0 0.0
  %4462 = vmatprep.subr.mxu0 0.0
  %4463 = vmatpush1.msra.mxu0 0.0
  %4464 = vmatprep.subr.mxu0 0.0
  %4465 = vmatpush1.msra.mxu0 0.0
  %4466 = vmatprep.subr.mxu0 0.0
  %4467 = vmatpush1.msra.mxu0 0.0
  %4468 = vmatprep.subr.mxu0 0.0
  %4469 = vmatpush1.msra.mxu0 0.0
  %4470 = vmatprep.subr.mxu0 0.0
  %4471 = vmatpush1.msra.mxu0 0.0
  %4472 = vmatprep.subr.mxu0 0.0
  %4473 = vmatpush1.msra.mxu0 0.0
  %4474 = vmatprep.subr.mxu0 0.0
  %4475 = vmatpush1.msra.mxu0 0.0
  %4476 = vmatprep.subr.mxu0 0.0
  %4477 = vmatpush1.msra.mxu0 0.0
  %4478 = vmatprep.subr.mxu0 0.0
  %4479 = vmatpush1.msra.mxu0 0.0
  %4480 = vmatprep.subr.mxu0 0.0
  %4481 = vmatpush1.msra.mxu0 0.0
  %4482 = vmatprep.subr.mxu0 0.0
  %4483 = vmatpush1.msra.mxu0 0.0
  %4484 = vmatprep.subr.mxu0 0.0
  %4485 = vmatpush1.msra.mxu0 0.0
  %4486 = vmatprep.subr.mxu0 0.0
  %4487 = vmatpush1.msra.mxu0 0.0
  %4488 = vmatprep.subr.mxu0 0.0
  %4489 = vmatpush1.msra.mxu0 0.0
  %4490 = vmatprep.subr.mxu0 0.0
  %4491 = vmatpush1.msra.mxu0 0.0
  %4492 = vmatprep.subr.mxu0 0.0
  %4493 = vmatpush1.msra.mxu0 0.0
  %4494 = vmatprep.subr.mxu0 0.0
  %4495 = vmatpush1.msra.mxu0 0.0
  %4496 = vmatprep.subr.mxu0 0.0
  %4497 = vmatpush1.msra.mxu0 0.0
  %4498 = vmatprep.subr.mxu0 0.0
  %4499 = vmatpush1.msra.mxu0 0.0
  %4500 = vmatprep.subr.mxu0 0.0
  %4501 = vmatpush1.msra.mxu0 0.0
  %4502 = vmatprep.subr.mxu0 0.0
  %4503 = vmatpush1.msra.mxu0 0.0
  %4504 = vmatprep.subr.mxu0 0.0
  %4505 = vmatpush1.msra.mxu0 0.0
  %4506 = vmatprep.subr.mxu0 0.0
  %4507 = vmatpush1.msra.mxu0 0.0
  %4508 = vmatprep.subr.mxu0 0.0
  %4509 = vmatpush1.msra.mxu0 0.0
  %4510 = vmatprep.subr.mxu0 0.0
  %4511 = vmatpush1.msra.mxu0 0.0
  %4512 = vmatprep.subr.mxu0 0.0
  %4513 = vmatpush1.msra.mxu0 0.0
  %4514 = vmatprep.subr.mxu0 0.0
  %4515 = vmatpush1.msra.mxu0 0.0
  %4516 = vmatprep.subr.mxu0 0.0
  %4517 = vmatpush1.msra.mxu0 0.0
  %4518 = vmatprep.subr.mxu0 0.0
  %4519 = vmatpush1.msra.mxu0 0.0
  %4520 = vmatprep.mubr.f32.mxu0 0.0
  %4521 = vmatmul.mubr.f32.gmra.mrb[0].mxu0 %v4294
  %v4522 = vpop.f32.mrb[0].mxu0
  %v4523 = vadd.f32 0.0, %v4522
  %v4524 = vpop.f32.mrb[0].mxu0
  %v4525 = vadd.f32 0.0, %v4524
  %4526 = vdwg.mxu0
  %v4527 = vadd.f32 %v4267, %v4381
  %v4528 = vadd.f32 %v4268, %v4383
  %v4529 = vadd.f32 %v4269, %v4452
  %v4530 = vadd.f32 %v4270, %v4454
  %v4531 = vadd.f32 %v4271, %v4523
  %v4532 = vadd.f32 %v4272, %v4525
  %4533 = vrot.lane.b32.xlu0 %v2478, 109
  %v4534 = vpop.permute.xlu0 %4533
  %4535 = vrot.lane.b32.xlu0 %v2479, 109
  %v4536 = vpop.permute.xlu0 %4535
  %4537 = vrot.lane.b32.xlu0 %v2480, 109
  %v4538 = vpop.permute.xlu0 %4537
  %4539 = vrot.lane.b32.xlu0 %v2481, 109
  %v4540 = vpop.permute.xlu0 %4539
  %4541 = vrot.lane.b32.xlu0 %v2482, 109
  %v4542 = vpop.permute.xlu0 %4541
  %4543 = vrot.lane.b32.xlu0 %v2483, 109
  %v4544 = vpop.permute.xlu0 %4543
  %v4545 = vsel %vm2108, %v4542, %v4544
  %v4546 = vsel %vm2108, %v4540, %v4542
  %v4547 = vsel %vm2108, %v4538, %v4540
  %v4548 = vsel %vm2108, %v4536, %v4538
  %v4549 = vsel %vm2108, %v4534, %v4536
  %v4550 = vsel %vm2108, %v4544, %v4534
  %s4551 = scalar_lea.vmem %s5, 32
  %v4552 = vld [vmem:[%s4551] sm:$0xf]
  %v4554 = vsel %vm85, %v4552, 0
  %v4557 = vsel %vm89, %v4549, 0
  %v4560 = vsel %vm89, %v4548, 0
  %v4563 = vsel %vm89, %v4547, 0
  %v4566 = vsel %vm89, %v4546, 0
  %v4569 = vsel %vm89, %v4545, 0
  %v4572 = vsel %vm89, %v4550, 0
  %4574 = vmatprep.subr.mxu0 %v4560
  %4575 = vmatpush1.msra.mxu0 %v4557
  %4576 = vmatprep.subr.mxu0 0.0
  %4577 = vmatpush1.msra.mxu0 0.0
  %4578 = vmatprep.subr.mxu0 0.0
  %4579 = vmatpush1.msra.mxu0 0.0
  %4580 = vmatprep.subr.mxu0 0.0
  %4581 = vmatpush1.msra.mxu0 0.0
  %4582 = vmatprep.subr.mxu0 0.0
  %4583 = vmatpush1.msra.mxu0 0.0
  %4584 = vmatprep.subr.mxu0 0.0
  %4585 = vmatpush1.msra.mxu0 0.0
  %4586 = vmatprep.subr.mxu0 0.0
  %4587 = vmatpush1.msra.mxu0 0.0
  %4588 = vmatprep.subr.mxu0 0.0
  %4589 = vmatpush1.msra.mxu0 0.0
  %4590 = vmatprep.subr.mxu0 0.0
  %4591 = vmatpush1.msra.mxu0 0.0
  %4592 = vmatprep.subr.mxu0 0.0
  %4593 = vmatpush1.msra.mxu0 0.0
  %4594 = vmatprep.subr.mxu0 0.0
  %4595 = vmatpush1.msra.mxu0 0.0
  %4596 = vmatprep.subr.mxu0 0.0
  %4597 = vmatpush1.msra.mxu0 0.0
  %4598 = vmatprep.subr.mxu0 0.0
  %4599 = vmatpush1.msra.mxu0 0.0
  %4600 = vmatprep.subr.mxu0 0.0
  %4601 = vmatpush1.msra.mxu0 0.0
  %4602 = vmatprep.subr.mxu0 0.0
  %4603 = vmatpush1.msra.mxu0 0.0
  %4604 = vmatprep.subr.mxu0 0.0
  %4605 = vmatpush1.msra.mxu0 0.0
  %4606 = vmatprep.subr.mxu0 0.0
  %4607 = vmatpush1.msra.mxu0 0.0
  %4608 = vmatprep.subr.mxu0 0.0
  %4609 = vmatpush1.msra.mxu0 0.0
  %4610 = vmatprep.subr.mxu0 0.0
  %4611 = vmatpush1.msra.mxu0 0.0
  %4612 = vmatprep.subr.mxu0 0.0
  %4613 = vmatpush1.msra.mxu0 0.0
  %4614 = vmatprep.subr.mxu0 0.0
  %4615 = vmatpush1.msra.mxu0 0.0
  %4616 = vmatprep.subr.mxu0 0.0
  %4617 = vmatpush1.msra.mxu0 0.0
  %4618 = vmatprep.subr.mxu0 0.0
  %4619 = vmatpush1.msra.mxu0 0.0
  %4620 = vmatprep.subr.mxu0 0.0
  %4621 = vmatpush1.msra.mxu0 0.0
  %4622 = vmatprep.subr.mxu0 0.0
  %4623 = vmatpush1.msra.mxu0 0.0
  %4624 = vmatprep.subr.mxu0 0.0
  %4625 = vmatpush1.msra.mxu0 0.0
  %4626 = vmatprep.subr.mxu0 0.0
  %4627 = vmatpush1.msra.mxu0 0.0
  %4628 = vmatprep.subr.mxu0 0.0
  %4629 = vmatpush1.msra.mxu0 0.0
  %4630 = vmatprep.subr.mxu0 0.0
  %4631 = vmatpush1.msra.mxu0 0.0
  %4632 = vmatprep.subr.mxu0 0.0
  %4633 = vmatpush1.msra.mxu0 0.0
  %4634 = vmatprep.subr.mxu0 0.0
  %4635 = vmatpush1.msra.mxu0 0.0
  %4636 = vmatprep.subr.mxu0 0.0
  %4637 = vmatpush1.msra.mxu0 0.0
  %4638 = vmatprep.mubr.f32.mxu0 0.0
  %4639 = vmatmul.mubr.f32.gmra.mrb[0].mxu0 %v4554
  %v4640 = vpop.f32.mrb[0].mxu0
  %v4641 = vadd.f32 0.0, %v4640
  %v4642 = vpop.f32.mrb[0].mxu0
  %v4643 = vadd.f32 0.0, %v4642
  %4644 = vdwg.mxu0
  %4645 = vmatprep.subr.mxu0 %v4566
  %4646 = vmatpush1.msra.mxu0 %v4563
  %4647 = vmatprep.subr.mxu0 0.0
  %4648 = vmatpush1.msra.mxu0 0.0
  %4649 = vmatprep.subr.mxu0 0.0
  %4650 = vmatpush1.msra.mxu0 0.0
  %4651 = vmatprep.subr.mxu0 0.0
  %4652 = vmatpush1.msra.mxu0 0.0
  %4653 = vmatprep.subr.mxu0 0.0
  %4654 = vmatpush1.msra.mxu0 0.0
  %4655 = vmatprep.subr.mxu0 0.0
  %4656 = vmatpush1.msra.mxu0 0.0
  %4657 = vmatprep.subr.mxu0 0.0
  %4658 = vmatpush1.msra.mxu0 0.0
  %4659 = vmatprep.subr.mxu0 0.0
  %4660 = vmatpush1.msra.mxu0 0.0
  %4661 = vmatprep.subr.mxu0 0.0
  %4662 = vmatpush1.msra.mxu0 0.0
  %4663 = vmatprep.subr.mxu0 0.0
  %4664 = vmatpush1.msra.mxu0 0.0
  %4665 = vmatprep.subr.mxu0 0.0
  %4666 = vmatpush1.msra.mxu0 0.0
  %4667 = vmatprep.subr.mxu0 0.0
  %4668 = vmatpush1.msra.mxu0 0.0
  %4669 = vmatprep.subr.mxu0 0.0
  %4670 = vmatpush1.msra.mxu0 0.0
  %4671 = vmatprep.subr.mxu0 0.0
  %4672 = vmatpush1.msra.mxu0 0.0
  %4673 = vmatprep.subr.mxu0 0.0
  %4674 = vmatpush1.msra.mxu0 0.0
  %4675 = vmatprep.subr.mxu0 0.0
  %4676 = vmatpush1.msra.mxu0 0.0
  %4677 = vmatprep.subr.mxu0 0.0
  %4678 = vmatpush1.msra.mxu0 0.0
  %4679 = vmatprep.subr.mxu0 0.0
  %4680 = vmatpush1.msra.mxu0 0.0
  %4681 = vmatprep.subr.mxu0 0.0
  %4682 = vmatpush1.msra.mxu0 0.0
  %4683 = vmatprep.subr.mxu0 0.0
  %4684 = vmatpush1.msra.mxu0 0.0
  %4685 = vmatprep.subr.mxu0 0.0
  %4686 = vmatpush1.msra.mxu0 0.0
  %4687 = vmatprep.subr.mxu0 0.0
  %4688 = vmatpush1.msra.mxu0 0.0
  %4689 = vmatprep.subr.mxu0 0.0
  %4690 = vmatpush1.msra.mxu0 0.0
  %4691 = vmatprep.subr.mxu0 0.0
  %4692 = vmatpush1.msra.mxu0 0.0
  %4693 = vmatprep.subr.mxu0 0.0
  %4694 = vmatpush1.msra.mxu0 0.0
  %4695 = vmatprep.subr.mxu0 0.0
  %4696 = vmatpush1.msra.mxu0 0.0
  %4697 = vmatprep.subr.mxu0 0.0
  %4698 = vmatpush1.msra.mxu0 0.0
  %4699 = vmatprep.subr.mxu0 0.0
  %4700 = vmatpush1.msra.mxu0 0.0
  %4701 = vmatprep.subr.mxu0 0.0
  %4702 = vmatpush1.msra.mxu0 0.0
  %4703 = vmatprep.subr.mxu0 0.0
  %4704 = vmatpush1.msra.mxu0 0.0
  %4705 = vmatprep.subr.mxu0 0.0
  %4706 = vmatpush1.msra.mxu0 0.0
  %4707 = vmatprep.subr.mxu0 0.0
  %4708 = vmatpush1.msra.mxu0 0.0
  %4709 = vmatprep.mubr.f32.mxu0 0.0
  %4710 = vmatmul.mubr.f32.gmra.mrb[0].mxu0 %v4554
  %v4711 = vpop.f32.mrb[0].mxu0
  %v4712 = vadd.f32 0.0, %v4711
  %v4713 = vpop.f32.mrb[0].mxu0
  %v4714 = vadd.f32 0.0, %v4713
  %4715 = vdwg.mxu0
  %4716 = vmatprep.subr.mxu0 %v4572
  %4717 = vmatpush1.msra.mxu0 %v4569
  %4718 = vmatprep.subr.mxu0 0.0
  %4719 = vmatpush1.msra.mxu0 0.0
  %4720 = vmatprep.subr.mxu0 0.0
  %4721 = vmatpush1.msra.mxu0 0.0
  %4722 = vmatprep.subr.mxu0 0.0
  %4723 = vmatpush1.msra.mxu0 0.0
  %4724 = vmatprep.subr.mxu0 0.0
  %4725 = vmatpush1.msra.mxu0 0.0
  %4726 = vmatprep.subr.mxu0 0.0
  %4727 = vmatpush1.msra.mxu0 0.0
  %4728 = vmatprep.subr.mxu0 0.0
  %4729 = vmatpush1.msra.mxu0 0.0
  %4730 = vmatprep.subr.mxu0 0.0
  %4731 = vmatpush1.msra.mxu0 0.0
  %4732 = vmatprep.subr.mxu0 0.0
  %4733 = vmatpush1.msra.mxu0 0.0
  %4734 = vmatprep.subr.mxu0 0.0
  %4735 = vmatpush1.msra.mxu0 0.0
  %4736 = vmatprep.subr.mxu0 0.0
  %4737 = vmatpush1.msra.mxu0 0.0
  %4738 = vmatprep.subr.mxu0 0.0
  %4739 = vmatpush1.msra.mxu0 0.0
  %4740 = vmatprep.subr.mxu0 0.0
  %4741 = vmatpush1.msra.mxu0 0.0
  %4742 = vmatprep.subr.mxu0 0.0
  %4743 = vmatpush1.msra.mxu0 0.0
  %4744 = vmatprep.subr.mxu0 0.0
  %4745 = vmatpush1.msra.mxu0 0.0
  %4746 = vmatprep.subr.mxu0 0.0
  %4747 = vmatpush1.msra.mxu0 0.0
  %4748 = vmatprep.subr.mxu0 0.0
  %4749 = vmatpush1.msra.mxu0 0.0
  %4750 = vmatprep.subr.mxu0 0.0
  %4751 = vmatpush1.msra.mxu0 0.0
  %4752 = vmatprep.subr.mxu0 0.0
  %4753 = vmatpush1.msra.mxu0 0.0
  %4754 = vmatprep.subr.mxu0 0.0
  %4755 = vmatpush1.msra.mxu0 0.0
  %4756 = vmatprep.subr.mxu0 0.0
  %4757 = vmatpush1.msra.mxu0 0.0
  %4758 = vmatprep.subr.mxu0 0.0
  %4759 = vmatpush1.msra.mxu0 0.0
  %4760 = vmatprep.subr.mxu0 0.0
  %4761 = vmatpush1.msra.mxu0 0.0
  %4762 = vmatprep.subr.mxu0 0.0
  %4763 = vmatpush1.msra.mxu0 0.0
  %4764 = vmatprep.subr.mxu0 0.0
  %4765 = vmatpush1.msra.mxu0 0.0
  %4766 = vmatprep.subr.mxu0 0.0
  %4767 = vmatpush1.msra.mxu0 0.0
  %4768 = vmatprep.subr.mxu0 0.0
  %4769 = vmatpush1.msra.mxu0 0.0
  %4770 = vmatprep.subr.mxu0 0.0
  %4771 = vmatpush1.msra.mxu0 0.0
  %4772 = vmatprep.subr.mxu0 0.0
  %4773 = vmatpush1.msra.mxu0 0.0
  %4774 = vmatprep.subr.mxu0 0.0
  %4775 = vmatpush1.msra.mxu0 0.0
  %4776 = vmatprep.subr.mxu0 0.0
  %4777 = vmatpush1.msra.mxu0 0.0
  %4778 = vmatprep.subr.mxu0 0.0
  %4779 = vmatpush1.msra.mxu0 0.0
  %4780 = vmatprep.mubr.f32.mxu0 0.0
  %4781 = vmatmul.mubr.f32.gmra.mrb[0].mxu0 %v4554
  %v4782 = vpop.f32.mrb[0].mxu0
  %v4783 = vadd.f32 0.0, %v4782
  %v4784 = vpop.f32.mrb[0].mxu0
  %v4785 = vadd.f32 0.0, %v4784
  %4786 = vdwg.mxu0
  %v4787 = vadd.f32 %v4527, %v4641
  %v4788 = vadd.f32 %v4528, %v4643
  %v4789 = vadd.f32 %v4529, %v4712
  %v4790 = vadd.f32 %v4530, %v4714
  %v4791 = vadd.f32 %v4531, %v4783
  %v4792 = vadd.f32 %v4532, %v4785
  %v4793 = vmul.f32 %v4787, %v2361
  %v4794 = vmul.f32 %v4788, %v2365
  %v4795 = vmul.f32 %v4789, %v2369
  %v4796 = vmul.f32 %v4790, %v2373
  %v4797 = vmul.f32 %v4791, %v2377
  %v4798 = vmul.f32 %v4792, %v2381
  %v4799 = vsel %vm89, %v4793, 0.0
  %v4800 = vsel %vm89, %v4794, 0.0
  %v4801 = vadd.f32 %v4799, %v4800
  %v4802 = vsel %vm89, %v4795, 0.0
  %v4803 = vadd.f32 %v4801, %v4802
  %v4804 = vsel %vm89, %v4796, 0.0
  %v4805 = vadd.f32 %v4803, %v4804
  %v4806 = vsel %vm89, %v4797, 0.0
  %v4807 = vadd.f32 %v4805, %v4806
  %v4808 = vsel %vm89, %v4798, 0.0
  %v4809 = vadd.f32 %v4807, %v4808
  %4810 = vadd.xlane.f32.xlu0 %v4809
  %v4811 = vpop.xlane.xlu0 %4810
  %v4812 = vmul.f32 %v4811, 0.001953125
  %v4813 = vsub.f32 %v4787, %v4812
  %v4814 = vsub.f32 %v4788, %v4812
  %v4815 = vsub.f32 %v4789, %v4812
  %v4816 = vsub.f32 %v4790, %v4812
  %v4817 = vsub.f32 %v4791, %v4812
  %v4818 = vsub.f32 %v4792, %v4812
  %v4819 = vmul.f32 %v4813, %v4813
  %v4820 = vmul.f32 %v4814, %v4814
  %v4821 = vmul.f32 %v4815, %v4815
  %v4822 = vmul.f32 %v4816, %v4816
  %v4823 = vmul.f32 %v4817, %v4817
  %v4824 = vmul.f32 %v4818, %v4818
  %v4825 = vmul.f32 %v4819, %v2361
  %v4826 = vmul.f32 %v4820, %v2365
  %v4827 = vmul.f32 %v4821, %v2369
  %v4828 = vmul.f32 %v4822, %v2373
  %v4829 = vmul.f32 %v4823, %v2377
  %v4830 = vmul.f32 %v4824, %v2381
  %v4831 = vsel %vm89, %v4825, 0.0
  %v4832 = vsel %vm89, %v4826, 0.0
  %v4833 = vadd.f32 %v4831, %v4832
  %v4834 = vsel %vm89, %v4827, 0.0
  %v4835 = vadd.f32 %v4833, %v4834
  %v4836 = vsel %vm89, %v4828, 0.0
  %v4837 = vadd.f32 %v4835, %v4836
  %v4838 = vsel %vm89, %v4829, 0.0
  %v4839 = vadd.f32 %v4837, %v4838
  %v4840 = vsel %vm89, %v4830, 0.0
  %v4841 = vadd.f32 %v4839, %v4840
  %4842 = vadd.xlane.f32.xlu0 %v4841
  %v4843 = vpop.xlane.xlu0 %4842
  %v4844 = vmul.f32 %v4843, 0.001953125
  %v4845 = vadd.f32 %v4844, 1e-05
  %v4846 = vrsqrt.pop %v4845
  %v4847 = vmul.f32 %v4813, %v4846
  %v4848 = vmul.f32 %v4814, %v4846
  %v4849 = vmul.f32 %v4815, %v4846
  %v4850 = vmul.f32 %v4816, %v4846
  %v4851 = vmul.f32 %v4817, %v4846
  %v4852 = vmul.f32 %v4818, %v4846
  %v4853 = vld [vmem:[%s6] sm:$0xf]
  %4855 = vset.pattern.permute.xlu0 0
  %4856 = vperm.xlu0 %4855, %v4853
  %v4857 = vpop.permute.xlu0 %4856
  %v4859 = vmul.f32 %v4847, %v4857
  %v4860 = vmul.f32 %v4848, %v4857
  %v4861 = vmul.f32 %v4849, %v4857
  %v4862 = vmul.f32 %v4850, %v4857
  %v4863 = vmul.f32 %v4851, %v4857
  %v4864 = vmul.f32 %v4852, %v4857
  %v4865 = vld [vmem:[%s7] sm:$0xf]
  %4867 = vset.pattern.permute.xlu0 0
  %4868 = vperm.xlu0 %4867, %v4865
  %v4869 = vpop.permute.xlu0 %4868
  %v4871 = vadd.f32 %v4859, %v4869
  %v4872 = vadd.f32 %v4860, %v4869
  %v4873 = vadd.f32 %v4861, %v4869
  %v4874 = vadd.f32 %v4862, %v4869
  %v4875 = vadd.f32 %v4863, %v4869
  %v4876 = vadd.f32 %v4864, %v4869
  %v4877 = vadd.f32 %v4871, %v29
  %v4878 = vadd.f32 %v4872, %v36
  %v4879 = vadd.f32 %v4873, %v30
  %v4880 = vadd.f32 %v4874, %v37
  %v4881 = vadd.f32 %v4875, %v31
  %v4882 = vadd.f32 %v4876, %v38
  %v4883 = vmax.f32 %v4877, 0.0
  %v4884 = vmax.f32 %v4878, 0.0
  %v4885 = vmax.f32 %v4879, 0.0
  %v4886 = vmax.f32 %v4880, 0.0
  %v4887 = vmax.f32 %v4881, 0.0
  %v4888 = vmax.f32 %v4882, 0.0
  %v4895 = vcombine.low %v4883, %v4884
  %v4896 = vcombine.low %v4885, %v4886
  %v4897 = vcombine.low %v4887, %v4888
  %4901 = vst [vmem:[%s8] sm:$0xff] %v4895
  %4902 = vst [vmem:[%s8 + $0x8] sm:$0xff] %v4896
  %4903 = vst [vmem:[%s8 + $0x10] sm:$0xff] %v4897
  // Predicated region
  $region34: #{residual_block.1} parent=0 // pred_check
    _
  $region35: #{residual_block.1} parent=0 // pred_check_branch
    %4905 = sbr.rel (0) target = $region37
  $region36: #{residual_block.1} parent=0 // pred_region
    _
  $region37: #{residual_block.1} parent=0 // pred_fallthru
    _
  // Predicated region
  $region38: #{residual_block.1} parent=0 // pred_check
    _
  $region39: #{residual_block.1} parent=0 // pred_check_branch
    %4907 = sbr.rel (0) target = $region41
  $region40: #{residual_block.1} parent=0 // pred_region
    _
  $region41: #{residual_block.1} parent=0 // pred_fallthru
    _

</llo_original>
